<compile_context>
chip_gen: v5e
topology: v5e:2x2
jax: 0.10.0
libtpu: 0.0.40
codegen_flags: <defaults>
</compile_context>

<pallas_src>
import jax
import jax.numpy as jnp
from jax import lax
from jax.experimental import pallas as pl
from jax.experimental.pallas import tpu as pltpu

HIDDEN = 128
NUM_LAYERS = 2
NUM_FEATS = 3
INPUT_SIZE = 1 + NUM_FEATS  # series value + self-made features


def gru_linear_kernel(x_ref, h0_ref,
                      wih0_ref, whh0_ref, bgi0_ref, bhn0_ref,
                      wih1_ref, whh1_ref, bgi1_ref, bhn1_ref,
                      wout_ref, bout_ref,
                      y_ref, hout_ref,
                      gi0_scr, h1_scr):
    """Full 2-layer GRU recurrence + output projection, everything in VMEM.

    x_ref:    (T, B, Din)   time-major input (f32)
    h0_ref:   (L, B, H)     initial hidden state (f32)
    wih0_ref: (Din, 3H) f32 (VPU path);  whh0/wih1/whh1: (H, 3H) bf16 (MXU)
    bgi*_ref: (1, 3H) f32   b_ih with b_hh folded into the r/z slices
    bhn*_ref: (1, H) f32    b_hh_n (stays inside the r-multiply)
    wout_ref: (1, H) f32;   bout_ref: (1, 1) f32
    y_ref:    (B, T) f32    lane-dense per-step linear output
    hout_ref: (L, B, H) f32 final hidden state
    gi0_scr:  (T, B, 3H)    hoisted layer-0 input projection
    h1_scr:   (T, B, H)     per-step layer-1 hidden states
    """
    T, B, Din = x_ref.shape
    H = HIDDEN

    # ---- Hoisted layer-0 input projection (off the serial chain).
    # Din is tiny: a handful of VPU multiply-adds over the whole sequence
    # beats T tiny MXU pushes inside the recurrence.
    x = x_ref[...]                               # (T, B, Din)
    w0 = wih0_ref[...]                           # (Din, 3H)
    gi0 = x[:, :, 0:1] * w0[0:1, :]              # (T, B, 3H)
    for d in range(1, Din):
        gi0 = gi0 + x[:, :, d:d + 1] * w0[d:d + 1, :]
    gi0_scr[...] = gi0 + bgi0_ref[...]           # + (b_ih + b_hh_rz) bias

    # ---- Bind loop-invariant weights / pre-broadcast biases ONCE.
    # (JAX doesn't CSE broadcast_in_dim; the loop is fully unrolled.)
    whh0 = whh0_ref[...]                         # (H, 3H) bf16
    wih1 = wih1_ref[...]                         # (H, 3H) bf16
    whh1 = whh1_ref[...]                         # (H, 3H) bf16
    bhn0 = jnp.broadcast_to(bhn0_ref[...], (B, H))
    bgi1 = jnp.broadcast_to(bgi1_ref[...], (B, 3 * H))
    bhn1 = jnp.broadcast_to(bhn1_ref[...], (B, H))

    def gates(gi, gh, bhn, h_prev):
        # PyTorch GRU gate order: r (reset), z (update), n (new).
        # r/z fused into one sigmoid over the contiguous [:, :2H] slice.
        rz = jax.nn.sigmoid(gi[:, :2 * H] + gh[:, :2 * H])
        r = rz[:, :H]
        z = rz[:, H:]
        n = jnp.tanh(gi[:, 2 * H:] + r * (gh[:, 2 * H:] + bhn))
        return (1.0 - z) * n + z * h_prev

    def step(t, carry):
        h0, h1 = carry
        # Both recurrent matmuls depend only on the previous step's carries:
        # issue them together so their MXU pushes overlap the EUP gate math.
        gh0 = jnp.dot(h0.astype(jnp.bfloat16), whh0,
                      preferred_element_type=jnp.float32)
        gh1 = jnp.dot(h1.astype(jnp.bfloat16), whh1,
                      preferred_element_type=jnp.float32)
        # layer 0
        h0 = gates(gi0_scr[t], gh0, bhn0, h0)
        # layer 1: inter-layer projection of the fresh h0
        gi1 = jnp.dot(h0.astype(jnp.bfloat16), wih1,
                      preferred_element_type=jnp.float32) + bgi1
        h1 = gates(gi1, gh1, bhn1, h1)
        h1_scr[t] = h1                           # for the hoisted projection
        return (h0, h1)

    # h0/h1 live in the loop carry (vregs), not in hout_ref; T is static so
    # fully unroll for cross-iteration scheduling visibility.
    h0_fin, h1_fin = lax.fori_loop(0, T, step, (h0_ref[0], h0_ref[1]),
                                   unroll=True)
    hout_ref[0] = h0_fin
    hout_ref[1] = h1_fin

    # ---- Hoisted output projection: N=1 -> VPU multiply + lane reduce.
    w_row = wout_ref[...]                                         # (1, H)
    y_tb = jnp.sum(h1_scr[...] * w_row, axis=-1) + bout_ref[...]  # (T, B)
    y_ref[...] = y_tb.T                                           # (B, T)


def init_params(key):
    """Deterministic parameter init, same shapes as the PyTorch module."""
    k = 1.0 / jnp.sqrt(jnp.float32(HIDDEN))
    keys = jax.random.split(key, 11)

    def u(kk, shape):
        return jax.random.uniform(kk, shape, jnp.float32, -k, k)

    params = {
        # layer 0
        "w_ih_l0": u(keys[0], (3 * HIDDEN, INPUT_SIZE)),
        "w_hh_l0": u(keys[1], (3 * HIDDEN, HIDDEN)),
        "b_ih_l0": u(keys[2], (3 * HIDDEN,)),
        "b_hh_l0": u(keys[3], (3 * HIDDEN,)),
        # layer 1
        "w_ih_l1": u(keys[4], (3 * HIDDEN, HIDDEN)),
        "w_hh_l1": u(keys[5], (3 * HIDDEN, HIDDEN)),
        "b_ih_l1": u(keys[6], (3 * HIDDEN,)),
        "b_hh_l1": u(keys[7], (3 * HIDDEN,)),
        # out: Linear(128 -> 1)
        "w_out": u(keys[8], (1, HIDDEN)),
        "b_out": u(keys[9], (1,)),
    }
    return params


@jax.jit
def rnn_forward(x, h_state, params):
    """PyTorch-equivalent forward: x (B, T, 1+num_feats), h_state (L, B, H).

    Returns (out, h_state) with out of shape (B, T, 1), h_state (L, B, H).
    """
    B, T, Din = x.shape
    H = HIDDEN

    # Pad batch to a multiple of 8 (f32 sublane count) so every vreg / store
    # is sublane-dense; padded rows are sliced off on return.
    B_pad = max(8, ((B + 7) // 8) * 8)
    if B_pad != B:
        x = jnp.pad(x, ((0, B_pad - B), (0, 0), (0, 0)))
        h_state = jnp.pad(h_state, ((0, 0), (0, B_pad - B), (0, 0)))

    x_tm = jnp.transpose(x, (1, 0, 2)).astype(jnp.float32)    # (T, B_pad, Din)

    # Pre-transpose weights so the kernel does row-major matmuls.
    # The three MXU weights are stored bf16 (cast once here, not per step);
    # the tiny layer-0 input projection stays f32 on the VPU.
    wih0_t = params["w_ih_l0"].T.astype(jnp.float32)          # (Din, 3H)
    whh0_t = params["w_hh_l0"].T.astype(jnp.bfloat16)         # (H, 3H)
    wih1_t = params["w_ih_l1"].T.astype(jnp.bfloat16)         # (H, 3H)
    whh1_t = params["w_hh_l1"].T.astype(jnp.bfloat16)         # (H, 3H)
    wout_row = params["w_out"].astype(jnp.float32)            # (1, H)
    bout = params["b_out"].reshape(1, 1).astype(jnp.float32)  # (1, 1)

    def fold_bias(b_ih, b_hh):
        # r/z slices: b_ih + b_hh can be pre-summed; n slice: b_hh_n must stay
        # inside the r-multiply, so it is kept separate.
        bgi = jnp.concatenate(
            [b_ih[:2 * H] + b_hh[:2 * H], b_ih[2 * H:]]).reshape(1, 3 * H)
        bhn = b_hh[2 * H:].reshape(1, H)
        return bgi.astype(jnp.float32), bhn.astype(jnp.float32)

    bgi0, bhn0 = fold_bias(params["b_ih_l0"], params["b_hh_l0"])
    bgi1, bhn1 = fold_bias(params["b_ih_l1"], params["b_hh_l1"])

    out_shapes = (
        jax.ShapeDtypeStruct((B_pad, T), jnp.float32),                   # y
        jax.ShapeDtypeStruct((NUM_LAYERS, B_pad, HIDDEN), jnp.float32),  # h
    )
    vmem = pl.BlockSpec(memory_space=pltpu.MemorySpace.VMEM)

    y_bt, h_out = pl.pallas_call(
        gru_linear_kernel,
        out_shape=out_shapes,
        in_specs=[vmem] * 12,
        out_specs=(vmem, vmem),
        scratch_shapes=[
            pltpu.VMEM((T, B_pad, 3 * HIDDEN), jnp.float32),  # hoisted gi0
            pltpu.VMEM((T, B_pad, HIDDEN), jnp.float32),      # per-step h1
        ],
    )(x_tm, h_state.astype(jnp.float32),
      wih0_t, whh0_t, bgi0, bhn0,
      wih1_t, whh1_t, bgi1, bhn1,
      wout_row, bout)

    y = y_bt[:B, :, None]                                     # (B, T, 1)
    return y, h_out[:, :B, :]


def rnn_forward_ref(x, h_state, params, mxu_dtype=jnp.float32):
    """Pure-JAX reference (same math as torch.nn.GRU + Linear).

    mxu_dtype=jnp.bfloat16 reproduces the kernel's MXU operand precision
    (weights + matmul LHS in bf16, f32 accumulation, gate math in f32).
    """
    H = HIDDEN

    def cell(inp, h_prev, wih, whh, bih, bhh, inp_on_mxu):
        if inp_on_mxu:
            gi = jnp.dot(inp.astype(mxu_dtype), wih.T.astype(mxu_dtype),
                         preferred_element_type=jnp.float32) + bih
        else:
            gi = inp @ wih.T + bih
        gh = jnp.dot(h_prev.astype(mxu_dtype), whh.T.astype(mxu_dtype),
                     preferred_element_type=jnp.float32) + bhh
        r = jax.nn.sigmoid(gi[:, :H] + gh[:, :H])
        z = jax.nn.sigmoid(gi[:, H:2 * H] + gh[:, H:2 * H])
        n = jnp.tanh(gi[:, 2 * H:] + r * gh[:, 2 * H:])
        return (1.0 - z) * n + z * h_prev

    def step(carry, x_t):
        h0, h1 = carry
        h0 = cell(x_t, h0, params["w_ih_l0"], params["w_hh_l0"],
                  params["b_ih_l0"], params["b_hh_l0"], False)
        h1 = cell(h0, h1, params["w_ih_l1"], params["w_hh_l1"],
                  params["b_ih_l1"], params["b_hh_l1"], True)
        y_t = h1 @ params["w_out"].T + params["b_out"]
        return (h0, h1), y_t

    x_tm = jnp.transpose(x, (1, 0, 2))
    (h0_f, h1_f), y_tm = lax.scan(step, (h_state[0], h_state[1]), x_tm)
    return jnp.transpose(y_tm, (1, 0, 2)), jnp.stack([h0_f, h1_f], axis=0)


if __name__ == "__main__":
    B, T = 2, 8
    key = jax.random.PRNGKey(0)
    k_params, k_x, _ = jax.random.split(key, 3)

    params = init_params(k_params)
    x = jax.random.normal(k_x, (B, T, INPUT_SIZE), jnp.float32)
    # h_state=None in PyTorch means zero initial hidden state.
    h0 = jnp.zeros((NUM_LAYERS, B, HIDDEN), jnp.float32)

    y, h_out = rnn_forward(x, h0, params)
    y = jax.block_until_ready(y)
    h_out = jax.block_until_ready(h_out)
    assert y.shape == (B, T, 1) and h_out.shape == (NUM_LAYERS, B, HIDDEN)

    # Tight check against a reference matched to the kernel's bf16 MXU operands.
    y_ref, h_ref = rnn_forward_ref(x, h0, params, mxu_dtype=jnp.bfloat16)
    assert jnp.allclose(y, y_ref, atol=2e-3, rtol=2e-3)
    assert jnp.allclose(h_out, h_ref, atol=2e-3, rtol=2e-3)

    # Coarse sanity check against the full-f32 PyTorch-semantics reference
    # (bf16 weight quantization bounds the deviation).
    y_f32, h_f32 = rnn_forward_ref(x, h0, params, mxu_dtype=jnp.float32)
    assert jnp.allclose(y, y_f32, atol=1e-1, rtol=1e-1)
    assert jnp.allclose(h_out, h_f32, atol=1e-1, rtol=1e-1)

    print("KERNEL_OK")
</pallas_src>

<mosaic_0001>
module attributes {stable_mosaic.version = 11 : i64} {
  func.func @gru_linear_kernel(%arg0: memref<8x8x4xf32, #tpu.memory_space<vmem>>, %arg1: memref<2x8x128xf32, #tpu.memory_space<vmem>>, %arg2: memref<4x384xf32, #tpu.memory_space<vmem>>, %arg3: memref<128x384xbf16, #tpu.memory_space<vmem>>, %arg4: memref<1x384xf32, #tpu.memory_space<vmem>>, %arg5: memref<1x128xf32, #tpu.memory_space<vmem>>, %arg6: memref<128x384xbf16, #tpu.memory_space<vmem>>, %arg7: memref<128x384xbf16, #tpu.memory_space<vmem>>, %arg8: memref<1x384xf32, #tpu.memory_space<vmem>>, %arg9: memref<1x128xf32, #tpu.memory_space<vmem>>, %arg10: memref<1x128xf32, #tpu.memory_space<vmem>>, %arg11: memref<1x1xf32, #tpu.memory_space<vmem>>, %arg12: memref<8x8xf32, #tpu.memory_space<vmem>>, %arg13: memref<2x8x128xf32, #tpu.memory_space<vmem>>, %arg14: memref<8x8x384xf32, #tpu.memory_space<vmem>>, %arg15: memref<8x8x128xf32, #tpu.memory_space<vmem>>) attributes {dimension_semantics = [], scalar_prefetch = 0 : i64, scratch_operands = 2 : i64, tpu.core_type = #tpu.core_type<tc>} {
    %c0 = arith.constant 0 : index
    %c0_0 = arith.constant 0 : index
    %c0_1 = arith.constant 0 : index
    %0 = vector.load %arg0[%c0, %c0_0, %c0_1] : memref<8x8x4xf32, #tpu.memory_space<vmem>>, vector<8x8x4xf32>
    %c0_2 = arith.constant 0 : index
    %c0_3 = arith.constant 0 : index
    %1 = vector.load %arg2[%c0_2, %c0_3] : memref<4x384xf32, #tpu.memory_space<vmem>>, vector<4x384xf32>
    %2 = vector.extract_strided_slice %0 {offsets = [0, 0, 0], sizes = [8, 8, 1], strides = [1, 1, 1]} : vector<8x8x4xf32> to vector<8x8x1xf32>
    %3 = vector.extract_strided_slice %1 {offsets = [0, 0], sizes = [1, 384], strides = [1, 1]} : vector<4x384xf32> to vector<1x384xf32>
    %4 = vector.shape_cast %3 : vector<1x384xf32> to vector<1x1x384xf32>
    %5 = vector.broadcast %2 : vector<8x8x1xf32> to vector<8x8x384xf32>
    %6 = vector.broadcast %4 : vector<1x1x384xf32> to vector<8x8x384xf32>
    %7 = arith.mulf %5, %6 : vector<8x8x384xf32>
    %8 = vector.extract_strided_slice %0 {offsets = [0, 0, 1], sizes = [8, 8, 1], strides = [1, 1, 1]} : vector<8x8x4xf32> to vector<8x8x1xf32>
    %9 = vector.extract_strided_slice %1 {offsets = [1, 0], sizes = [1, 384], strides = [1, 1]} : vector<4x384xf32> to vector<1x384xf32>
    %10 = vector.shape_cast %9 : vector<1x384xf32> to vector<1x1x384xf32>
    %11 = vector.broadcast %8 : vector<8x8x1xf32> to vector<8x8x384xf32>
    %12 = vector.broadcast %10 : vector<1x1x384xf32> to vector<8x8x384xf32>
    %13 = arith.mulf %11, %12 : vector<8x8x384xf32>
    %14 = arith.addf %7, %13 : vector<8x8x384xf32>
    %15 = vector.extract_strided_slice %0 {offsets = [0, 0, 2], sizes = [8, 8, 1], strides = [1, 1, 1]} : vector<8x8x4xf32> to vector<8x8x1xf32>
    %16 = vector.extract_strided_slice %1 {offsets = [2, 0], sizes = [1, 384], strides = [1, 1]} : vector<4x384xf32> to vector<1x384xf32>
    %17 = vector.shape_cast %16 : vector<1x384xf32> to vector<1x1x384xf32>
    %18 = vector.broadcast %15 : vector<8x8x1xf32> to vector<8x8x384xf32>
    %19 = vector.broadcast %17 : vector<1x1x384xf32> to vector<8x8x384xf32>
    %20 = arith.mulf %18, %19 : vector<8x8x384xf32>
    %21 = arith.addf %14, %20 : vector<8x8x384xf32>
    %22 = vector.extract_strided_slice %0 {offsets = [0, 0, 3], sizes = [8, 8, 1], strides = [1, 1, 1]} : vector<8x8x4xf32> to vector<8x8x1xf32>
    %23 = vector.extract_strided_slice %1 {offsets = [3, 0], sizes = [1, 384], strides = [1, 1]} : vector<4x384xf32> to vector<1x384xf32>
    %24 = vector.shape_cast %23 : vector<1x384xf32> to vector<1x1x384xf32>
    %25 = vector.broadcast %22 : vector<8x8x1xf32> to vector<8x8x384xf32>
    %26 = vector.broadcast %24 : vector<1x1x384xf32> to vector<8x8x384xf32>
    %27 = arith.mulf %25, %26 : vector<8x8x384xf32>
    %28 = arith.addf %21, %27 : vector<8x8x384xf32>
    %c0_4 = arith.constant 0 : index
    %c0_5 = arith.constant 0 : index
    %29 = vector.load %arg4[%c0_4, %c0_5] : memref<1x384xf32, #tpu.memory_space<vmem>>, vector<1x384xf32>
    %30 = vector.shape_cast %29 : vector<1x384xf32> to vector<1x1x384xf32>
    %31 = vector.broadcast %30 : vector<1x1x384xf32> to vector<8x8x384xf32>
    %32 = arith.addf %28, %31 : vector<8x8x384xf32>
    %c0_6 = arith.constant 0 : index
    %c0_7 = arith.constant 0 : index
    %c0_8 = arith.constant 0 : index
    %33 = vector.load %arg14[%c0_6, %c0_7, %c0_8] : memref<8x8x384xf32, #tpu.memory_space<vmem>>, vector<8x8x384xf32>
    tpu.vector_store %arg14[%c0_6, %c0_7, %c0_8], %32 {strides = array<i32>} : memref<8x8x384xf32, #tpu.memory_space<vmem>>, vector<8x8x384xf32>,
    %c0_9 = arith.constant 0 : index
    %c0_10 = arith.constant 0 : index
    %34 = vector.load %arg3[%c0_9, %c0_10] : memref<128x384xbf16, #tpu.memory_space<vmem>>, vector<128x384xbf16>
    %c0_11 = arith.constant 0 : index
    %c0_12 = arith.constant 0 : index
    %35 = vector.load %arg6[%c0_11, %c0_12] : memref<128x384xbf16, #tpu.memory_space<vmem>>, vector<128x384xbf16>
    %c0_13 = arith.constant 0 : index
    %c0_14 = arith.constant 0 : index
    %36 = vector.load %arg7[%c0_13, %c0_14] : memref<128x384xbf16, #tpu.memory_space<vmem>>, vector<128x384xbf16>
    %c0_15 = arith.constant 0 : index
    %c0_16 = arith.constant 0 : index
    %37 = vector.load %arg5[%c0_15, %c0_16] : memref<1x128xf32, #tpu.memory_space<vmem>>, vector<1x128xf32>
    %38 = vector.shape_cast %37 : vector<1x128xf32> to vector<1x128xf32>
    %39 = vector.broadcast %38 : vector<1x128xf32> to vector<8x128xf32>
    %c0_17 = arith.constant 0 : index
    %c0_18 = arith.constant 0 : index
    %40 = vector.load %arg8[%c0_17, %c0_18] : memref<1x384xf32, #tpu.memory_space<vmem>>, vector<1x384xf32>
    %41 = vector.shape_cast %40 : vector<1x384xf32> to vector<1x384xf32>
    %42 = vector.broadcast %41 : vector<1x384xf32> to vector<8x384xf32>
    %c0_19 = arith.constant 0 : index
    %c0_20 = arith.constant 0 : index
    %43 = vector.load %arg9[%c0_19, %c0_20] : memref<1x128xf32, #tpu.memory_space<vmem>>, vector<1x128xf32>
    %44 = vector.shape_cast %43 : vector<1x128xf32> to vector<1x128xf32>
    %45 = vector.broadcast %44 : vector<1x128xf32> to vector<8x128xf32>
    %c0_21 = arith.constant 0 : index
    %c0_22 = arith.constant 0 : index
    %c0_23 = arith.constant 0 : index
    %46 = vector.load %arg1[%c0_21, %c0_22, %c0_23] : memref<2x8x128xf32, #tpu.memory_space<vmem>>, vector<1x8x128xf32>
    %47 = vector.shape_cast %46 : vector<1x8x128xf32> to vector<8x128xf32>
    %c1 = arith.constant 1 : index
    %c0_24 = arith.constant 0 : index
    %c0_25 = arith.constant 0 : index
    %48 = vector.load %arg1[%c1, %c0_24, %c0_25] : memref<2x8x128xf32, #tpu.memory_space<vmem>>, vector<1x8x128xf32>
    %49 = vector.shape_cast %48 : vector<1x8x128xf32> to vector<8x128xf32>
    %c0_i32 = arith.constant 0 : i32
    %50 = arith.truncf %47 : vector<8x128xf32> to vector<8x128xbf16>
    %cst = arith.constant dense<0.000000e+00> : vector<8x384xf32>
    %51 = tpu.matmul %50, %34, %cst {dimension_numbers = #tpu.dot_dimension_numbers<[1], [0], [0], [1], [0, 0, 1, 1], [], []>} : vector<8x128xbf16>, vector<128x384xbf16>, vector<8x384xf32> -> vector<8x384xf32>
    %52 = arith.truncf %49 : vector<8x128xf32> to vector<8x128xbf16>
    %cst_26 = arith.constant dense<0.000000e+00> : vector<8x384xf32>
    %53 = tpu.matmul %52, %36, %cst_26 {dimension_numbers = #tpu.dot_dimension_numbers<[1], [0], [0], [1], [0, 0, 1, 1], [], []>} : vector<8x128xbf16>, vector<128x384xbf16>, vector<8x384xf32> -> vector<8x384xf32>
    %54 = arith.index_cast %c0_i32 : i32 to index
    %c0_27 = arith.constant 0 : index
    %c0_28 = arith.constant 0 : index
    %55 = vector.load %arg14[%54, %c0_27, %c0_28] : memref<8x8x384xf32, #tpu.memory_space<vmem>>, vector<1x8x384xf32>
    %56 = vector.shape_cast %55 : vector<1x8x384xf32> to vector<8x384xf32>
    %57 = vector.extract_strided_slice %56 {offsets = [0, 0], sizes = [8, 256], strides = [1, 1]} : vector<8x384xf32> to vector<8x256xf32>
    %58 = vector.extract_strided_slice %51 {offsets = [0, 0], sizes = [8, 256], strides = [1, 1]} : vector<8x384xf32> to vector<8x256xf32>
    %59 = arith.addf %57, %58 : vector<8x256xf32>
    %60 = arith.negf %59 : vector<8x256xf32>
    %61 = math.exp %60 : vector<8x256xf32>
    %cst_29 = arith.constant 1.000000e+00 : f32
    %62 = vector.broadcast %cst_29 : f32 to vector<8x256xf32>
    %63 = arith.addf %62, %61 : vector<8x256xf32>
    %64 = arith.divf %62, %63 : vector<8x256xf32>
    %65 = vector.extract_strided_slice %64 {offsets = [0, 0], sizes = [8, 128], strides = [1, 1]} : vector<8x256xf32> to vector<8x128xf32>
    %66 = vector.extract_strided_slice %64 {offsets = [0, 128], sizes = [8, 128], strides = [1, 1]} : vector<8x256xf32> to vector<8x128xf32>
    %67 = vector.extract_strided_slice %56 {offsets = [0, 256], sizes = [8, 128], strides = [1, 1]} : vector<8x384xf32> to vector<8x128xf32>
    %68 = vector.extract_strided_slice %51 {offsets = [0, 256], sizes = [8, 128], strides = [1, 1]} : vector<8x384xf32> to vector<8x128xf32>
    %69 = arith.addf %68, %39 : vector<8x128xf32>
    %70 = arith.mulf %65, %69 : vector<8x128xf32>
    %71 = arith.addf %67, %70 : vector<8x128xf32>
    %72 = math.tanh %71 : vector<8x128xf32>
    %cst_30 = arith.constant 1.000000e+00 : f32
    %73 = vector.broadcast %cst_30 : f32 to vector<8x128xf32>
    %74 = arith.subf %73, %66 : vector<8x128xf32>
    %75 = arith.mulf %74, %72 : vector<8x128xf32>
    %76 = arith.mulf %66, %47 : vector<8x128xf32>
    %77 = arith.addf %75, %76 : vector<8x128xf32>
    %78 = arith.truncf %77 : vector<8x128xf32> to vector<8x128xbf16>
    %cst_31 = arith.constant dense<0.000000e+00> : vector<8x384xf32>
    %79 = tpu.matmul %78, %35, %cst_31 {dimension_numbers = #tpu.dot_dimension_numbers<[1], [0], [0], [1], [0, 0, 1, 1], [], []>} : vector<8x128xbf16>, vector<128x384xbf16>, vector<8x384xf32> -> vector<8x384xf32>
    %80 = arith.addf %79, %42 : vector<8x384xf32>
    %81 = vector.extract_strided_slice %80 {offsets = [0, 0], sizes = [8, 256], strides = [1, 1]} : vector<8x384xf32> to vector<8x256xf32>
    %82 = vector.extract_strided_slice %53 {offsets = [0, 0], sizes = [8, 256], strides = [1, 1]} : vector<8x384xf32> to vector<8x256xf32>
    %83 = arith.addf %81, %82 : vector<8x256xf32>
    %84 = arith.negf %83 : vector<8x256xf32>
    %85 = math.exp %84 : vector<8x256xf32>
    %cst_32 = arith.constant 1.000000e+00 : f32
    %86 = vector.broadcast %cst_32 : f32 to vector<8x256xf32>
    %87 = arith.addf %86, %85 : vector<8x256xf32>
    %88 = arith.divf %86, %87 : vector<8x256xf32>
    %89 = vector.extract_strided_slice %88 {offsets = [0, 0], sizes = [8, 128], strides = [1, 1]} : vector<8x256xf32> to vector<8x128xf32>
    %90 = vector.extract_strided_slice %88 {offsets = [0, 128], sizes = [8, 128], strides = [1, 1]} : vector<8x256xf32> to vector<8x128xf32>
    %91 = vector.extract_strided_slice %80 {offsets = [0, 256], sizes = [8, 128], strides = [1, 1]} : vector<8x384xf32> to vector<8x128xf32>
    %92 = vector.extract_strided_slice %53 {offsets = [0, 256], sizes = [8, 128], strides = [1, 1]} : vector<8x384xf32> to vector<8x128xf32>
    %93 = arith.addf %92, %45 : vector<8x128xf32>
    %94 = arith.mulf %89, %93 : vector<8x128xf32>
    %95 = arith.addf %91, %94 : vector<8x128xf32>
    %96 = math.tanh %95 : vector<8x128xf32>
    %cst_33 = arith.constant 1.000000e+00 : f32
    %97 = vector.broadcast %cst_33 : f32 to vector<8x128xf32>
    %98 = arith.subf %97, %90 : vector<8x128xf32>
    %99 = arith.mulf %98, %96 : vector<8x128xf32>
    %100 = arith.mulf %90, %49 : vector<8x128xf32>
    %101 = arith.addf %99, %100 : vector<8x128xf32>
    %102 = arith.index_cast %c0_i32 : i32 to index
    %c0_34 = arith.constant 0 : index
    %c0_35 = arith.constant 0 : index
    %103 = vector.load %arg15[%102, %c0_34, %c0_35] : memref<8x8x128xf32, #tpu.memory_space<vmem>>, vector<1x8x128xf32>
    %104 = vector.shape_cast %103 : vector<1x8x128xf32> to vector<8x128xf32>
    %105 = vector.shape_cast %101 : vector<8x128xf32> to vector<1x8x128xf32>
    tpu.vector_store %arg15[%102, %c0_34, %c0_35], %105 {strides = array<i32>} : memref<8x8x128xf32, #tpu.memory_space<vmem>>, vector<1x8x128xf32>,
    %c1_i32 = arith.constant 1 : i32
    %106 = arith.truncf %77 : vector<8x128xf32> to vector<8x128xbf16>
    %cst_36 = arith.constant dense<0.000000e+00> : vector<8x384xf32>
    %107 = tpu.matmul %106, %34, %cst_36 {dimension_numbers = #tpu.dot_dimension_numbers<[1], [0], [0], [1], [0, 0, 1, 1], [], []>} : vector<8x128xbf16>, vector<128x384xbf16>, vector<8x384xf32> -> vector<8x384xf32>
    %108 = arith.truncf %101 : vector<8x128xf32> to vector<8x128xbf16>
    %cst_37 = arith.constant dense<0.000000e+00> : vector<8x384xf32>
    %109 = tpu.matmul %108, %36, %cst_37 {dimension_numbers = #tpu.dot_dimension_numbers<[1], [0], [0], [1], [0, 0, 1, 1], [], []>} : vector<8x128xbf16>, vector<128x384xbf16>, vector<8x384xf32> -> vector<8x384xf32>
    %110 = arith.index_cast %c1_i32 : i32 to index
    %c0_38 = arith.constant 0 : index
    %c0_39 = arith.constant 0 : index
    %111 = vector.load %arg14[%110, %c0_38, %c0_39] : memref<8x8x384xf32, #tpu.memory_space<vmem>>, vector<1x8x384xf32>
    %112 = vector.shape_cast %111 : vector<1x8x384xf32> to vector<8x384xf32>
    %113 = vector.extract_strided_slice %112 {offsets = [0, 0], sizes = [8, 256], strides = [1, 1]} : vector<8x384xf32> to vector<8x256xf32>
    %114 = vector.extract_strided_slice %107 {offsets = [0, 0], sizes = [8, 256], strides = [1, 1]} : vector<8x384xf32> to vector<8x256xf32>
    %115 = arith.addf %113, %114 : vector<8x256xf32>
    %116 = arith.negf %115 : vector<8x256xf32>
    %117 = math.exp %116 : vector<8x256xf32>
    %cst_40 = arith.constant 1.000000e+00 : f32
    %118 = vector.broadcast %cst_40 : f32 to vector<8x256xf32>
    %119 = arith.addf %118, %117 : vector<8x256xf32>
    %120 = arith.divf %118, %119 : vector<8x256xf32>
    %121 = vector.extract_strided_slice %120 {offsets = [0, 0], sizes = [8, 128], strides = [1, 1]} : vector<8x256xf32> to vector<8x128xf32>
    %122 = vector.extract_strided_slice %120 {offsets = [0, 128], sizes = [8, 128], strides = [1, 1]} : vector<8x256xf32> to vector<8x128xf32>
    %123 = vector.extract_strided_slice %112 {offsets = [0, 256], sizes = [8, 128], strides = [1, 1]} : vector<8x384xf32> to vector<8x128xf32>
    %124 = vector.extract_strided_slice %107 {offsets = [0, 256], sizes = [8, 128], strides = [1, 1]} : vector<8x384xf32> to vector<8x128xf32>
    %125 = arith.addf %124, %39 : vector<8x128xf32>
    %126 = arith.mulf %121, %125 : vector<8x128xf32>
    %127 = arith.addf %123, %126 : vector<8x128xf32>
    %128 = math.tanh %127 : vector<8x128xf32>
    %cst_41 = arith.constant 1.000000e+00 : f32
    %129 = vector.broadcast %cst_41 : f32 to vector<8x128xf32>
    %130 = arith.subf %129, %122 : vector<8x128xf32>
    %131 = arith.mulf %130, %128 : vector<8x128xf32>
    %132 = arith.mulf %122, %77 : vector<8x128xf32>
    %133 = arith.addf %131, %132 : vector<8x128xf32>
    %134 = arith.truncf %133 : vector<8x128xf32> to vector<8x128xbf16>
    %cst_42 = arith.constant dense<0.000000e+00> : vector<8x384xf32>
    %135 = tpu.matmul %134, %35, %cst_42 {dimension_numbers = #tpu.dot_dimension_numbers<[1], [0], [0], [1], [0, 0, 1, 1], [], []>} : vector<8x128xbf16>, vector<128x384xbf16>, vector<8x384xf32> -> vector<8x384xf32>
    %136 = arith.addf %135, %42 : vector<8x384xf32>
    %137 = vector.extract_strided_slice %136 {offsets = [0, 0], sizes = [8, 256], strides = [1, 1]} : vector<8x384xf32> to vector<8x256xf32>
    %138 = vector.extract_strided_slice %109 {offsets = [0, 0], sizes = [8, 256], strides = [1, 1]} : vector<8x384xf32> to vector<8x256xf32>
    %139 = arith.addf %137, %138 : vector<8x256xf32>
    %140 = arith.negf %139 : vector<8x256xf32>
    %141 = math.exp %140 : vector<8x256xf32>
    %cst_43 = arith.constant 1.000000e+00 : f32
    %142 = vector.broadcast %cst_43 : f32 to vector<8x256xf32>
    %143 = arith.addf %142, %141 : vector<8x256xf32>
    %144 = arith.divf %142, %143 : vector<8x256xf32>
    %145 = vector.extract_strided_slice %144 {offsets = [0, 0], sizes = [8, 128], strides = [1, 1]} : vector<8x256xf32> to vector<8x128xf32>
    %146 = vector.extract_strided_slice %144 {offsets = [0, 128], sizes = [8, 128], strides = [1, 1]} : vector<8x256xf32> to vector<8x128xf32>
    %147 = vector.extract_strided_slice %136 {offsets = [0, 256], sizes = [8, 128], strides = [1, 1]} : vector<8x384xf32> to vector<8x128xf32>
    %148 = vector.extract_strided_slice %109 {offsets = [0, 256], sizes = [8, 128], strides = [1, 1]} : vector<8x384xf32> to vector<8x128xf32>
    %149 = arith.addf %148, %45 : vector<8x128xf32>
    %150 = arith.mulf %145, %149 : vector<8x128xf32>
    %151 = arith.addf %147, %150 : vector<8x128xf32>
    %152 = math.tanh %151 : vector<8x128xf32>
    %cst_44 = arith.constant 1.000000e+00 : f32
    %153 = vector.broadcast %cst_44 : f32 to vector<8x128xf32>
    %154 = arith.subf %153, %146 : vector<8x128xf32>
    %155 = arith.mulf %154, %152 : vector<8x128xf32>
    %156 = arith.mulf %146, %101 : vector<8x128xf32>
    %157 = arith.addf %155, %156 : vector<8x128xf32>
    %158 = arith.index_cast %c1_i32 : i32 to index
    %c0_45 = arith.constant 0 : index
    %c0_46 = arith.constant 0 : index
    %159 = vector.load %arg15[%158, %c0_45, %c0_46] : memref<8x8x128xf32, #tpu.memory_space<vmem>>, vector<1x8x128xf32>
    %160 = vector.shape_cast %159 : vector<1x8x128xf32> to vector<8x128xf32>
    %161 = vector.shape_cast %157 : vector<8x128xf32> to vector<1x8x128xf32>
    tpu.vector_store %arg15[%158, %c0_45, %c0_46], %161 {strides = array<i32>} : memref<8x8x128xf32, #tpu.memory_space<vmem>>, vector<1x8x128xf32>,
    %c2_i32 = arith.constant 2 : i32
    %162 = arith.truncf %133 : vector<8x128xf32> to vector<8x128xbf16>
    %cst_47 = arith.constant dense<0.000000e+00> : vector<8x384xf32>
    %163 = tpu.matmul %162, %34, %cst_47 {dimension_numbers = #tpu.dot_dimension_numbers<[1], [0], [0], [1], [0, 0, 1, 1], [], []>} : vector<8x128xbf16>, vector<128x384xbf16>, vector<8x384xf32> -> vector<8x384xf32>
    %164 = arith.truncf %157 : vector<8x128xf32> to vector<8x128xbf16>
    %cst_48 = arith.constant dense<0.000000e+00> : vector<8x384xf32>
    %165 = tpu.matmul %164, %36, %cst_48 {dimension_numbers = #tpu.dot_dimension_numbers<[1], [0], [0], [1], [0, 0, 1, 1], [], []>} : vector<8x128xbf16>, vector<128x384xbf16>, vector<8x384xf32> -> vector<8x384xf32>
    %166 = arith.index_cast %c2_i32 : i32 to index
    %c0_49 = arith.constant 0 : index
    %c0_50 = arith.constant 0 : index
    %167 = vector.load %arg14[%166, %c0_49, %c0_50] : memref<8x8x384xf32, #tpu.memory_space<vmem>>, vector<1x8x384xf32>
    %168 = vector.shape_cast %167 : vector<1x8x384xf32> to vector<8x384xf32>
    %169 = vector.extract_strided_slice %168 {offsets = [0, 0], sizes = [8, 256], strides = [1, 1]} : vector<8x384xf32> to vector<8x256xf32>
    %170 = vector.extract_strided_slice %163 {offsets = [0, 0], sizes = [8, 256], strides = [1, 1]} : vector<8x384xf32> to vector<8x256xf32>
    %171 = arith.addf %169, %170 : vector<8x256xf32>
    %172 = arith.negf %171 : vector<8x256xf32>
    %173 = math.exp %172 : vector<8x256xf32>
    %cst_51 = arith.constant 1.000000e+00 : f32
    %174 = vector.broadcast %cst_51 : f32 to vector<8x256xf32>
    %175 = arith.addf %174, %173 : vector<8x256xf32>
    %176 = arith.divf %174, %175 : vector<8x256xf32>
    %177 = vector.extract_strided_slice %176 {offsets = [0, 0], sizes = [8, 128], strides = [1, 1]} : vector<8x256xf32> to vector<8x128xf32>
    %178 = vector.extract_strided_slice %176 {offsets = [0, 128], sizes = [8, 128], strides = [1, 1]} : vector<8x256xf32> to vector<8x128xf32>
    %179 = vector.extract_strided_slice %168 {offsets = [0, 256], sizes = [8, 128], strides = [1, 1]} : vector<8x384xf32> to vector<8x128xf32>
    %180 = vector.extract_strided_slice %163 {offsets = [0, 256], sizes = [8, 128], strides = [1, 1]} : vector<8x384xf32> to vector<8x128xf32>
    %181 = arith.addf %180, %39 : vector<8x128xf32>
    %182 = arith.mulf %177, %181 : vector<8x128xf32>
    %183 = arith.addf %179, %182 : vector<8x128xf32>
    %184 = math.tanh %183 : vector<8x128xf32>
    %cst_52 = arith.constant 1.000000e+00 : f32
    %185 = vector.broadcast %cst_52 : f32 to vector<8x128xf32>
    %186 = arith.subf %185, %178 : vector<8x128xf32>
    %187 = arith.mulf %186, %184 : vector<8x128xf32>
    %188 = arith.mulf %178, %133 : vector<8x128xf32>
    %189 = arith.addf %187, %188 : vector<8x128xf32>
    %190 = arith.truncf %189 : vector<8x128xf32> to vector<8x128xbf16>
    %cst_53 = arith.constant dense<0.000000e+00> : vector<8x384xf32>
    %191 = tpu.matmul %190, %35, %cst_53 {dimension_numbers = #tpu.dot_dimension_numbers<[1], [0], [0], [1], [0, 0, 1, 1], [], []>} : vector<8x128xbf16>, vector<128x384xbf16>, vector<8x384xf32> -> vector<8x384xf32>
    %192 = arith.addf %191, %42 : vector<8x384xf32>
    %193 = vector.extract_strided_slice %192 {offsets = [0, 0], sizes = [8, 256], strides = [1, 1]} : vector<8x384xf32> to vector<8x256xf32>
    %194 = vector.extract_strided_slice %165 {offsets = [0, 0], sizes = [8, 256], strides = [1, 1]} : vector<8x384xf32> to vector<8x256xf32>
    %195 = arith.addf %193, %194 : vector<8x256xf32>
    %196 = arith.negf %195 : vector<8x256xf32>
    %197 = math.exp %196 : vector<8x256xf32>
    %cst_54 = arith.constant 1.000000e+00 : f32
    %198 = vector.broadcast %cst_54 : f32 to vector<8x256xf32>
    %199 = arith.addf %198, %197 : vector<8x256xf32>
    %200 = arith.divf %198, %199 : vector<8x256xf32>
    %201 = vector.extract_strided_slice %200 {offsets = [0, 0], sizes = [8, 128], strides = [1, 1]} : vector<8x256xf32> to vector<8x128xf32>
    %202 = vector.extract_strided_slice %200 {offsets = [0, 128], sizes = [8, 128], strides = [1, 1]} : vector<8x256xf32> to vector<8x128xf32>
    %203 = vector.extract_strided_slice %192 {offsets = [0, 256], sizes = [8, 128], strides = [1, 1]} : vector<8x384xf32> to vector<8x128xf32>
    %204 = vector.extract_strided_slice %165 {offsets = [0, 256], sizes = [8, 128], strides = [1, 1]} : vector<8x384xf32> to vector<8x128xf32>
    %205 = arith.addf %204, %45 : vector<8x128xf32>
    %206 = arith.mulf %201, %205 : vector<8x128xf32>
    %207 = arith.addf %203, %206 : vector<8x128xf32>
    %208 = math.tanh %207 : vector<8x128xf32>
    %cst_55 = arith.constant 1.000000e+00 : f32
    %209 = vector.broadcast %cst_55 : f32 to vector<8x128xf32>
    %210 = arith.subf %209, %202 : vector<8x128xf32>
    %211 = arith.mulf %210, %208 : vector<8x128xf32>
    %212 = arith.mulf %202, %157 : vector<8x128xf32>
    %213 = arith.addf %211, %212 : vector<8x128xf32>
    %214 = arith.index_cast %c2_i32 : i32 to index
    %c0_56 = arith.constant 0 : index
    %c0_57 = arith.constant 0 : index
    %215 = vector.load %arg15[%214, %c0_56, %c0_57] : memref<8x8x128xf32, #tpu.memory_space<vmem>>, vector<1x8x128xf32>
    %216 = vector.shape_cast %215 : vector<1x8x128xf32> to vector<8x128xf32>
    %217 = vector.shape_cast %213 : vector<8x128xf32> to vector<1x8x128xf32>
    tpu.vector_store %arg15[%214, %c0_56, %c0_57], %217 {strides = array<i32>} : memref<8x8x128xf32, #tpu.memory_space<vmem>>, vector<1x8x128xf32>,
    %c3_i32 = arith.constant 3 : i32
    %218 = arith.truncf %189 : vector<8x128xf32> to vector<8x128xbf16>
    %cst_58 = arith.constant dense<0.000000e+00> : vector<8x384xf32>
    %219 = tpu.matmul %218, %34, %cst_58 {dimension_numbers = #tpu.dot_dimension_numbers<[1], [0], [0], [1], [0, 0, 1, 1], [], []>} : vector<8x128xbf16>, vector<128x384xbf16>, vector<8x384xf32> -> vector<8x384xf32>
    %220 = arith.truncf %213 : vector<8x128xf32> to vector<8x128xbf16>
    %cst_59 = arith.constant dense<0.000000e+00> : vector<8x384xf32>
    %221 = tpu.matmul %220, %36, %cst_59 {dimension_numbers = #tpu.dot_dimension_numbers<[1], [0], [0], [1], [0, 0, 1, 1], [], []>} : vector<8x128xbf16>, vector<128x384xbf16>, vector<8x384xf32> -> vector<8x384xf32>
    %222 = arith.index_cast %c3_i32 : i32 to index
    %c0_60 = arith.constant 0 : index
    %c0_61 = arith.constant 0 : index
    %223 = vector.load %arg14[%222, %c0_60, %c0_61] : memref<8x8x384xf32, #tpu.memory_space<vmem>>, vector<1x8x384xf32>
    %224 = vector.shape_cast %223 : vector<1x8x384xf32> to vector<8x384xf32>
    %225 = vector.extract_strided_slice %224 {offsets = [0, 0], sizes = [8, 256], strides = [1, 1]} : vector<8x384xf32> to vector<8x256xf32>
    %226 = vector.extract_strided_slice %219 {offsets = [0, 0], sizes = [8, 256], strides = [1, 1]} : vector<8x384xf32> to vector<8x256xf32>
    %227 = arith.addf %225, %226 : vector<8x256xf32>
    %228 = arith.negf %227 : vector<8x256xf32>
    %229 = math.exp %228 : vector<8x256xf32>
    %cst_62 = arith.constant 1.000000e+00 : f32
    %230 = vector.broadcast %cst_62 : f32 to vector<8x256xf32>
    %231 = arith.addf %230, %229 : vector<8x256xf32>
    %232 = arith.divf %230, %231 : vector<8x256xf32>
    %233 = vector.extract_strided_slice %232 {offsets = [0, 0], sizes = [8, 128], strides = [1, 1]} : vector<8x256xf32> to vector<8x128xf32>
    %234 = vector.extract_strided_slice %232 {offsets = [0, 128], sizes = [8, 128], strides = [1, 1]} : vector<8x256xf32> to vector<8x128xf32>
    %235 = vector.extract_strided_slice %224 {offsets = [0, 256], sizes = [8, 128], strides = [1, 1]} : vector<8x384xf32> to vector<8x128xf32>
    %236 = vector.extract_strided_slice %219 {offsets = [0, 256], sizes = [8, 128], strides = [1, 1]} : vector<8x384xf32> to vector<8x128xf32>
    %237 = arith.addf %236, %39 : vector<8x128xf32>
    %238 = arith.mulf %233, %237 : vector<8x128xf32>
    %239 = arith.addf %235, %238 : vector<8x128xf32>
    %240 = math.tanh %239 : vector<8x128xf32>
    %cst_63 = arith.constant 1.000000e+00 : f32
    %241 = vector.broadcast %cst_63 : f32 to vector<8x128xf32>
    %242 = arith.subf %241, %234 : vector<8x128xf32>
    %243 = arith.mulf %242, %240 : vector<8x128xf32>
    %244 = arith.mulf %234, %189 : vector<8x128xf32>
    %245 = arith.addf %243, %244 : vector<8x128xf32>
    %246 = arith.truncf %245 : vector<8x128xf32> to vector<8x128xbf16>
    %cst_64 = arith.constant dense<0.000000e+00> : vector<8x384xf32>
    %247 = tpu.matmul %246, %35, %cst_64 {dimension_numbers = #tpu.dot_dimension_numbers<[1], [0], [0], [1], [0, 0, 1, 1], [], []>} : vector<8x128xbf16>, vector<128x384xbf16>, vector<8x384xf32> -> vector<8x384xf32>
    %248 = arith.addf %247, %42 : vector<8x384xf32>
    %249 = vector.extract_strided_slice %248 {offsets = [0, 0], sizes = [8, 256], strides = [1, 1]} : vector<8x384xf32> to vector<8x256xf32>
    %250 = vector.extract_strided_slice %221 {offsets = [0, 0], sizes = [8, 256], strides = [1, 1]} : vector<8x384xf32> to vector<8x256xf32>
    %251 = arith.addf %249, %250 : vector<8x256xf32>
    %252 = arith.negf %251 : vector<8x256xf32>
    %253 = math.exp %252 : vector<8x256xf32>
    %cst_65 = arith.constant 1.000000e+00 : f32
    %254 = vector.broadcast %cst_65 : f32 to vector<8x256xf32>
    %255 = arith.addf %254, %253 : vector<8x256xf32>
    %256 = arith.divf %254, %255 : vector<8x256xf32>
    %257 = vector.extract_strided_slice %256 {offsets = [0, 0], sizes = [8, 128], strides = [1, 1]} : vector<8x256xf32> to vector<8x128xf32>
    %258 = vector.extract_strided_slice %256 {offsets = [0, 128], sizes = [8, 128], strides = [1, 1]} : vector<8x256xf32> to vector<8x128xf32>
    %259 = vector.extract_strided_slice %248 {offsets = [0, 256], sizes = [8, 128], strides = [1, 1]} : vector<8x384xf32> to vector<8x128xf32>
    %260 = vector.extract_strided_slice %221 {offsets = [0, 256], sizes = [8, 128], strides = [1, 1]} : vector<8x384xf32> to vector<8x128xf32>
    %261 = arith.addf %260, %45 : vector<8x128xf32>
    %262 = arith.mulf %257, %261 : vector<8x128xf32>
    %263 = arith.addf %259, %262 : vector<8x128xf32>
    %264 = math.tanh %263 : vector<8x128xf32>
    %cst_66 = arith.constant 1.000000e+00 : f32
    %265 = vector.broadcast %cst_66 : f32 to vector<8x128xf32>
    %266 = arith.subf %265, %258 : vector<8x128xf32>
    %267 = arith.mulf %266, %264 : vector<8x128xf32>
    %268 = arith.mulf %258, %213 : vector<8x128xf32>
    %269 = arith.addf %267, %268 : vector<8x128xf32>
    %270 = arith.index_cast %c3_i32 : i32 to index
    %c0_67 = arith.constant 0 : index
    %c0_68 = arith.constant 0 : index
    %271 = vector.load %arg15[%270, %c0_67, %c0_68] : memref<8x8x128xf32, #tpu.memory_space<vmem>>, vector<1x8x128xf32>
    %272 = vector.shape_cast %271 : vector<1x8x128xf32> to vector<8x128xf32>
    %273 = vector.shape_cast %269 : vector<8x128xf32> to vector<1x8x128xf32>
    tpu.vector_store %arg15[%270, %c0_67, %c0_68], %273 {strides = array<i32>} : memref<8x8x128xf32, #tpu.memory_space<vmem>>, vector<1x8x128xf32>,
    %c4_i32 = arith.constant 4 : i32
    %274 = arith.truncf %245 : vector<8x128xf32> to vector<8x128xbf16>
    %cst_69 = arith.constant dense<0.000000e+00> : vector<8x384xf32>
    %275 = tpu.matmul %274, %34, %cst_69 {dimension_numbers = #tpu.dot_dimension_numbers<[1], [0], [0], [1], [0, 0, 1, 1], [], []>} : vector<8x128xbf16>, vector<128x384xbf16>, vector<8x384xf32> -> vector<8x384xf32>
    %276 = arith.truncf %269 : vector<8x128xf32> to vector<8x128xbf16>
    %cst_70 = arith.constant dense<0.000000e+00> : vector<8x384xf32>
    %277 = tpu.matmul %276, %36, %cst_70 {dimension_numbers = #tpu.dot_dimension_numbers<[1], [0], [0], [1], [0, 0, 1, 1], [], []>} : vector<8x128xbf16>, vector<128x384xbf16>, vector<8x384xf32> -> vector<8x384xf32>
    %278 = arith.index_cast %c4_i32 : i32 to index
    %c0_71 = arith.constant 0 : index
    %c0_72 = arith.constant 0 : index
    %279 = vector.load %arg14[%278, %c0_71, %c0_72] : memref<8x8x384xf32, #tpu.memory_space<vmem>>, vector<1x8x384xf32>
    %280 = vector.shape_cast %279 : vector<1x8x384xf32> to vector<8x384xf32>
    %281 = vector.extract_strided_slice %280 {offsets = [0, 0], sizes = [8, 256], strides = [1, 1]} : vector<8x384xf32> to vector<8x256xf32>
    %282 = vector.extract_strided_slice %275 {offsets = [0, 0], sizes = [8, 256], strides = [1, 1]} : vector<8x384xf32> to vector<8x256xf32>
    %283 = arith.addf %281, %282 : vector<8x256xf32>
    %284 = arith.negf %283 : vector<8x256xf32>
    %285 = math.exp %284 : vector<8x256xf32>
    %cst_73 = arith.constant 1.000000e+00 : f32
    %286 = vector.broadcast %cst_73 : f32 to vector<8x256xf32>
    %287 = arith.addf %286, %285 : vector<8x256xf32>
    %288 = arith.divf %286, %287 : vector<8x256xf32>
    %289 = vector.extract_strided_slice %288 {offsets = [0, 0], sizes = [8, 128], strides = [1, 1]} : vector<8x256xf32> to vector<8x128xf32>
    %290 = vector.extract_strided_slice %288 {offsets = [0, 128], sizes = [8, 128], strides = [1, 1]} : vector<8x256xf32> to vector<8x128xf32>
    %291 = vector.extract_strided_slice %280 {offsets = [0, 256], sizes = [8, 128], strides = [1, 1]} : vector<8x384xf32> to vector<8x128xf32>
    %292 = vector.extract_strided_slice %275 {offsets = [0, 256], sizes = [8, 128], strides = [1, 1]} : vector<8x384xf32> to vector<8x128xf32>
    %293 = arith.addf %292, %39 : vector<8x128xf32>
    %294 = arith.mulf %289, %293 : vector<8x128xf32>
    %295 = arith.addf %291, %294 : vector<8x128xf32>
    %296 = math.tanh %295 : vector<8x128xf32>
    %cst_74 = arith.constant 1.000000e+00 : f32
    %297 = vector.broadcast %cst_74 : f32 to vector<8x128xf32>
    %298 = arith.subf %297, %290 : vector<8x128xf32>
    %299 = arith.mulf %298, %296 : vector<8x128xf32>
    %300 = arith.mulf %290, %245 : vector<8x128xf32>
    %301 = arith.addf %299, %300 : vector<8x128xf32>
    %302 = arith.truncf %301 : vector<8x128xf32> to vector<8x128xbf16>
    %cst_75 = arith.constant dense<0.000000e+00> : vector<8x384xf32>
    %303 = tpu.matmul %302, %35, %cst_75 {dimension_numbers = #tpu.dot_dimension_numbers<[1], [0], [0], [1], [0, 0, 1, 1], [], []>} : vector<8x128xbf16>, vector<128x384xbf16>, vector<8x384xf32> -> vector<8x384xf32>
    %304 = arith.addf %303, %42 : vector<8x384xf32>
    %305 = vector.extract_strided_slice %304 {offsets = [0, 0], sizes = [8, 256], strides = [1, 1]} : vector<8x384xf32> to vector<8x256xf32>
    %306 = vector.extract_strided_slice %277 {offsets = [0, 0], sizes = [8, 256], strides = [1, 1]} : vector<8x384xf32> to vector<8x256xf32>
    %307 = arith.addf %305, %306 : vector<8x256xf32>
    %308 = arith.negf %307 : vector<8x256xf32>
    %309 = math.exp %308 : vector<8x256xf32>
    %cst_76 = arith.constant 1.000000e+00 : f32
    %310 = vector.broadcast %cst_76 : f32 to vector<8x256xf32>
    %311 = arith.addf %310, %309 : vector<8x256xf32>
    %312 = arith.divf %310, %311 : vector<8x256xf32>
    %313 = vector.extract_strided_slice %312 {offsets = [0, 0], sizes = [8, 128], strides = [1, 1]} : vector<8x256xf32> to vector<8x128xf32>
    %314 = vector.extract_strided_slice %312 {offsets = [0, 128], sizes = [8, 128], strides = [1, 1]} : vector<8x256xf32> to vector<8x128xf32>
    %315 = vector.extract_strided_slice %304 {offsets = [0, 256], sizes = [8, 128], strides = [1, 1]} : vector<8x384xf32> to vector<8x128xf32>
    %316 = vector.extract_strided_slice %277 {offsets = [0, 256], sizes = [8, 128], strides = [1, 1]} : vector<8x384xf32> to vector<8x128xf32>
    %317 = arith.addf %316, %45 : vector<8x128xf32>
    %318 = arith.mulf %313, %317 : vector<8x128xf32>
    %319 = arith.addf %315, %318 : vector<8x128xf32>
    %320 = math.tanh %319 : vector<8x128xf32>
    %cst_77 = arith.constant 1.000000e+00 : f32
    %321 = vector.broadcast %cst_77 : f32 to vector<8x128xf32>
    %322 = arith.subf %321, %314 : vector<8x128xf32>
    %323 = arith.mulf %322, %320 : vector<8x128xf32>
    %324 = arith.mulf %314, %269 : vector<8x128xf32>
    %325 = arith.addf %323, %324 : vector<8x128xf32>
    %326 = arith.index_cast %c4_i32 : i32 to index
    %c0_78 = arith.constant 0 : index
    %c0_79 = arith.constant 0 : index
    %327 = vector.load %arg15[%326, %c0_78, %c0_79] : memref<8x8x128xf32, #tpu.memory_space<vmem>>, vector<1x8x128xf32>
    %328 = vector.shape_cast %327 : vector<1x8x128xf32> to vector<8x128xf32>
    %329 = vector.shape_cast %325 : vector<8x128xf32> to vector<1x8x128xf32>
    tpu.vector_store %arg15[%326, %c0_78, %c0_79], %329 {strides = array<i32>} : memref<8x8x128xf32, #tpu.memory_space<vmem>>, vector<1x8x128xf32>,
    %c5_i32 = arith.constant 5 : i32
    %330 = arith.truncf %301 : vector<8x128xf32> to vector<8x128xbf16>
    %cst_80 = arith.constant dense<0.000000e+00> : vector<8x384xf32>
    %331 = tpu.matmul %330, %34, %cst_80 {dimension_numbers = #tpu.dot_dimension_numbers<[1], [0], [0], [1], [0, 0, 1, 1], [], []>} : vector<8x128xbf16>, vector<128x384xbf16>, vector<8x384xf32> -> vector<8x384xf32>
    %332 = arith.truncf %325 : vector<8x128xf32> to vector<8x128xbf16>
    %cst_81 = arith.constant dense<0.000000e+00> : vector<8x384xf32>
    %333 = tpu.matmul %332, %36, %cst_81 {dimension_numbers = #tpu.dot_dimension_numbers<[1], [0], [0], [1], [0, 0, 1, 1], [], []>} : vector<8x128xbf16>, vector<128x384xbf16>, vector<8x384xf32> -> vector<8x384xf32>
    %334 = arith.index_cast %c5_i32 : i32 to index
    %c0_82 = arith.constant 0 : index
    %c0_83 = arith.constant 0 : index
    %335 = vector.load %arg14[%334, %c0_82, %c0_83] : memref<8x8x384xf32, #tpu.memory_space<vmem>>, vector<1x8x384xf32>
    %336 = vector.shape_cast %335 : vector<1x8x384xf32> to vector<8x384xf32>
    %337 = vector.extract_strided_slice %336 {offsets = [0, 0], sizes = [8, 256], strides = [1, 1]} : vector<8x384xf32> to vector<8x256xf32>
    %338 = vector.extract_strided_slice %331 {offsets = [0, 0], sizes = [8, 256], strides = [1, 1]} : vector<8x384xf32> to vector<8x256xf32>
    %339 = arith.addf %337, %338 : vector<8x256xf32>
    %340 = arith.negf %339 : vector<8x256xf32>
    %341 = math.exp %340 : vector<8x256xf32>
    %cst_84 = arith.constant 1.000000e+00 : f32
    %342 = vector.broadcast %cst_84 : f32 to vector<8x256xf32>
    %343 = arith.addf %342, %341 : vector<8x256xf32>
    %344 = arith.divf %342, %343 : vector<8x256xf32>
    %345 = vector.extract_strided_slice %344 {offsets = [0, 0], sizes = [8, 128], strides = [1, 1]} : vector<8x256xf32> to vector<8x128xf32>
    %346 = vector.extract_strided_slice %344 {offsets = [0, 128], sizes = [8, 128], strides = [1, 1]} : vector<8x256xf32> to vector<8x128xf32>
    %347 = vector.extract_strided_slice %336 {offsets = [0, 256], sizes = [8, 128], strides = [1, 1]} : vector<8x384xf32> to vector<8x128xf32>
    %348 = vector.extract_strided_slice %331 {offsets = [0, 256], sizes = [8, 128], strides = [1, 1]} : vector<8x384xf32> to vector<8x128xf32>
    %349 = arith.addf %348, %39 : vector<8x128xf32>
    %350 = arith.mulf %345, %349 : vector<8x128xf32>
    %351 = arith.addf %347, %350 : vector<8x128xf32>
    %352 = math.tanh %351 : vector<8x128xf32>
    %cst_85 = arith.constant 1.000000e+00 : f32
    %353 = vector.broadcast %cst_85 : f32 to vector<8x128xf32>
    %354 = arith.subf %353, %346 : vector<8x128xf32>
    %355 = arith.mulf %354, %352 : vector<8x128xf32>
    %356 = arith.mulf %346, %301 : vector<8x128xf32>
    %357 = arith.addf %355, %356 : vector<8x128xf32>
    %358 = arith.truncf %357 : vector<8x128xf32> to vector<8x128xbf16>
    %cst_86 = arith.constant dense<0.000000e+00> : vector<8x384xf32>
    %359 = tpu.matmul %358, %35, %cst_86 {dimension_numbers = #tpu.dot_dimension_numbers<[1], [0], [0], [1], [0, 0, 1, 1], [], []>} : vector<8x128xbf16>, vector<128x384xbf16>, vector<8x384xf32> -> vector<8x384xf32>
    %360 = arith.addf %359, %42 : vector<8x384xf32>
    %361 = vector.extract_strided_slice %360 {offsets = [0, 0], sizes = [8, 256], strides = [1, 1]} : vector<8x384xf32> to vector<8x256xf32>
    %362 = vector.extract_strided_slice %333 {offsets = [0, 0], sizes = [8, 256], strides = [1, 1]} : vector<8x384xf32> to vector<8x256xf32>
    %363 = arith.addf %361, %362 : vector<8x256xf32>
    %364 = arith.negf %363 : vector<8x256xf32>
    %365 = math.exp %364 : vector<8x256xf32>
    %cst_87 = arith.constant 1.000000e+00 : f32
    %366 = vector.broadcast %cst_87 : f32 to vector<8x256xf32>
    %367 = arith.addf %366, %365 : vector<8x256xf32>
    %368 = arith.divf %366, %367 : vector<8x256xf32>
    %369 = vector.extract_strided_slice %368 {offsets = [0, 0], sizes = [8, 128], strides = [1, 1]} : vector<8x256xf32> to vector<8x128xf32>
    %370 = vector.extract_strided_slice %368 {offsets = [0, 128], sizes = [8, 128], strides = [1, 1]} : vector<8x256xf32> to vector<8x128xf32>
    %371 = vector.extract_strided_slice %360 {offsets = [0, 256], sizes = [8, 128], strides = [1, 1]} : vector<8x384xf32> to vector<8x128xf32>
    %372 = vector.extract_strided_slice %333 {offsets = [0, 256], sizes = [8, 128], strides = [1, 1]} : vector<8x384xf32> to vector<8x128xf32>
    %373 = arith.addf %372, %45 : vector<8x128xf32>
    %374 = arith.mulf %369, %373 : vector<8x128xf32>
    %375 = arith.addf %371, %374 : vector<8x128xf32>
    %376 = math.tanh %375 : vector<8x128xf32>
    %cst_88 = arith.constant 1.000000e+00 : f32
    %377 = vector.broadcast %cst_88 : f32 to vector<8x128xf32>
    %378 = arith.subf %377, %370 : vector<8x128xf32>
    %379 = arith.mulf %378, %376 : vector<8x128xf32>
    %380 = arith.mulf %370, %325 : vector<8x128xf32>
    %381 = arith.addf %379, %380 : vector<8x128xf32>
    %382 = arith.index_cast %c5_i32 : i32 to index
    %c0_89 = arith.constant 0 : index
    %c0_90 = arith.constant 0 : index
    %383 = vector.load %arg15[%382, %c0_89, %c0_90] : memref<8x8x128xf32, #tpu.memory_space<vmem>>, vector<1x8x128xf32>
    %384 = vector.shape_cast %383 : vector<1x8x128xf32> to vector<8x128xf32>
    %385 = vector.shape_cast %381 : vector<8x128xf32> to vector<1x8x128xf32>
    tpu.vector_store %arg15[%382, %c0_89, %c0_90], %385 {strides = array<i32>} : memref<8x8x128xf32, #tpu.memory_space<vmem>>, vector<1x8x128xf32>,
    %c6_i32 = arith.constant 6 : i32
    %386 = arith.truncf %357 : vector<8x128xf32> to vector<8x128xbf16>
    %cst_91 = arith.constant dense<0.000000e+00> : vector<8x384xf32>
    %387 = tpu.matmul %386, %34, %cst_91 {dimension_numbers = #tpu.dot_dimension_numbers<[1], [0], [0], [1], [0, 0, 1, 1], [], []>} : vector<8x128xbf16>, vector<128x384xbf16>, vector<8x384xf32> -> vector<8x384xf32>
    %388 = arith.truncf %381 : vector<8x128xf32> to vector<8x128xbf16>
    %cst_92 = arith.constant dense<0.000000e+00> : vector<8x384xf32>
    %389 = tpu.matmul %388, %36, %cst_92 {dimension_numbers = #tpu.dot_dimension_numbers<[1], [0], [0], [1], [0, 0, 1, 1], [], []>} : vector<8x128xbf16>, vector<128x384xbf16>, vector<8x384xf32> -> vector<8x384xf32>
    %390 = arith.index_cast %c6_i32 : i32 to index
    %c0_93 = arith.constant 0 : index
    %c0_94 = arith.constant 0 : index
    %391 = vector.load %arg14[%390, %c0_93, %c0_94] : memref<8x8x384xf32, #tpu.memory_space<vmem>>, vector<1x8x384xf32>
    %392 = vector.shape_cast %391 : vector<1x8x384xf32> to vector<8x384xf32>
    %393 = vector.extract_strided_slice %392 {offsets = [0, 0], sizes = [8, 256], strides = [1, 1]} : vector<8x384xf32> to vector<8x256xf32>
    %394 = vector.extract_strided_slice %387 {offsets = [0, 0], sizes = [8, 256], strides = [1, 1]} : vector<8x384xf32> to vector<8x256xf32>
    %395 = arith.addf %393, %394 : vector<8x256xf32>
    %396 = arith.negf %395 : vector<8x256xf32>
    %397 = math.exp %396 : vector<8x256xf32>
    %cst_95 = arith.constant 1.000000e+00 : f32
    %398 = vector.broadcast %cst_95 : f32 to vector<8x256xf32>
    %399 = arith.addf %398, %397 : vector<8x256xf32>
    %400 = arith.divf %398, %399 : vector<8x256xf32>
    %401 = vector.extract_strided_slice %400 {offsets = [0, 0], sizes = [8, 128], strides = [1, 1]} : vector<8x256xf32> to vector<8x128xf32>
    %402 = vector.extract_strided_slice %400 {offsets = [0, 128], sizes = [8, 128], strides = [1, 1]} : vector<8x256xf32> to vector<8x128xf32>
    %403 = vector.extract_strided_slice %392 {offsets = [0, 256], sizes = [8, 128], strides = [1, 1]} : vector<8x384xf32> to vector<8x128xf32>
    %404 = vector.extract_strided_slice %387 {offsets = [0, 256], sizes = [8, 128], strides = [1, 1]} : vector<8x384xf32> to vector<8x128xf32>
    %405 = arith.addf %404, %39 : vector<8x128xf32>
    %406 = arith.mulf %401, %405 : vector<8x128xf32>
    %407 = arith.addf %403, %406 : vector<8x128xf32>
    %408 = math.tanh %407 : vector<8x128xf32>
    %cst_96 = arith.constant 1.000000e+00 : f32
    %409 = vector.broadcast %cst_96 : f32 to vector<8x128xf32>
    %410 = arith.subf %409, %402 : vector<8x128xf32>
    %411 = arith.mulf %410, %408 : vector<8x128xf32>
    %412 = arith.mulf %402, %357 : vector<8x128xf32>
    %413 = arith.addf %411, %412 : vector<8x128xf32>
    %414 = arith.truncf %413 : vector<8x128xf32> to vector<8x128xbf16>
    %cst_97 = arith.constant dense<0.000000e+00> : vector<8x384xf32>
    %415 = tpu.matmul %414, %35, %cst_97 {dimension_numbers = #tpu.dot_dimension_numbers<[1], [0], [0], [1], [0, 0, 1, 1], [], []>} : vector<8x128xbf16>, vector<128x384xbf16>, vector<8x384xf32> -> vector<8x384xf32>
    %416 = arith.addf %415, %42 : vector<8x384xf32>
    %417 = vector.extract_strided_slice %416 {offsets = [0, 0], sizes = [8, 256], strides = [1, 1]} : vector<8x384xf32> to vector<8x256xf32>
    %418 = vector.extract_strided_slice %389 {offsets = [0, 0], sizes = [8, 256], strides = [1, 1]} : vector<8x384xf32> to vector<8x256xf32>
    %419 = arith.addf %417, %418 : vector<8x256xf32>
    %420 = arith.negf %419 : vector<8x256xf32>
    %421 = math.exp %420 : vector<8x256xf32>
    %cst_98 = arith.constant 1.000000e+00 : f32
    %422 = vector.broadcast %cst_98 : f32 to vector<8x256xf32>
    %423 = arith.addf %422, %421 : vector<8x256xf32>
    %424 = arith.divf %422, %423 : vector<8x256xf32>
    %425 = vector.extract_strided_slice %424 {offsets = [0, 0], sizes = [8, 128], strides = [1, 1]} : vector<8x256xf32> to vector<8x128xf32>
    %426 = vector.extract_strided_slice %424 {offsets = [0, 128], sizes = [8, 128], strides = [1, 1]} : vector<8x256xf32> to vector<8x128xf32>
    %427 = vector.extract_strided_slice %416 {offsets = [0, 256], sizes = [8, 128], strides = [1, 1]} : vector<8x384xf32> to vector<8x128xf32>
    %428 = vector.extract_strided_slice %389 {offsets = [0, 256], sizes = [8, 128], strides = [1, 1]} : vector<8x384xf32> to vector<8x128xf32>
    %429 = arith.addf %428, %45 : vector<8x128xf32>
    %430 = arith.mulf %425, %429 : vector<8x128xf32>
    %431 = arith.addf %427, %430 : vector<8x128xf32>
    %432 = math.tanh %431 : vector<8x128xf32>
    %cst_99 = arith.constant 1.000000e+00 : f32
    %433 = vector.broadcast %cst_99 : f32 to vector<8x128xf32>
    %434 = arith.subf %433, %426 : vector<8x128xf32>
    %435 = arith.mulf %434, %432 : vector<8x128xf32>
    %436 = arith.mulf %426, %381 : vector<8x128xf32>
    %437 = arith.addf %435, %436 : vector<8x128xf32>
    %438 = arith.index_cast %c6_i32 : i32 to index
    %c0_100 = arith.constant 0 : index
    %c0_101 = arith.constant 0 : index
    %439 = vector.load %arg15[%438, %c0_100, %c0_101] : memref<8x8x128xf32, #tpu.memory_space<vmem>>, vector<1x8x128xf32>
    %440 = vector.shape_cast %439 : vector<1x8x128xf32> to vector<8x128xf32>
    %441 = vector.shape_cast %437 : vector<8x128xf32> to vector<1x8x128xf32>
    tpu.vector_store %arg15[%438, %c0_100, %c0_101], %441 {strides = array<i32>} : memref<8x8x128xf32, #tpu.memory_space<vmem>>, vector<1x8x128xf32>,
    %c7_i32 = arith.constant 7 : i32
    %442 = arith.truncf %413 : vector<8x128xf32> to vector<8x128xbf16>
    %cst_102 = arith.constant dense<0.000000e+00> : vector<8x384xf32>
    %443 = tpu.matmul %442, %34, %cst_102 {dimension_numbers = #tpu.dot_dimension_numbers<[1], [0], [0], [1], [0, 0, 1, 1], [], []>} : vector<8x128xbf16>, vector<128x384xbf16>, vector<8x384xf32> -> vector<8x384xf32>
    %444 = arith.truncf %437 : vector<8x128xf32> to vector<8x128xbf16>
    %cst_103 = arith.constant dense<0.000000e+00> : vector<8x384xf32>
    %445 = tpu.matmul %444, %36, %cst_103 {dimension_numbers = #tpu.dot_dimension_numbers<[1], [0], [0], [1], [0, 0, 1, 1], [], []>} : vector<8x128xbf16>, vector<128x384xbf16>, vector<8x384xf32> -> vector<8x384xf32>
    %446 = arith.index_cast %c7_i32 : i32 to index
    %c0_104 = arith.constant 0 : index
    %c0_105 = arith.constant 0 : index
    %447 = vector.load %arg14[%446, %c0_104, %c0_105] : memref<8x8x384xf32, #tpu.memory_space<vmem>>, vector<1x8x384xf32>
    %448 = vector.shape_cast %447 : vector<1x8x384xf32> to vector<8x384xf32>
    %449 = vector.extract_strided_slice %448 {offsets = [0, 0], sizes = [8, 256], strides = [1, 1]} : vector<8x384xf32> to vector<8x256xf32>
    %450 = vector.extract_strided_slice %443 {offsets = [0, 0], sizes = [8, 256], strides = [1, 1]} : vector<8x384xf32> to vector<8x256xf32>
    %451 = arith.addf %449, %450 : vector<8x256xf32>
    %452 = arith.negf %451 : vector<8x256xf32>
    %453 = math.exp %452 : vector<8x256xf32>
    %cst_106 = arith.constant 1.000000e+00 : f32
    %454 = vector.broadcast %cst_106 : f32 to vector<8x256xf32>
    %455 = arith.addf %454, %453 : vector<8x256xf32>
    %456 = arith.divf %454, %455 : vector<8x256xf32>
    %457 = vector.extract_strided_slice %456 {offsets = [0, 0], sizes = [8, 128], strides = [1, 1]} : vector<8x256xf32> to vector<8x128xf32>
    %458 = vector.extract_strided_slice %456 {offsets = [0, 128], sizes = [8, 128], strides = [1, 1]} : vector<8x256xf32> to vector<8x128xf32>
    %459 = vector.extract_strided_slice %448 {offsets = [0, 256], sizes = [8, 128], strides = [1, 1]} : vector<8x384xf32> to vector<8x128xf32>
    %460 = vector.extract_strided_slice %443 {offsets = [0, 256], sizes = [8, 128], strides = [1, 1]} : vector<8x384xf32> to vector<8x128xf32>
    %461 = arith.addf %460, %39 : vector<8x128xf32>
    %462 = arith.mulf %457, %461 : vector<8x128xf32>
    %463 = arith.addf %459, %462 : vector<8x128xf32>
    %464 = math.tanh %463 : vector<8x128xf32>
    %cst_107 = arith.constant 1.000000e+00 : f32
    %465 = vector.broadcast %cst_107 : f32 to vector<8x128xf32>
    %466 = arith.subf %465, %458 : vector<8x128xf32>
    %467 = arith.mulf %466, %464 : vector<8x128xf32>
    %468 = arith.mulf %458, %413 : vector<8x128xf32>
    %469 = arith.addf %467, %468 : vector<8x128xf32>
    %470 = arith.truncf %469 : vector<8x128xf32> to vector<8x128xbf16>
    %cst_108 = arith.constant dense<0.000000e+00> : vector<8x384xf32>
    %471 = tpu.matmul %470, %35, %cst_108 {dimension_numbers = #tpu.dot_dimension_numbers<[1], [0], [0], [1], [0, 0, 1, 1], [], []>} : vector<8x128xbf16>, vector<128x384xbf16>, vector<8x384xf32> -> vector<8x384xf32>
    %472 = arith.addf %471, %42 : vector<8x384xf32>
    %473 = vector.extract_strided_slice %472 {offsets = [0, 0], sizes = [8, 256], strides = [1, 1]} : vector<8x384xf32> to vector<8x256xf32>
    %474 = vector.extract_strided_slice %445 {offsets = [0, 0], sizes = [8, 256], strides = [1, 1]} : vector<8x384xf32> to vector<8x256xf32>
    %475 = arith.addf %473, %474 : vector<8x256xf32>
    %476 = arith.negf %475 : vector<8x256xf32>
    %477 = math.exp %476 : vector<8x256xf32>
    %cst_109 = arith.constant 1.000000e+00 : f32
    %478 = vector.broadcast %cst_109 : f32 to vector<8x256xf32>
    %479 = arith.addf %478, %477 : vector<8x256xf32>
    %480 = arith.divf %478, %479 : vector<8x256xf32>
    %481 = vector.extract_strided_slice %480 {offsets = [0, 0], sizes = [8, 128], strides = [1, 1]} : vector<8x256xf32> to vector<8x128xf32>
    %482 = vector.extract_strided_slice %480 {offsets = [0, 128], sizes = [8, 128], strides = [1, 1]} : vector<8x256xf32> to vector<8x128xf32>
    %483 = vector.extract_strided_slice %472 {offsets = [0, 256], sizes = [8, 128], strides = [1, 1]} : vector<8x384xf32> to vector<8x128xf32>
    %484 = vector.extract_strided_slice %445 {offsets = [0, 256], sizes = [8, 128], strides = [1, 1]} : vector<8x384xf32> to vector<8x128xf32>
    %485 = arith.addf %484, %45 : vector<8x128xf32>
    %486 = arith.mulf %481, %485 : vector<8x128xf32>
    %487 = arith.addf %483, %486 : vector<8x128xf32>
    %488 = math.tanh %487 : vector<8x128xf32>
    %cst_110 = arith.constant 1.000000e+00 : f32
    %489 = vector.broadcast %cst_110 : f32 to vector<8x128xf32>
    %490 = arith.subf %489, %482 : vector<8x128xf32>
    %491 = arith.mulf %490, %488 : vector<8x128xf32>
    %492 = arith.mulf %482, %437 : vector<8x128xf32>
    %493 = arith.addf %491, %492 : vector<8x128xf32>
    %494 = arith.index_cast %c7_i32 : i32 to index
    %c0_111 = arith.constant 0 : index
    %c0_112 = arith.constant 0 : index
    %495 = vector.load %arg15[%494, %c0_111, %c0_112] : memref<8x8x128xf32, #tpu.memory_space<vmem>>, vector<1x8x128xf32>
    %496 = vector.shape_cast %495 : vector<1x8x128xf32> to vector<8x128xf32>
    %497 = vector.shape_cast %493 : vector<8x128xf32> to vector<1x8x128xf32>
    tpu.vector_store %arg15[%494, %c0_111, %c0_112], %497 {strides = array<i32>} : memref<8x8x128xf32, #tpu.memory_space<vmem>>, vector<1x8x128xf32>,
    %c8_i32 = arith.constant 8 : i32
    %c0_113 = arith.constant 0 : index
    %c0_114 = arith.constant 0 : index
    %c0_115 = arith.constant 0 : index
    %498 = vector.load %arg13[%c0_113, %c0_114, %c0_115] : memref<2x8x128xf32, #tpu.memory_space<vmem>>, vector<1x8x128xf32>
    %499 = vector.shape_cast %498 : vector<1x8x128xf32> to vector<8x128xf32>
    %500 = vector.shape_cast %469 : vector<8x128xf32> to vector<1x8x128xf32>
    tpu.vector_store %arg13[%c0_113, %c0_114, %c0_115], %500 {strides = array<i32>} : memref<2x8x128xf32, #tpu.memory_space<vmem>>, vector<1x8x128xf32>,
    %c1_116 = arith.constant 1 : index
    %c0_117 = arith.constant 0 : index
    %c0_118 = arith.constant 0 : index
    %501 = vector.load %arg13[%c1_116, %c0_117, %c0_118] : memref<2x8x128xf32, #tpu.memory_space<vmem>>, vector<1x8x128xf32>
    %502 = vector.shape_cast %501 : vector<1x8x128xf32> to vector<8x128xf32>
    %503 = vector.shape_cast %493 : vector<8x128xf32> to vector<1x8x128xf32>
    tpu.vector_store %arg13[%c1_116, %c0_117, %c0_118], %503 {strides = array<i32>} : memref<2x8x128xf32, #tpu.memory_space<vmem>>, vector<1x8x128xf32>,
    %c0_119 = arith.constant 0 : index
    %c0_120 = arith.constant 0 : index
    %504 = vector.load %arg10[%c0_119, %c0_120] : memref<1x128xf32, #tpu.memory_space<vmem>>, vector<1x128xf32>
    %c0_121 = arith.constant 0 : index
    %c0_122 = arith.constant 0 : index
    %c0_123 = arith.constant 0 : index
    %505 = vector.load %arg15[%c0_121, %c0_122, %c0_123] : memref<8x8x128xf32, #tpu.memory_space<vmem>>, vector<8x8x128xf32>
    %506 = vector.shape_cast %504 : vector<1x128xf32> to vector<1x1x128xf32>
    %507 = vector.broadcast %506 : vector<1x1x128xf32> to vector<8x8x128xf32>
    %508 = arith.mulf %505, %507 : vector<8x8x128xf32>
    %cst_124 = arith.constant dense<0.000000e+00> : vector<8x8xf32>
    %509 = vector.multi_reduction <add>, %508, %cst_124 [2] : vector<8x8x128xf32> to vector<8x8xf32>
    %c0_125 = arith.constant 0 : index
    %c0_126 = arith.constant 0 : index
    %510 = vector.load %arg11[%c0_125, %c0_126] : memref<1x1xf32, #tpu.memory_space<vmem>>, vector<1x1xf32>
    %511 = vector.broadcast %510 : vector<1x1xf32> to vector<8x8xf32>
    %512 = arith.addf %509, %511 : vector<8x8xf32>
    %513 = tpu.transpose %512, [1, 0] : vector<8x8xf32> -> vector<8x8xf32>
    %c0_127 = arith.constant 0 : index
    %c0_128 = arith.constant 0 : index
    %514 = vector.load %arg12[%c0_127, %c0_128] : memref<8x8xf32, #tpu.memory_space<vmem>>, vector<8x8xf32>
    tpu.vector_store %arg12[%c0_127, %c0_128], %513 {strides = array<i32>} : memref<8x8xf32, #tpu.memory_space<vmem>>, vector<8x8xf32>,
    return
  }
}

</mosaic_0001>

<llo_original>
// kernel: rnn_forward.1
$region0: #{rnn_forward.1}
  #allocation0 [shape = 'u32[]', space=smem, size = 0x4, offset = 0x4, fixed_abs, tag = 'smem constant byte address 0x4 - core index']
  #allocation1 [shape = 'u32[72,128]{1,0:T(1,128)}', space=vmem, size = 0x9000, scoped, tag = 'internal scratch']
  #allocation2 [shape = 'f32[8,8,384]{2,1,0:T(8,128)}', space=vmem, size = 0x18000, scoped, tag = 'scratch operand']
  #allocation3 [shape = 'f32[8,8,128]{2,1,0:T(8,128)}', space=vmem, size = 0x8000, scoped, tag = 'scratch operand']
  #allocation4 [shape = 'f32[1,1]{1,0:T(1,128)S(1)}', space=vmem, size = 0x200, scoped, tag = 'scoped memory for rnn_forward.1']
  %s0 = inlined_call_operand.vmem [shape: f32[8,8,4], index: 0, kind: input, shape index: {}]
  %s1 = inlined_call_operand.vmem [shape: f32[2,8,128], index: 1, kind: input, shape index: {}]
  %s2 = inlined_call_operand.vmem [shape: f32[4,384], index: 2, kind: input, shape index: {}]
  %s3 = inlined_call_operand.vmem [shape: bf16[128,384], index: 3, kind: input, shape index: {}]
  %s4 = inlined_call_operand.vmem [shape: f32[1,384], index: 4, kind: input, shape index: {}]
  %s5 = inlined_call_operand.vmem [shape: f32[1,128], index: 5, kind: input, shape index: {}]
  %s6 = inlined_call_operand.vmem [shape: bf16[128,384], index: 6, kind: input, shape index: {}]
  %s7 = inlined_call_operand.vmem [shape: bf16[128,384], index: 7, kind: input, shape index: {}]
  %s8 = inlined_call_operand.vmem [shape: f32[1,384], index: 8, kind: input, shape index: {}]
  %s9 = inlined_call_operand.vmem [shape: f32[1,128], index: 9, kind: input, shape index: {}]
  %s10 = inlined_call_operand.vmem [shape: f32[1,128], index: 10, kind: input, shape index: {}]
  %s11 = inlined_call_operand.<no memory space> [shape: f32[1,1], index: 11, kind: input, shape index: {}]
  %s12 = inlined_call_operand.vmem [shape: f32[8,8], index: 12, kind: output, shape index: {0}]
  %s13 = inlined_call_operand.vmem [shape: f32[2,8,128], index: 13, kind: output, shape index: {1}]
  %14 = xla_tuple %s12, %s13
  %s15 = sld [smem:[#allocation0]]
  $region66: #{rnn_forward.1} parent=0
    _
  %s17 = ssub.s32 1, %s15
  %s18 = scalar_select 0, %s17, %s15
  %v19 = vstv %s11
  %20 = vst [vmem:[#allocation4] sm:$0x1] %v19
  // Predicated region
  $region2: #{rnn_forward.1} parent=0 // pred_check
    _
  $region3: #{rnn_forward.1} parent=0 // pred_check_branch
    %22 = sbr.rel (0) target = $region5
  $region4: #{rnn_forward.1} parent=0 // pred_region
    _
  $region5: #{rnn_forward.1} parent=0 // pred_fallthru
    _
  // Predicated region
  $region6: #{rnn_forward.1} parent=0 // pred_check
    _
  $region7: #{rnn_forward.1} parent=0 // pred_check_branch
    %24 = sbr.rel (0) target = $region9
  $region8: #{rnn_forward.1} parent=0 // pred_region
    _
  $region9: #{rnn_forward.1} parent=0 // pred_fallthru
    _
  // Predicated region
  $region10: #{rnn_forward.1} parent=0 // pred_check
    _
  $region11: #{rnn_forward.1} parent=0 // pred_check_branch
    %26 = sbr.rel (0) target = $region13
  $region12: #{rnn_forward.1} parent=0 // pred_region
    _
  $region13: #{rnn_forward.1} parent=0 // pred_fallthru
    _
  // Predicated region
  $region14: #{rnn_forward.1} parent=0 // pred_check
    _
  $region15: #{rnn_forward.1} parent=0 // pred_check_branch
    %28 = sbr.rel (0) target = $region17
  $region16: #{rnn_forward.1} parent=0 // pred_region
    _
  $region17: #{rnn_forward.1} parent=0 // pred_fallthru
    _
  // Predicated region
  $region18: #{rnn_forward.1} parent=0 // pred_check
    _
  $region19: #{rnn_forward.1} parent=0 // pred_check_branch
    %30 = sbr.rel (0) target = $region21
  $region20: #{rnn_forward.1} parent=0 // pred_region
    _
  $region21: #{rnn_forward.1} parent=0 // pred_fallthru
    _
  // Predicated region
  $region22: #{rnn_forward.1} parent=0 // pred_check
    _
  $region23: #{rnn_forward.1} parent=0 // pred_check_branch
    %32 = sbr.rel (0) target = $region25
  $region24: #{rnn_forward.1} parent=0 // pred_region
    _
  $region25: #{rnn_forward.1} parent=0 // pred_fallthru
    _
  // Predicated region
  $region26: #{rnn_forward.1} parent=0 // pred_check
    _
  $region27: #{rnn_forward.1} parent=0 // pred_check_branch
    %34 = sbr.rel (0) target = $region29
  $region28: #{rnn_forward.1} parent=0 // pred_region
    _
  $region29: #{rnn_forward.1} parent=0 // pred_fallthru
    _
  // Predicated region
  $region30: #{rnn_forward.1} parent=0 // pred_check
    _
  $region31: #{rnn_forward.1} parent=0 // pred_check_branch
    %36 = sbr.rel (0) target = $region33
  $region32: #{rnn_forward.1} parent=0 // pred_region
    _
  $region33: #{rnn_forward.1} parent=0 // pred_fallthru
    _
  // Predicated region
  $region34: #{rnn_forward.1} parent=0 // pred_check
    _
  $region35: #{rnn_forward.1} parent=0 // pred_check_branch
    %38 = sbr.rel (0) target = $region37
  $region36: #{rnn_forward.1} parent=0 // pred_region
    _
  $region37: #{rnn_forward.1} parent=0 // pred_fallthru
    _
  // Predicated region
  $region38: #{rnn_forward.1} parent=0 // pred_check
    _
  $region39: #{rnn_forward.1} parent=0 // pred_check_branch
    %40 = sbr.rel (0) target = $region41
  $region40: #{rnn_forward.1} parent=0 // pred_region
    _
  $region41: #{rnn_forward.1} parent=0 // pred_fallthru
    _
  // Predicated region
  $region42: #{rnn_forward.1} parent=0 // pred_check
    _
  $region43: #{rnn_forward.1} parent=0 // pred_check_branch
    %42 = sbr.rel (0) target = $region45
  $region44: #{rnn_forward.1} parent=0 // pred_region
    _
  $region45: #{rnn_forward.1} parent=0 // pred_fallthru
    _
  // Predicated region
  $region46: #{rnn_forward.1} parent=0 // pred_check
    _
  $region47: #{rnn_forward.1} parent=0 // pred_check_branch
    %44 = sbr.rel (0) target = $region49
  $region48: #{rnn_forward.1} parent=0 // pred_region
    _
  $region49: #{rnn_forward.1} parent=0 // pred_fallthru
    _
  %v45 = vld [vmem:[%s0] sm:$0xff]
  %v46 = vld [vmem:[%s0 + $0x8] sm:$0xff]
  %v47 = vld [vmem:[%s0 + $0x10] sm:$0xff]
  %v48 = vld [vmem:[%s0 + $0x18] sm:$0xff]
  %v49 = vld [vmem:[%s0 + $0x20] sm:$0xff]
  %v50 = vld [vmem:[%s0 + $0x28] sm:$0xff]
  %v51 = vld [vmem:[%s0 + $0x30] sm:$0xff]
  %v52 = vld [vmem:[%s0 + $0x38] sm:$0xff]
  %v53 = vld [vmem:[%s2] sm:$0xff]
  %v54 = vld [vmem:[%s2 + $0x8] sm:$0xf]
  %56 = vset.pattern.permute.xlu0 0
  %57 = vperm.xlu0 %56, %v45
  %v58 = vpop.permute.xlu0 %57
  %61 = vset.pattern.permute.xlu0 0
  %62 = vperm.xlu0 %61, %v46
  %v63 = vpop.permute.xlu0 %62
  %66 = vset.pattern.permute.xlu0 0
  %67 = vperm.xlu0 %66, %v47
  %v68 = vpop.permute.xlu0 %67
  %71 = vset.pattern.permute.xlu0 0
  %72 = vperm.xlu0 %71, %v48
  %v73 = vpop.permute.xlu0 %72
  %76 = vset.pattern.permute.xlu0 0
  %77 = vperm.xlu0 %76, %v49
  %v78 = vpop.permute.xlu0 %77
  %81 = vset.pattern.permute.xlu0 0
  %82 = vperm.xlu0 %81, %v50
  %v83 = vpop.permute.xlu0 %82
  %86 = vset.pattern.permute.xlu0 0
  %87 = vperm.xlu0 %86, %v51
  %v88 = vpop.permute.xlu0 %87
  %91 = vset.pattern.permute.xlu0 0
  %92 = vperm.xlu0 %91, %v52
  %v93 = vpop.permute.xlu0 %92
  %v97 = vperm.slane %v53, 0
  %v98 = vperm.slane %v53, 4
  %v99 = vperm.slane %v54, 0
  %v103 = vperm.slane %v97, 0
  %v104 = vperm.slane %v98, 0
  %v105 = vperm.slane %v99, 0
  %v106 = vmul.f32 %v58, %v103
  %v107 = vmul.f32 %v58, %v104
  %v108 = vmul.f32 %v58, %v105
  %v109 = vmul.f32 %v63, %v103
  %v110 = vmul.f32 %v63, %v104
  %v111 = vmul.f32 %v63, %v105
  %v112 = vmul.f32 %v68, %v103
  %v113 = vmul.f32 %v68, %v104
  %v114 = vmul.f32 %v68, %v105
  %v115 = vmul.f32 %v73, %v103
  %v116 = vmul.f32 %v73, %v104
  %v117 = vmul.f32 %v73, %v105
  %v118 = vmul.f32 %v78, %v103
  %v119 = vmul.f32 %v78, %v104
  %v120 = vmul.f32 %v78, %v105
  %v121 = vmul.f32 %v83, %v103
  %v122 = vmul.f32 %v83, %v104
  %v123 = vmul.f32 %v83, %v105
  %v124 = vmul.f32 %v88, %v103
  %v125 = vmul.f32 %v88, %v104
  %v126 = vmul.f32 %v88, %v105
  %v127 = vmul.f32 %v93, %v103
  %v128 = vmul.f32 %v93, %v104
  %v129 = vmul.f32 %v93, %v105
  %130 = vset.pattern.permute.xlu0 1
  %131 = vperm.xlu0 %130, %v45
  %v132 = vpop.permute.xlu0 %131
  %134 = vset.pattern.permute.xlu0 1
  %135 = vperm.xlu0 %134, %v46
  %v136 = vpop.permute.xlu0 %135
  %138 = vset.pattern.permute.xlu0 1
  %139 = vperm.xlu0 %138, %v47
  %v140 = vpop.permute.xlu0 %139
  %142 = vset.pattern.permute.xlu0 1
  %143 = vperm.xlu0 %142, %v48
  %v144 = vpop.permute.xlu0 %143
  %146 = vset.pattern.permute.xlu0 1
  %147 = vperm.xlu0 %146, %v49
  %v148 = vpop.permute.xlu0 %147
  %150 = vset.pattern.permute.xlu0 1
  %151 = vperm.xlu0 %150, %v50
  %v152 = vpop.permute.xlu0 %151
  %154 = vset.pattern.permute.xlu0 1
  %155 = vperm.xlu0 %154, %v51
  %v156 = vpop.permute.xlu0 %155
  %158 = vset.pattern.permute.xlu0 1
  %159 = vperm.xlu0 %158, %v52
  %v160 = vpop.permute.xlu0 %159
  %v162 = vperm.slane %v53, 1
  %v163 = vperm.slane %v53, 5
  %v164 = vperm.slane %v54, 1
  %v168 = vperm.slane %v162, 1
  %v169 = vperm.slane %v163, 1
  %v170 = vperm.slane %v164, 1
  %v171 = vmul.f32 %v132, %v168
  %v172 = vmul.f32 %v132, %v169
  %v173 = vmul.f32 %v132, %v170
  %v174 = vmul.f32 %v136, %v168
  %v175 = vmul.f32 %v136, %v169
  %v176 = vmul.f32 %v136, %v170
  %v177 = vmul.f32 %v140, %v168
  %v178 = vmul.f32 %v140, %v169
  %v179 = vmul.f32 %v140, %v170
  %v180 = vmul.f32 %v144, %v168
  %v181 = vmul.f32 %v144, %v169
  %v182 = vmul.f32 %v144, %v170
  %v183 = vmul.f32 %v148, %v168
  %v184 = vmul.f32 %v148, %v169
  %v185 = vmul.f32 %v148, %v170
  %v186 = vmul.f32 %v152, %v168
  %v187 = vmul.f32 %v152, %v169
  %v188 = vmul.f32 %v152, %v170
  %v189 = vmul.f32 %v156, %v168
  %v190 = vmul.f32 %v156, %v169
  %v191 = vmul.f32 %v156, %v170
  %v192 = vmul.f32 %v160, %v168
  %v193 = vmul.f32 %v160, %v169
  %v194 = vmul.f32 %v160, %v170
  %v195 = vadd.f32 %v106, %v171
  %v196 = vadd.f32 %v107, %v172
  %v197 = vadd.f32 %v108, %v173
  %v198 = vadd.f32 %v109, %v174
  %v199 = vadd.f32 %v110, %v175
  %v200 = vadd.f32 %v111, %v176
  %v201 = vadd.f32 %v112, %v177
  %v202 = vadd.f32 %v113, %v178
  %v203 = vadd.f32 %v114, %v179
  %v204 = vadd.f32 %v115, %v180
  %v205 = vadd.f32 %v116, %v181
  %v206 = vadd.f32 %v117, %v182
  %v207 = vadd.f32 %v118, %v183
  %v208 = vadd.f32 %v119, %v184
  %v209 = vadd.f32 %v120, %v185
  %v210 = vadd.f32 %v121, %v186
  %v211 = vadd.f32 %v122, %v187
  %v212 = vadd.f32 %v123, %v188
  %v213 = vadd.f32 %v124, %v189
  %v214 = vadd.f32 %v125, %v190
  %v215 = vadd.f32 %v126, %v191
  %v216 = vadd.f32 %v127, %v192
  %v217 = vadd.f32 %v128, %v193
  %v218 = vadd.f32 %v129, %v194
  %219 = vset.pattern.permute.xlu0 2
  %220 = vperm.xlu0 %219, %v45
  %v221 = vpop.permute.xlu0 %220
  %223 = vset.pattern.permute.xlu0 2
  %224 = vperm.xlu0 %223, %v46
  %v225 = vpop.permute.xlu0 %224
  %227 = vset.pattern.permute.xlu0 2
  %228 = vperm.xlu0 %227, %v47
  %v229 = vpop.permute.xlu0 %228
  %231 = vset.pattern.permute.xlu0 2
  %232 = vperm.xlu0 %231, %v48
  %v233 = vpop.permute.xlu0 %232
  %235 = vset.pattern.permute.xlu0 2
  %236 = vperm.xlu0 %235, %v49
  %v237 = vpop.permute.xlu0 %236
  %239 = vset.pattern.permute.xlu0 2
  %240 = vperm.xlu0 %239, %v50
  %v241 = vpop.permute.xlu0 %240
  %243 = vset.pattern.permute.xlu0 2
  %244 = vperm.xlu0 %243, %v51
  %v245 = vpop.permute.xlu0 %244
  %247 = vset.pattern.permute.xlu0 2
  %248 = vperm.xlu0 %247, %v52
  %v249 = vpop.permute.xlu0 %248
  %v251 = vperm.slane %v53, 2
  %v252 = vperm.slane %v53, 6
  %v253 = vperm.slane %v54, 2
  %v257 = vperm.slane %v251, 2
  %v258 = vperm.slane %v252, 2
  %v259 = vperm.slane %v253, 2
  %v260 = vmul.f32 %v221, %v257
  %v261 = vmul.f32 %v221, %v258
  %v262 = vmul.f32 %v221, %v259
  %v263 = vmul.f32 %v225, %v257
  %v264 = vmul.f32 %v225, %v258
  %v265 = vmul.f32 %v225, %v259
  %v266 = vmul.f32 %v229, %v257
  %v267 = vmul.f32 %v229, %v258
  %v268 = vmul.f32 %v229, %v259
  %v269 = vmul.f32 %v233, %v257
  %v270 = vmul.f32 %v233, %v258
  %v271 = vmul.f32 %v233, %v259
  %v272 = vmul.f32 %v237, %v257
  %v273 = vmul.f32 %v237, %v258
  %v274 = vmul.f32 %v237, %v259
  %v275 = vmul.f32 %v241, %v257
  %v276 = vmul.f32 %v241, %v258
  %v277 = vmul.f32 %v241, %v259
  %v278 = vmul.f32 %v245, %v257
  %v279 = vmul.f32 %v245, %v258
  %v280 = vmul.f32 %v245, %v259
  %v281 = vmul.f32 %v249, %v257
  %v282 = vmul.f32 %v249, %v258
  %v283 = vmul.f32 %v249, %v259
  %v284 = vadd.f32 %v195, %v260
  %v285 = vadd.f32 %v196, %v261
  %v286 = vadd.f32 %v197, %v262
  %v287 = vadd.f32 %v198, %v263
  %v288 = vadd.f32 %v199, %v264
  %v289 = vadd.f32 %v200, %v265
  %v290 = vadd.f32 %v201, %v266
  %v291 = vadd.f32 %v202, %v267
  %v292 = vadd.f32 %v203, %v268
  %v293 = vadd.f32 %v204, %v269
  %v294 = vadd.f32 %v205, %v270
  %v295 = vadd.f32 %v206, %v271
  %v296 = vadd.f32 %v207, %v272
  %v297 = vadd.f32 %v208, %v273
  %v298 = vadd.f32 %v209, %v274
  %v299 = vadd.f32 %v210, %v275
  %v300 = vadd.f32 %v211, %v276
  %v301 = vadd.f32 %v212, %v277
  %v302 = vadd.f32 %v213, %v278
  %v303 = vadd.f32 %v214, %v279
  %v304 = vadd.f32 %v215, %v280
  %v305 = vadd.f32 %v216, %v281
  %v306 = vadd.f32 %v217, %v282
  %v307 = vadd.f32 %v218, %v283
  %308 = vset.pattern.permute.xlu0 3
  %309 = vperm.xlu0 %308, %v45
  %v310 = vpop.permute.xlu0 %309
  %312 = vset.pattern.permute.xlu0 3
  %313 = vperm.xlu0 %312, %v46
  %v314 = vpop.permute.xlu0 %313
  %316 = vset.pattern.permute.xlu0 3
  %317 = vperm.xlu0 %316, %v47
  %v318 = vpop.permute.xlu0 %317
  %320 = vset.pattern.permute.xlu0 3
  %321 = vperm.xlu0 %320, %v48
  %v322 = vpop.permute.xlu0 %321
  %324 = vset.pattern.permute.xlu0 3
  %325 = vperm.xlu0 %324, %v49
  %v326 = vpop.permute.xlu0 %325
  %328 = vset.pattern.permute.xlu0 3
  %329 = vperm.xlu0 %328, %v50
  %v330 = vpop.permute.xlu0 %329
  %332 = vset.pattern.permute.xlu0 3
  %333 = vperm.xlu0 %332, %v51
  %v334 = vpop.permute.xlu0 %333
  %336 = vset.pattern.permute.xlu0 3
  %337 = vperm.xlu0 %336, %v52
  %v338 = vpop.permute.xlu0 %337
  %v340 = vperm.slane %v53, 3
  %v341 = vperm.slane %v53, 7
  %v342 = vperm.slane %v54, 3
  %v346 = vperm.slane %v340, 3
  %v347 = vperm.slane %v341, 3
  %v348 = vperm.slane %v342, 3
  %v349 = vmul.f32 %v310, %v346
  %v350 = vmul.f32 %v310, %v347
  %v351 = vmul.f32 %v310, %v348
  %v352 = vmul.f32 %v314, %v346
  %v353 = vmul.f32 %v314, %v347
  %v354 = vmul.f32 %v314, %v348
  %v355 = vmul.f32 %v318, %v346
  %v356 = vmul.f32 %v318, %v347
  %v357 = vmul.f32 %v318, %v348
  %v358 = vmul.f32 %v322, %v346
  %v359 = vmul.f32 %v322, %v347
  %v360 = vmul.f32 %v322, %v348
  %v361 = vmul.f32 %v326, %v346
  %v362 = vmul.f32 %v326, %v347
  %v363 = vmul.f32 %v326, %v348
  %v364 = vmul.f32 %v330, %v346
  %v365 = vmul.f32 %v330, %v347
  %v366 = vmul.f32 %v330, %v348
  %v367 = vmul.f32 %v334, %v346
  %v368 = vmul.f32 %v334, %v347
  %v369 = vmul.f32 %v334, %v348
  %v370 = vmul.f32 %v338, %v346
  %v371 = vmul.f32 %v338, %v347
  %v372 = vmul.f32 %v338, %v348
  %v373 = vadd.f32 %v284, %v349
  %v374 = vadd.f32 %v285, %v350
  %v375 = vadd.f32 %v286, %v351
  %v376 = vadd.f32 %v287, %v352
  %v377 = vadd.f32 %v288, %v353
  %v378 = vadd.f32 %v289, %v354
  %v379 = vadd.f32 %v290, %v355
  %v380 = vadd.f32 %v291, %v356
  %v381 = vadd.f32 %v292, %v357
  %v382 = vadd.f32 %v293, %v358
  %v383 = vadd.f32 %v294, %v359
  %v384 = vadd.f32 %v295, %v360
  %v385 = vadd.f32 %v296, %v361
  %v386 = vadd.f32 %v297, %v362
  %v387 = vadd.f32 %v298, %v363
  %v388 = vadd.f32 %v299, %v364
  %v389 = vadd.f32 %v300, %v365
  %v390 = vadd.f32 %v301, %v366
  %v391 = vadd.f32 %v302, %v367
  %v392 = vadd.f32 %v303, %v368
  %v393 = vadd.f32 %v304, %v369
  %v394 = vadd.f32 %v305, %v370
  %v395 = vadd.f32 %v306, %v371
  %v396 = vadd.f32 %v307, %v372
  %v397 = vld [vmem:[%s4] sm:$0x7]
  %v399 = vperm.slane %v397, 0
  %v400 = vperm.slane %v397, 1
  %v401 = vperm.slane %v397, 2
  %v405 = vadd.f32 %v373, %v399
  %v406 = vadd.f32 %v374, %v400
  %v407 = vadd.f32 %v375, %v401
  %v408 = vadd.f32 %v376, %v399
  %v409 = vadd.f32 %v377, %v400
  %v410 = vadd.f32 %v378, %v401
  %v411 = vadd.f32 %v379, %v399
  %v412 = vadd.f32 %v380, %v400
  %v413 = vadd.f32 %v381, %v401
  %v414 = vadd.f32 %v382, %v399
  %v415 = vadd.f32 %v383, %v400
  %v416 = vadd.f32 %v384, %v401
  %v417 = vadd.f32 %v385, %v399
  %v418 = vadd.f32 %v386, %v400
  %v419 = vadd.f32 %v387, %v401
  %v420 = vadd.f32 %v388, %v399
  %v421 = vadd.f32 %v389, %v400
  %v422 = vadd.f32 %v390, %v401
  %v423 = vadd.f32 %v391, %v399
  %v424 = vadd.f32 %v392, %v400
  %v425 = vadd.f32 %v393, %v401
  %v426 = vadd.f32 %v394, %v399
  %v427 = vadd.f32 %v395, %v400
  %v428 = vadd.f32 %v396, %v401
  %429 = vst [vmem:[#allocation2] sm:$0xff] %v405
  %430 = vst [vmem:[#allocation2 + $0x8] sm:$0xff] %v406
  %431 = vst [vmem:[#allocation2 + $0x10] sm:$0xff] %v407
  %432 = vst [vmem:[#allocation2 + $0x18] sm:$0xff] %v408
  %433 = vst [vmem:[#allocation2 + $0x20] sm:$0xff] %v409
  %434 = vst [vmem:[#allocation2 + $0x28] sm:$0xff] %v410
  %435 = vst [vmem:[#allocation2 + $0x30] sm:$0xff] %v411
  %436 = vst [vmem:[#allocation2 + $0x38] sm:$0xff] %v412
  %437 = vst [vmem:[#allocation2 + $0x40] sm:$0xff] %v413
  %438 = vst [vmem:[#allocation2 + $0x48] sm:$0xff] %v414
  %439 = vst [vmem:[#allocation2 + $0x50] sm:$0xff] %v415
  %440 = vst [vmem:[#allocation2 + $0x58] sm:$0xff] %v416
  %441 = vst [vmem:[#allocation2 + $0x60] sm:$0xff] %v417
  %442 = vst [vmem:[#allocation2 + $0x68] sm:$0xff] %v418
  %443 = vst [vmem:[#allocation2 + $0x70] sm:$0xff] %v419
  %444 = vst [vmem:[#allocation2 + $0x78] sm:$0xff] %v420
  %445 = vst [vmem:[#allocation2 + $0x80] sm:$0xff] %v421
  %446 = vst [vmem:[#allocation2 + $0x88] sm:$0xff] %v422
  %447 = vst [vmem:[#allocation2 + $0x90] sm:$0xff] %v423
  %448 = vst [vmem:[#allocation2 + $0x98] sm:$0xff] %v424
  %449 = vst [vmem:[#allocation2 + $0xa0] sm:$0xff] %v425
  %450 = vst [vmem:[#allocation2 + $0xa8] sm:$0xff] %v426
  %451 = vst [vmem:[#allocation2 + $0xb0] sm:$0xff] %v427
  %452 = vst [vmem:[#allocation2 + $0xb8] sm:$0xff] %v428
  %v453 = vld [vmem:[%s3] sm:$0xff]
  %v454 = vld [vmem:[%s3 + $0x8] sm:$0xf]
  %v455 = vld [vmem:[%s3 + $0xc] sm:$0xff]
  %v456 = vld [vmem:[%s3 + $0x14] sm:$0xf]
  %v457 = vld [vmem:[%s3 + $0x18] sm:$0xff]
  %v458 = vld [vmem:[%s3 + $0x20] sm:$0xf]
  %v459 = vld [vmem:[%s3 + $0x24] sm:$0xff]
  %v460 = vld [vmem:[%s3 + $0x2c] sm:$0xf]
  %v461 = vld [vmem:[%s3 + $0x30] sm:$0xff]
  %v462 = vld [vmem:[%s3 + $0x38] sm:$0xf]
  %v463 = vld [vmem:[%s3 + $0x3c] sm:$0xff]
  %v464 = vld [vmem:[%s3 + $0x44] sm:$0xf]
  %v465 = vld [vmem:[%s3 + $0x48] sm:$0xff]
  %v466 = vld [vmem:[%s3 + $0x50] sm:$0xf]
  %v467 = vld [vmem:[%s3 + $0x54] sm:$0xff]
  %v468 = vld [vmem:[%s3 + $0x5c] sm:$0xf]
  %v469 = vld [vmem:[%s3 + $0x60] sm:$0xff]
  %v470 = vld [vmem:[%s3 + $0x68] sm:$0xf]
  %v471 = vld [vmem:[%s3 + $0x6c] sm:$0xff]
  %v472 = vld [vmem:[%s3 + $0x74] sm:$0xf]
  %v473 = vld [vmem:[%s3 + $0x78] sm:$0xff]
  %v474 = vld [vmem:[%s3 + $0x80] sm:$0xf]
  %v475 = vld [vmem:[%s3 + $0x84] sm:$0xff]
  %v476 = vld [vmem:[%s3 + $0x8c] sm:$0xf]
  %v477 = vld [vmem:[%s3 + $0x90] sm:$0xff]
  %v478 = vld [vmem:[%s3 + $0x98] sm:$0xf]
  %v479 = vld [vmem:[%s3 + $0x9c] sm:$0xff]
  %v480 = vld [vmem:[%s3 + $0xa4] sm:$0xf]
  %v481 = vld [vmem:[%s3 + $0xa8] sm:$0xff]
  %v482 = vld [vmem:[%s3 + $0xb0] sm:$0xf]
  %v483 = vld [vmem:[%s3 + $0xb4] sm:$0xff]
  %v484 = vld [vmem:[%s3 + $0xbc] sm:$0xf]
  %v485 = vld [vmem:[%s6] sm:$0xff]
  %v486 = vld [vmem:[%s6 + $0x8] sm:$0xf]
  %v487 = vld [vmem:[%s6 + $0xc] sm:$0xff]
  %v488 = vld [vmem:[%s6 + $0x14] sm:$0xf]
  %v489 = vld [vmem:[%s6 + $0x18] sm:$0xff]
  %v490 = vld [vmem:[%s6 + $0x20] sm:$0xf]
  %v491 = vld [vmem:[%s6 + $0x24] sm:$0xff]
  %v492 = vld [vmem:[%s6 + $0x2c] sm:$0xf]
  %v493 = vld [vmem:[%s6 + $0x30] sm:$0xff]
  %v494 = vld [vmem:[%s6 + $0x38] sm:$0xf]
  %v495 = vld [vmem:[%s6 + $0x3c] sm:$0xff]
  %v496 = vld [vmem:[%s6 + $0x44] sm:$0xf]
  %v497 = vld [vmem:[%s6 + $0x48] sm:$0xff]
  %v498 = vld [vmem:[%s6 + $0x50] sm:$0xf]
  %v499 = vld [vmem:[%s6 + $0x54] sm:$0xff]
  %v500 = vld [vmem:[%s6 + $0x5c] sm:$0xf]
  %v501 = vld [vmem:[%s6 + $0x60] sm:$0xff]
  %v502 = vld [vmem:[%s6 + $0x68] sm:$0xf]
  %v503 = vld [vmem:[%s6 + $0x6c] sm:$0xff]
  %v504 = vld [vmem:[%s6 + $0x74] sm:$0xf]
  %v505 = vld [vmem:[%s6 + $0x78] sm:$0xff]
  %v506 = vld [vmem:[%s6 + $0x80] sm:$0xf]
  %v507 = vld [vmem:[%s6 + $0x84] sm:$0xff]
  %v508 = vld [vmem:[%s6 + $0x8c] sm:$0xf]
  %v509 = vld [vmem:[%s6 + $0x90] sm:$0xff]
  %v510 = vld [vmem:[%s6 + $0x98] sm:$0xf]
  %v511 = vld [vmem:[%s6 + $0x9c] sm:$0xff]
  %v512 = vld [vmem:[%s6 + $0xa4] sm:$0xf]
  %v513 = vld [vmem:[%s6 + $0xa8] sm:$0xff]
  %v514 = vld [vmem:[%s6 + $0xb0] sm:$0xf]
  %v515 = vld [vmem:[%s6 + $0xb4] sm:$0xff]
  %v516 = vld [vmem:[%s6 + $0xbc] sm:$0xf]
  %v517 = vld [vmem:[%s7] sm:$0xff]
  %v518 = vld [vmem:[%s7 + $0x8] sm:$0xf]
  %v519 = vld [vmem:[%s7 + $0xc] sm:$0xff]
  %v520 = vld [vmem:[%s7 + $0x14] sm:$0xf]
  %v521 = vld [vmem:[%s7 + $0x18] sm:$0xff]
  %v522 = vld [vmem:[%s7 + $0x20] sm:$0xf]
  %v523 = vld [vmem:[%s7 + $0x24] sm:$0xff]
  %v524 = vld [vmem:[%s7 + $0x2c] sm:$0xf]
  %v525 = vld [vmem:[%s7 + $0x30] sm:$0xff]
  %v526 = vld [vmem:[%s7 + $0x38] sm:$0xf]
  %v527 = vld [vmem:[%s7 + $0x3c] sm:$0xff]
  %v528 = vld [vmem:[%s7 + $0x44] sm:$0xf]
  %v529 = vld [vmem:[%s7 + $0x48] sm:$0xff]
  %v530 = vld [vmem:[%s7 + $0x50] sm:$0xf]
  %v531 = vld [vmem:[%s7 + $0x54] sm:$0xff]
  %v532 = vld [vmem:[%s7 + $0x5c] sm:$0xf]
  %v533 = vld [vmem:[%s7 + $0x60] sm:$0xff]
  %v534 = vld [vmem:[%s7 + $0x68] sm:$0xf]
  %v535 = vld [vmem:[%s7 + $0x6c] sm:$0xff]
  %v536 = vld [vmem:[%s7 + $0x74] sm:$0xf]
  %v537 = vld [vmem:[%s7 + $0x78] sm:$0xff]
  %v538 = vld [vmem:[%s7 + $0x80] sm:$0xf]
  %v539 = vld [vmem:[%s7 + $0x84] sm:$0xff]
  %v540 = vld [vmem:[%s7 + $0x8c] sm:$0xf]
  %v541 = vld [vmem:[%s7 + $0x90] sm:$0xff]
  %v542 = vld [vmem:[%s7 + $0x98] sm:$0xf]
  %v543 = vld [vmem:[%s7 + $0x9c] sm:$0xff]
  %v544 = vld [vmem:[%s7 + $0xa4] sm:$0xf]
  %v545 = vld [vmem:[%s7 + $0xa8] sm:$0xff]
  %v546 = vld [vmem:[%s7 + $0xb0] sm:$0xf]
  %v547 = vld [vmem:[%s7 + $0xb4] sm:$0xff]
  %v548 = vld [vmem:[%s7 + $0xbc] sm:$0xf]
  %v549 = vld [vmem:[%s5] sm:$0x1]
  %v551 = vperm.slane %v549, 0
  %v553 = vld [vmem:[%s8] sm:$0x7]
  %v555 = vperm.slane %v553, 0
  %v556 = vperm.slane %v553, 1
  %v557 = vperm.slane %v553, 2
  %v561 = vld [vmem:[%s9] sm:$0x1]
  %v563 = vperm.slane %v561, 0
  %v565 = vld [vmem:[%s1] sm:$0xff]
  %s566 = scalar_lea.vmem %s1, 8
  %v567 = vld [vmem:[%s566] sm:$0xff]
  %v568 = vpack.c.bf16 %v565, %v565
  %v601 = vunpack.c.l.b16 %v453
  %v602 = vunpack.c.h.b16 %v453
  %v603 = vunpack.c.l.b16 %v454
  %v604 = vunpack.c.l.b16 %v455
  %v605 = vunpack.c.h.b16 %v455
  %v606 = vunpack.c.l.b16 %v456
  %v607 = vunpack.c.l.b16 %v457
  %v608 = vunpack.c.h.b16 %v457
  %v609 = vunpack.c.l.b16 %v458
  %v610 = vunpack.c.l.b16 %v459
  %v611 = vunpack.c.h.b16 %v459
  %v612 = vunpack.c.l.b16 %v460
  %v613 = vunpack.c.l.b16 %v461
  %v614 = vunpack.c.h.b16 %v461
  %v615 = vunpack.c.l.b16 %v462
  %v616 = vunpack.c.l.b16 %v463
  %v617 = vunpack.c.h.b16 %v463
  %v618 = vunpack.c.l.b16 %v464
  %v619 = vunpack.c.l.b16 %v465
  %v620 = vunpack.c.h.b16 %v465
  %v621 = vunpack.c.l.b16 %v466
  %v622 = vunpack.c.l.b16 %v467
  %v623 = vunpack.c.h.b16 %v467
  %v624 = vunpack.c.l.b16 %v468
  %v625 = vunpack.c.l.b16 %v469
  %v626 = vunpack.c.h.b16 %v469
  %v627 = vunpack.c.l.b16 %v470
  %v628 = vunpack.c.l.b16 %v471
  %v629 = vunpack.c.h.b16 %v471
  %v630 = vunpack.c.l.b16 %v472
  %v631 = vunpack.c.l.b16 %v473
  %v632 = vunpack.c.h.b16 %v473
  %v633 = vunpack.c.l.b16 %v474
  %v634 = vunpack.c.l.b16 %v475
  %v635 = vunpack.c.h.b16 %v475
  %v636 = vunpack.c.l.b16 %v476
  %v637 = vunpack.c.l.b16 %v477
  %v638 = vunpack.c.h.b16 %v477
  %v639 = vunpack.c.l.b16 %v478
  %v640 = vunpack.c.l.b16 %v479
  %v641 = vunpack.c.h.b16 %v479
  %v642 = vunpack.c.l.b16 %v480
  %v643 = vunpack.c.l.b16 %v481
  %v644 = vunpack.c.h.b16 %v481
  %v645 = vunpack.c.l.b16 %v482
  %v646 = vunpack.c.l.b16 %v483
  %v647 = vunpack.c.h.b16 %v483
  %v648 = vunpack.c.l.b16 %v484
  %v649 = vpack.c.b16 %v604, %v601
  %v650 = vpack.c.b16 %v605, %v602
  %v651 = vpack.c.b16 %v606, %v603
  %v652 = vpack.c.b16 %v610, %v607
  %v653 = vpack.c.b16 %v611, %v608
  %v654 = vpack.c.b16 %v612, %v609
  %v655 = vpack.c.b16 %v616, %v613
  %v656 = vpack.c.b16 %v617, %v614
  %v657 = vpack.c.b16 %v618, %v615
  %v658 = vpack.c.b16 %v622, %v619
  %v659 = vpack.c.b16 %v623, %v620
  %v660 = vpack.c.b16 %v624, %v621
  %v661 = vpack.c.b16 %v628, %v625
  %v662 = vpack.c.b16 %v629, %v626
  %v663 = vpack.c.b16 %v630, %v627
  %v664 = vpack.c.b16 %v634, %v631
  %v665 = vpack.c.b16 %v635, %v632
  %v666 = vpack.c.b16 %v636, %v633
  %v667 = vpack.c.b16 %v640, %v637
  %v668 = vpack.c.b16 %v641, %v638
  %v669 = vpack.c.b16 %v642, %v639
  %v670 = vpack.c.b16 %v646, %v643
  %v671 = vpack.c.b16 %v647, %v644
  %v672 = vpack.c.b16 %v648, %v645
  %697 = vmatpush.bf16.msra.mxu0 %v670
  %698 = vmatpush.bf16.msra.mxu0 %v667
  %699 = vmatpush.bf16.msra.mxu0 %v664
  %700 = vmatpush.bf16.msra.mxu0 %v661
  %701 = vmatpush.bf16.msra.mxu0 %v658
  %702 = vmatpush.bf16.msra.mxu0 %v655
  %703 = vmatpush.bf16.msra.mxu0 %v652
  %704 = vmatpush.bf16.msra.mxu0 %v649
  %705 = vmatmul.bf16.gmra.mxu0 %v568
  %v706 = vpop.f32.mrf.mxu0
  %v707 = vadd.f32 0.0, %v706
  %v708 = vpop.f32.mrf.mxu0
  %709 = vdwg.mxu0
  %710 = vmatpush.bf16.msra.mxu0 %v671
  %711 = vmatpush.bf16.msra.mxu0 %v668
  %712 = vmatpush.bf16.msra.mxu0 %v665
  %713 = vmatpush.bf16.msra.mxu0 %v662
  %714 = vmatpush.bf16.msra.mxu0 %v659
  %715 = vmatpush.bf16.msra.mxu0 %v656
  %716 = vmatpush.bf16.msra.mxu0 %v653
  %717 = vmatpush.bf16.msra.mxu0 %v650
  %718 = vmatmul.bf16.gmra.mxu0 %v568
  %v719 = vpop.f32.mrf.mxu0
  %v720 = vadd.f32 0.0, %v719
  %v721 = vpop.f32.mrf.mxu0
  %722 = vdwg.mxu0
  %723 = vmatpush.bf16.msra.mxu0 %v672
  %724 = vmatpush.bf16.msra.mxu0 %v669
  %725 = vmatpush.bf16.msra.mxu0 %v666
  %726 = vmatpush.bf16.msra.mxu0 %v663
  %727 = vmatpush.bf16.msra.mxu0 %v660
  %728 = vmatpush.bf16.msra.mxu0 %v657
  %729 = vmatpush.bf16.msra.mxu0 %v654
  %730 = vmatpush.bf16.msra.mxu0 %v651
  %731 = vmatmul.bf16.gmra.mxu0 %v568
  %v732 = vpop.f32.mrf.mxu0
  %v733 = vadd.f32 0.0, %v732
  %v734 = vpop.f32.mrf.mxu0
  %735 = vdwg.mxu0
  %v736 = vpack.c.bf16 %v567, %v567
  %v769 = vunpack.c.l.b16 %v517
  %v770 = vunpack.c.h.b16 %v517
  %v771 = vunpack.c.l.b16 %v518
  %v772 = vunpack.c.l.b16 %v519
  %v773 = vunpack.c.h.b16 %v519
  %v774 = vunpack.c.l.b16 %v520
  %v775 = vunpack.c.l.b16 %v521
  %v776 = vunpack.c.h.b16 %v521
  %v777 = vunpack.c.l.b16 %v522
  %v778 = vunpack.c.l.b16 %v523
  %v779 = vunpack.c.h.b16 %v523
  %v780 = vunpack.c.l.b16 %v524
  %v781 = vunpack.c.l.b16 %v525
  %v782 = vunpack.c.h.b16 %v525
  %v783 = vunpack.c.l.b16 %v526
  %v784 = vunpack.c.l.b16 %v527
  %v785 = vunpack.c.h.b16 %v527
  %v786 = vunpack.c.l.b16 %v528
  %v787 = vunpack.c.l.b16 %v529
  %v788 = vunpack.c.h.b16 %v529
  %v789 = vunpack.c.l.b16 %v530
  %v790 = vunpack.c.l.b16 %v531
  %v791 = vunpack.c.h.b16 %v531
  %v792 = vunpack.c.l.b16 %v532
  %v793 = vunpack.c.l.b16 %v533
  %v794 = vunpack.c.h.b16 %v533
  %v795 = vunpack.c.l.b16 %v534
  %v796 = vunpack.c.l.b16 %v535
  %v797 = vunpack.c.h.b16 %v535
  %v798 = vunpack.c.l.b16 %v536
  %v799 = vunpack.c.l.b16 %v537
  %v800 = vunpack.c.h.b16 %v537
  %v801 = vunpack.c.l.b16 %v538
  %v802 = vunpack.c.l.b16 %v539
  %v803 = vunpack.c.h.b16 %v539
  %v804 = vunpack.c.l.b16 %v540
  %v805 = vunpack.c.l.b16 %v541
  %v806 = vunpack.c.h.b16 %v541
  %v807 = vunpack.c.l.b16 %v542
  %v808 = vunpack.c.l.b16 %v543
  %v809 = vunpack.c.h.b16 %v543
  %v810 = vunpack.c.l.b16 %v544
  %v811 = vunpack.c.l.b16 %v545
  %v812 = vunpack.c.h.b16 %v545
  %v813 = vunpack.c.l.b16 %v546
  %v814 = vunpack.c.l.b16 %v547
  %v815 = vunpack.c.h.b16 %v547
  %v816 = vunpack.c.l.b16 %v548
  %v817 = vpack.c.b16 %v772, %v769
  %v818 = vpack.c.b16 %v773, %v770
  %v819 = vpack.c.b16 %v774, %v771
  %v820 = vpack.c.b16 %v778, %v775
  %v821 = vpack.c.b16 %v779, %v776
  %v822 = vpack.c.b16 %v780, %v777
  %v823 = vpack.c.b16 %v784, %v781
  %v824 = vpack.c.b16 %v785, %v782
  %v825 = vpack.c.b16 %v786, %v783
  %v826 = vpack.c.b16 %v790, %v787
  %v827 = vpack.c.b16 %v791, %v788
  %v828 = vpack.c.b16 %v792, %v789
  %v829 = vpack.c.b16 %v796, %v793
  %v830 = vpack.c.b16 %v797, %v794
  %v831 = vpack.c.b16 %v798, %v795
  %v832 = vpack.c.b16 %v802, %v799
  %v833 = vpack.c.b16 %v803, %v800
  %v834 = vpack.c.b16 %v804, %v801
  %v835 = vpack.c.b16 %v808, %v805
  %v836 = vpack.c.b16 %v809, %v806
  %v837 = vpack.c.b16 %v810, %v807
  %v838 = vpack.c.b16 %v814, %v811
  %v839 = vpack.c.b16 %v815, %v812
  %v840 = vpack.c.b16 %v816, %v813
  %865 = vmatpush.bf16.msra.mxu0 %v838
  %866 = vmatpush.bf16.msra.mxu0 %v835
  %867 = vmatpush.bf16.msra.mxu0 %v832
  %868 = vmatpush.bf16.msra.mxu0 %v829
  %869 = vmatpush.bf16.msra.mxu0 %v826
  %870 = vmatpush.bf16.msra.mxu0 %v823
  %871 = vmatpush.bf16.msra.mxu0 %v820
  %872 = vmatpush.bf16.msra.mxu0 %v817
  %873 = vmatmul.bf16.gmra.mxu0 %v736
  %v874 = vpop.f32.mrf.mxu0
  %v875 = vadd.f32 0.0, %v874
  %v876 = vpop.f32.mrf.mxu0
  %877 = vdwg.mxu0
  %878 = vmatpush.bf16.msra.mxu0 %v839
  %879 = vmatpush.bf16.msra.mxu0 %v836
  %880 = vmatpush.bf16.msra.mxu0 %v833
  %881 = vmatpush.bf16.msra.mxu0 %v830
  %882 = vmatpush.bf16.msra.mxu0 %v827
  %883 = vmatpush.bf16.msra.mxu0 %v824
  %884 = vmatpush.bf16.msra.mxu0 %v821
  %885 = vmatpush.bf16.msra.mxu0 %v818
  %886 = vmatmul.bf16.gmra.mxu0 %v736
  %v887 = vpop.f32.mrf.mxu0
  %v888 = vadd.f32 0.0, %v887
  %v889 = vpop.f32.mrf.mxu0
  %890 = vdwg.mxu0
  %891 = vmatpush.bf16.msra.mxu0 %v840
  %892 = vmatpush.bf16.msra.mxu0 %v837
  %893 = vmatpush.bf16.msra.mxu0 %v834
  %894 = vmatpush.bf16.msra.mxu0 %v831
  %895 = vmatpush.bf16.msra.mxu0 %v828
  %896 = vmatpush.bf16.msra.mxu0 %v825
  %897 = vmatpush.bf16.msra.mxu0 %v822
  %898 = vmatpush.bf16.msra.mxu0 %v819
  %899 = vmatmul.bf16.gmra.mxu0 %v736
  %v900 = vpop.f32.mrf.mxu0
  %v901 = vadd.f32 0.0, %v900
  %v902 = vpop.f32.mrf.mxu0
  %903 = vdwg.mxu0
  %v904 = vld [vmem:[#allocation2] sm:$0xff]
  %v905 = vld [vmem:[#allocation2 + $0x8] sm:$0xff]
  %v906 = vld [vmem:[#allocation2 + $0x10] sm:$0xff]
  %v907 = vadd.f32 %v904, %v707
  %v908 = vadd.f32 %v905, %v720
  %v909 = vxor.u32 %v907, 2147483648
  %v910 = vxor.u32 %v908, 2147483648
  %v911 = vmul.f32 %v909, 1.442695
  %v912 = vpow.pop %v911
  %v913 = vmul.f32 %v910, 1.442695
  %v914 = vpow.pop %v913
  %v915 = vadd.f32 %v912, 1.0
  %v916 = vadd.f32 %v914, 1.0
  %v917 = vrcp.pop %v915
  %v918 = vmul.f32 %v915, %v917
  %v919 = vsub.f32 1.0, %v918
  %v920 = vmul.f32 %v917, %v919
  %v921 = vadd.f32 %v917, %v920
  %vm922 = vweird.f32 %v915
  %vm923 = vweird.f32 %v917
  %vm924 = vmor %vm922, %vm923
  %v925 = vsel %vm924, %v917, %v921
  %v926 = vand.u32 2147483647, %v915
  %vm927 = vcmp.eq.f32.partialorder %v926, 8.507059e+37
  %v928 = vand.u32 %v915, 2147483648
  %v929 = vor.u32 1.1754944e-38, %v928
  %v930 = vsel %vm927, %v929, %v925
  %v931 = vmul.f32 1.0, %v930
  %v932 = vrcp.pop %v916
  %v933 = vmul.f32 %v916, %v932
  %v934 = vsub.f32 1.0, %v933
  %v935 = vmul.f32 %v932, %v934
  %v936 = vadd.f32 %v932, %v935
  %vm937 = vweird.f32 %v916
  %vm938 = vweird.f32 %v932
  %vm939 = vmor %vm937, %vm938
  %v940 = vsel %vm939, %v932, %v936
  %v941 = vand.u32 2147483647, %v916
  %vm942 = vcmp.eq.f32.partialorder %v941, 8.507059e+37
  %v943 = vand.u32 %v916, 2147483648
  %v944 = vor.u32 1.1754944e-38, %v943
  %v945 = vsel %vm942, %v944, %v940
  %v946 = vmul.f32 1.0, %v945
  %v947 = vadd.f32 %v733, %v551
  %v948 = vmul.f32 %v931, %v947
  %v949 = vadd.f32 %v906, %v948
  %v950 = vtanh.pop %v949
  %v951 = vsub.f32 1.0, %v946
  %v952 = vmul.f32 %v951, %v950
  %v953 = vmul.f32 %v946, %v565
  %v954 = vadd.f32 %v952, %v953
  %v955 = vpack.c.bf16 %v954, %v954
  %v988 = vunpack.c.l.b16 %v485
  %v989 = vunpack.c.h.b16 %v485
  %v990 = vunpack.c.l.b16 %v486
  %v991 = vunpack.c.l.b16 %v487
  %v992 = vunpack.c.h.b16 %v487
  %v993 = vunpack.c.l.b16 %v488
  %v994 = vunpack.c.l.b16 %v489
  %v995 = vunpack.c.h.b16 %v489
  %v996 = vunpack.c.l.b16 %v490
  %v997 = vunpack.c.l.b16 %v491
  %v998 = vunpack.c.h.b16 %v491
  %v999 = vunpack.c.l.b16 %v492
  %v1000 = vunpack.c.l.b16 %v493
  %v1001 = vunpack.c.h.b16 %v493
  %v1002 = vunpack.c.l.b16 %v494
  %v1003 = vunpack.c.l.b16 %v495
  %v1004 = vunpack.c.h.b16 %v495
  %v1005 = vunpack.c.l.b16 %v496
  %v1006 = vunpack.c.l.b16 %v497
  %v1007 = vunpack.c.h.b16 %v497
  %v1008 = vunpack.c.l.b16 %v498
  %v1009 = vunpack.c.l.b16 %v499
  %v1010 = vunpack.c.h.b16 %v499
  %v1011 = vunpack.c.l.b16 %v500
  %v1012 = vunpack.c.l.b16 %v501
  %v1013 = vunpack.c.h.b16 %v501
  %v1014 = vunpack.c.l.b16 %v502
  %v1015 = vunpack.c.l.b16 %v503
  %v1016 = vunpack.c.h.b16 %v503
  %v1017 = vunpack.c.l.b16 %v504
  %v1018 = vunpack.c.l.b16 %v505
  %v1019 = vunpack.c.h.b16 %v505
  %v1020 = vunpack.c.l.b16 %v506
  %v1021 = vunpack.c.l.b16 %v507
  %v1022 = vunpack.c.h.b16 %v507
  %v1023 = vunpack.c.l.b16 %v508
  %v1024 = vunpack.c.l.b16 %v509
  %v1025 = vunpack.c.h.b16 %v509
  %v1026 = vunpack.c.l.b16 %v510
  %v1027 = vunpack.c.l.b16 %v511
  %v1028 = vunpack.c.h.b16 %v511
  %v1029 = vunpack.c.l.b16 %v512
  %v1030 = vunpack.c.l.b16 %v513
  %v1031 = vunpack.c.h.b16 %v513
  %v1032 = vunpack.c.l.b16 %v514
  %v1033 = vunpack.c.l.b16 %v515
  %v1034 = vunpack.c.h.b16 %v515
  %v1035 = vunpack.c.l.b16 %v516
  %v1036 = vpack.c.b16 %v991, %v988
  %v1037 = vpack.c.b16 %v992, %v989
  %v1038 = vpack.c.b16 %v993, %v990
  %v1039 = vpack.c.b16 %v997, %v994
  %v1040 = vpack.c.b16 %v998, %v995
  %v1041 = vpack.c.b16 %v999, %v996
  %v1042 = vpack.c.b16 %v1003, %v1000
  %v1043 = vpack.c.b16 %v1004, %v1001
  %v1044 = vpack.c.b16 %v1005, %v1002
  %v1045 = vpack.c.b16 %v1009, %v1006
  %v1046 = vpack.c.b16 %v1010, %v1007
  %v1047 = vpack.c.b16 %v1011, %v1008
  %v1048 = vpack.c.b16 %v1015, %v1012
  %v1049 = vpack.c.b16 %v1016, %v1013
  %v1050 = vpack.c.b16 %v1017, %v1014
  %v1051 = vpack.c.b16 %v1021, %v1018
  %v1052 = vpack.c.b16 %v1022, %v1019
  %v1053 = vpack.c.b16 %v1023, %v1020
  %v1054 = vpack.c.b16 %v1027, %v1024
  %v1055 = vpack.c.b16 %v1028, %v1025
  %v1056 = vpack.c.b16 %v1029, %v1026
  %v1057 = vpack.c.b16 %v1033, %v1030
  %v1058 = vpack.c.b16 %v1034, %v1031
  %v1059 = vpack.c.b16 %v1035, %v1032
  %1084 = vmatpush.bf16.msra.mxu0 %v1057
  %1085 = vmatpush.bf16.msra.mxu0 %v1054
  %1086 = vmatpush.bf16.msra.mxu0 %v1051
  %1087 = vmatpush.bf16.msra.mxu0 %v1048
  %1088 = vmatpush.bf16.msra.mxu0 %v1045
  %1089 = vmatpush.bf16.msra.mxu0 %v1042
  %1090 = vmatpush.bf16.msra.mxu0 %v1039
  %1091 = vmatpush.bf16.msra.mxu0 %v1036
  %1092 = vmatmul.bf16.gmra.mxu0 %v955
  %v1093 = vpop.f32.mrf.mxu0
  %v1094 = vadd.f32 %v555, %v1093
  %v1095 = vpop.f32.mrf.mxu0
  %1096 = vdwg.mxu0
  %1097 = vmatpush.bf16.msra.mxu0 %v1058
  %1098 = vmatpush.bf16.msra.mxu0 %v1055
  %1099 = vmatpush.bf16.msra.mxu0 %v1052
  %1100 = vmatpush.bf16.msra.mxu0 %v1049
  %1101 = vmatpush.bf16.msra.mxu0 %v1046
  %1102 = vmatpush.bf16.msra.mxu0 %v1043
  %1103 = vmatpush.bf16.msra.mxu0 %v1040
  %1104 = vmatpush.bf16.msra.mxu0 %v1037
  %1105 = vmatmul.bf16.gmra.mxu0 %v955
  %v1106 = vpop.f32.mrf.mxu0
  %v1107 = vadd.f32 %v556, %v1106
  %v1108 = vpop.f32.mrf.mxu0
  %1109 = vdwg.mxu0
  %1110 = vmatpush.bf16.msra.mxu0 %v1059
  %1111 = vmatpush.bf16.msra.mxu0 %v1056
  %1112 = vmatpush.bf16.msra.mxu0 %v1053
  %1113 = vmatpush.bf16.msra.mxu0 %v1050
  %1114 = vmatpush.bf16.msra.mxu0 %v1047
  %1115 = vmatpush.bf16.msra.mxu0 %v1044
  %1116 = vmatpush.bf16.msra.mxu0 %v1041
  %1117 = vmatpush.bf16.msra.mxu0 %v1038
  %1118 = vmatmul.bf16.gmra.mxu0 %v955
  %v1119 = vpop.f32.mrf.mxu0
  %v1120 = vadd.f32 %v557, %v1119
  %v1121 = vpop.f32.mrf.mxu0
  %1122 = vdwg.mxu0
  %v1123 = vadd.f32 %v1094, %v875
  %v1124 = vadd.f32 %v1107, %v888
  %v1125 = vxor.u32 %v1123, 2147483648
  %v1126 = vxor.u32 %v1124, 2147483648
  %v1127 = vmul.f32 %v1125, 1.442695
  %v1128 = vpow.pop %v1127
  %v1129 = vmul.f32 %v1126, 1.442695
  %v1130 = vpow.pop %v1129
  %v1131 = vadd.f32 %v1128, 1.0
  %v1132 = vadd.f32 %v1130, 1.0
  %v1133 = vrcp.pop %v1131
  %v1134 = vmul.f32 %v1131, %v1133
  %v1135 = vsub.f32 1.0, %v1134
  %v1136 = vmul.f32 %v1133, %v1135
  %v1137 = vadd.f32 %v1133, %v1136
  %vm1138 = vweird.f32 %v1131
  %vm1139 = vweird.f32 %v1133
  %vm1140 = vmor %vm1138, %vm1139
  %v1141 = vsel %vm1140, %v1133, %v1137
  %v1142 = vand.u32 2147483647, %v1131
  %vm1143 = vcmp.eq.f32.partialorder %v1142, 8.507059e+37
  %v1144 = vand.u32 %v1131, 2147483648
  %v1145 = vor.u32 1.1754944e-38, %v1144
  %v1146 = vsel %vm1143, %v1145, %v1141
  %v1147 = vmul.f32 1.0, %v1146
  %v1148 = vrcp.pop %v1132
  %v1149 = vmul.f32 %v1132, %v1148
  %v1150 = vsub.f32 1.0, %v1149
  %v1151 = vmul.f32 %v1148, %v1150
  %v1152 = vadd.f32 %v1148, %v1151
  %vm1153 = vweird.f32 %v1132
  %vm1154 = vweird.f32 %v1148
  %vm1155 = vmor %vm1153, %vm1154
  %v1156 = vsel %vm1155, %v1148, %v1152
  %v1157 = vand.u32 2147483647, %v1132
  %vm1158 = vcmp.eq.f32.partialorder %v1157, 8.507059e+37
  %v1159 = vand.u32 %v1132, 2147483648
  %v1160 = vor.u32 1.1754944e-38, %v1159
  %v1161 = vsel %vm1158, %v1160, %v1156
  %v1162 = vmul.f32 1.0, %v1161
  %v1163 = vadd.f32 %v901, %v563
  %v1164 = vmul.f32 %v1147, %v1163
  %v1165 = vadd.f32 %v1120, %v1164
  %v1166 = vtanh.pop %v1165
  %v1167 = vsub.f32 1.0, %v1162
  %v1168 = vmul.f32 %v1167, %v1166
  %v1169 = vmul.f32 %v1162, %v567
  %v1170 = vadd.f32 %v1168, %v1169
  %1171 = vst [vmem:[#allocation3] sm:$0xff] %v1170
  %1172 = vmatpush.bf16.msra.mxu0 %v670
  %1173 = vmatpush.bf16.msra.mxu0 %v667
  %1174 = vmatpush.bf16.msra.mxu0 %v664
  %1175 = vmatpush.bf16.msra.mxu0 %v661
  %1176 = vmatpush.bf16.msra.mxu0 %v658
  %1177 = vmatpush.bf16.msra.mxu0 %v655
  %1178 = vmatpush.bf16.msra.mxu0 %v652
  %1179 = vmatpush.bf16.msra.mxu0 %v649
  %1180 = vmatmul.bf16.gmra.mxu0 %v955
  %v1181 = vpop.f32.mrf.mxu0
  %v1182 = vadd.f32 0.0, %v1181
  %v1183 = vpop.f32.mrf.mxu0
  %1184 = vdwg.mxu0
  %1185 = vmatpush.bf16.msra.mxu0 %v671
  %1186 = vmatpush.bf16.msra.mxu0 %v668
  %1187 = vmatpush.bf16.msra.mxu0 %v665
  %1188 = vmatpush.bf16.msra.mxu0 %v662
  %1189 = vmatpush.bf16.msra.mxu0 %v659
  %1190 = vmatpush.bf16.msra.mxu0 %v656
  %1191 = vmatpush.bf16.msra.mxu0 %v653
  %1192 = vmatpush.bf16.msra.mxu0 %v650
  %1193 = vmatmul.bf16.gmra.mxu0 %v955
  %v1194 = vpop.f32.mrf.mxu0
  %v1195 = vadd.f32 0.0, %v1194
  %v1196 = vpop.f32.mrf.mxu0
  %1197 = vdwg.mxu0
  %1198 = vmatpush.bf16.msra.mxu0 %v672
  %1199 = vmatpush.bf16.msra.mxu0 %v669
  %1200 = vmatpush.bf16.msra.mxu0 %v666
  %1201 = vmatpush.bf16.msra.mxu0 %v663
  %1202 = vmatpush.bf16.msra.mxu0 %v660
  %1203 = vmatpush.bf16.msra.mxu0 %v657
  %1204 = vmatpush.bf16.msra.mxu0 %v654
  %1205 = vmatpush.bf16.msra.mxu0 %v651
  %1206 = vmatmul.bf16.gmra.mxu0 %v955
  %v1207 = vpop.f32.mrf.mxu0
  %v1208 = vadd.f32 0.0, %v1207
  %v1209 = vpop.f32.mrf.mxu0
  %1210 = vdwg.mxu0
  %v1211 = vpack.c.bf16 %v1170, %v1170
  %1212 = vmatpush.bf16.msra.mxu0 %v838
  %1213 = vmatpush.bf16.msra.mxu0 %v835
  %1214 = vmatpush.bf16.msra.mxu0 %v832
  %1215 = vmatpush.bf16.msra.mxu0 %v829
  %1216 = vmatpush.bf16.msra.mxu0 %v826
  %1217 = vmatpush.bf16.msra.mxu0 %v823
  %1218 = vmatpush.bf16.msra.mxu0 %v820
  %1219 = vmatpush.bf16.msra.mxu0 %v817
  %1220 = vmatmul.bf16.gmra.mxu0 %v1211
  %v1221 = vpop.f32.mrf.mxu0
  %v1222 = vadd.f32 0.0, %v1221
  %v1223 = vpop.f32.mrf.mxu0
  %1224 = vdwg.mxu0
  %1225 = vmatpush.bf16.msra.mxu0 %v839
  %1226 = vmatpush.bf16.msra.mxu0 %v836
  %1227 = vmatpush.bf16.msra.mxu0 %v833
  %1228 = vmatpush.bf16.msra.mxu0 %v830
  %1229 = vmatpush.bf16.msra.mxu0 %v827
  %1230 = vmatpush.bf16.msra.mxu0 %v824
  %1231 = vmatpush.bf16.msra.mxu0 %v821
  %1232 = vmatpush.bf16.msra.mxu0 %v818
  %1233 = vmatmul.bf16.gmra.mxu0 %v1211
  %v1234 = vpop.f32.mrf.mxu0
  %v1235 = vadd.f32 0.0, %v1234
  %v1236 = vpop.f32.mrf.mxu0
  %1237 = vdwg.mxu0
  %1238 = vmatpush.bf16.msra.mxu0 %v840
  %1239 = vmatpush.bf16.msra.mxu0 %v837
  %1240 = vmatpush.bf16.msra.mxu0 %v834
  %1241 = vmatpush.bf16.msra.mxu0 %v831
  %1242 = vmatpush.bf16.msra.mxu0 %v828
  %1243 = vmatpush.bf16.msra.mxu0 %v825
  %1244 = vmatpush.bf16.msra.mxu0 %v822
  %1245 = vmatpush.bf16.msra.mxu0 %v819
  %1246 = vmatmul.bf16.gmra.mxu0 %v1211
  %v1247 = vpop.f32.mrf.mxu0
  %v1248 = vadd.f32 0.0, %v1247
  %v1249 = vpop.f32.mrf.mxu0
  %1250 = vdwg.mxu0
  %s1251 = scalar_lea.vmem [#allocation2], 24
  %v1252 = vld [vmem:[%s1251] sm:$0xff]
  %v1253 = vld [vmem:[%s1251 + $0x8] sm:$0xff]
  %v1254 = vld [vmem:[%s1251 + $0x10] sm:$0xff]
  %v1255 = vadd.f32 %v1252, %v1182
  %v1256 = vadd.f32 %v1253, %v1195
  %v1257 = vxor.u32 %v1255, 2147483648
  %v1258 = vxor.u32 %v1256, 2147483648
  %v1259 = vmul.f32 %v1257, 1.442695
  %v1260 = vpow.pop %v1259
  %v1261 = vmul.f32 %v1258, 1.442695
  %v1262 = vpow.pop %v1261
  %v1263 = vadd.f32 %v1260, 1.0
  %v1264 = vadd.f32 %v1262, 1.0
  %v1265 = vrcp.pop %v1263
  %v1266 = vmul.f32 %v1263, %v1265
  %v1267 = vsub.f32 1.0, %v1266
  %v1268 = vmul.f32 %v1265, %v1267
  %v1269 = vadd.f32 %v1265, %v1268
  %vm1270 = vweird.f32 %v1263
  %vm1271 = vweird.f32 %v1265
  %vm1272 = vmor %vm1270, %vm1271
  %v1273 = vsel %vm1272, %v1265, %v1269
  %v1274 = vand.u32 2147483647, %v1263
  %vm1275 = vcmp.eq.f32.partialorder %v1274, 8.507059e+37
  %v1276 = vand.u32 %v1263, 2147483648
  %v1277 = vor.u32 1.1754944e-38, %v1276
  %v1278 = vsel %vm1275, %v1277, %v1273
  %v1279 = vmul.f32 1.0, %v1278
  %v1280 = vrcp.pop %v1264
  %v1281 = vmul.f32 %v1264, %v1280
  %v1282 = vsub.f32 1.0, %v1281
  %v1283 = vmul.f32 %v1280, %v1282
  %v1284 = vadd.f32 %v1280, %v1283
  %vm1285 = vweird.f32 %v1264
  %vm1286 = vweird.f32 %v1280
  %vm1287 = vmor %vm1285, %vm1286
  %v1288 = vsel %vm1287, %v1280, %v1284
  %v1289 = vand.u32 2147483647, %v1264
  %vm1290 = vcmp.eq.f32.partialorder %v1289, 8.507059e+37
  %v1291 = vand.u32 %v1264, 2147483648
  %v1292 = vor.u32 1.1754944e-38, %v1291
  %v1293 = vsel %vm1290, %v1292, %v1288
  %v1294 = vmul.f32 1.0, %v1293
  %v1295 = vadd.f32 %v1208, %v551
  %v1296 = vmul.f32 %v1279, %v1295
  %v1297 = vadd.f32 %v1254, %v1296
  %v1298 = vtanh.pop %v1297
  %v1299 = vsub.f32 1.0, %v1294
  %v1300 = vmul.f32 %v1299, %v1298
  %v1301 = vmul.f32 %v1294, %v954
  %v1302 = vadd.f32 %v1300, %v1301
  %v1303 = vpack.c.bf16 %v1302, %v1302
  %1304 = vmatpush.bf16.msra.mxu0 %v1057
  %1305 = vmatpush.bf16.msra.mxu0 %v1054
  %1306 = vmatpush.bf16.msra.mxu0 %v1051
  %1307 = vmatpush.bf16.msra.mxu0 %v1048
  %1308 = vmatpush.bf16.msra.mxu0 %v1045
  %1309 = vmatpush.bf16.msra.mxu0 %v1042
  %1310 = vmatpush.bf16.msra.mxu0 %v1039
  %1311 = vmatpush.bf16.msra.mxu0 %v1036
  %1312 = vmatmul.bf16.gmra.mxu0 %v1303
  %v1313 = vpop.f32.mrf.mxu0
  %v1314 = vadd.f32 %v555, %v1313
  %v1315 = vpop.f32.mrf.mxu0
  %1316 = vdwg.mxu0
  %1317 = vmatpush.bf16.msra.mxu0 %v1058
  %1318 = vmatpush.bf16.msra.mxu0 %v1055
  %1319 = vmatpush.bf16.msra.mxu0 %v1052
  %1320 = vmatpush.bf16.msra.mxu0 %v1049
  %1321 = vmatpush.bf16.msra.mxu0 %v1046
  %1322 = vmatpush.bf16.msra.mxu0 %v1043
  %1323 = vmatpush.bf16.msra.mxu0 %v1040
  %1324 = vmatpush.bf16.msra.mxu0 %v1037
  %1325 = vmatmul.bf16.gmra.mxu0 %v1303
  %v1326 = vpop.f32.mrf.mxu0
  %v1327 = vadd.f32 %v556, %v1326
  %v1328 = vpop.f32.mrf.mxu0
  %1329 = vdwg.mxu0
  %1330 = vmatpush.bf16.msra.mxu0 %v1059
  %1331 = vmatpush.bf16.msra.mxu0 %v1056
  %1332 = vmatpush.bf16.msra.mxu0 %v1053
  %1333 = vmatpush.bf16.msra.mxu0 %v1050
  %1334 = vmatpush.bf16.msra.mxu0 %v1047
  %1335 = vmatpush.bf16.msra.mxu0 %v1044
  %1336 = vmatpush.bf16.msra.mxu0 %v1041
  %1337 = vmatpush.bf16.msra.mxu0 %v1038
  %1338 = vmatmul.bf16.gmra.mxu0 %v1303
  %v1339 = vpop.f32.mrf.mxu0
  %v1340 = vadd.f32 %v557, %v1339
  %v1341 = vpop.f32.mrf.mxu0
  %1342 = vdwg.mxu0
  %v1343 = vadd.f32 %v1314, %v1222
  %v1344 = vadd.f32 %v1327, %v1235
  %v1345 = vxor.u32 %v1343, 2147483648
  %v1346 = vxor.u32 %v1344, 2147483648
  %v1347 = vmul.f32 %v1345, 1.442695
  %v1348 = vpow.pop %v1347
  %v1349 = vmul.f32 %v1346, 1.442695
  %v1350 = vpow.pop %v1349
  %v1351 = vadd.f32 %v1348, 1.0
  %v1352 = vadd.f32 %v1350, 1.0
  %v1353 = vrcp.pop %v1351
  %v1354 = vmul.f32 %v1351, %v1353
  %v1355 = vsub.f32 1.0, %v1354
  %v1356 = vmul.f32 %v1353, %v1355
  %v1357 = vadd.f32 %v1353, %v1356
  %vm1358 = vweird.f32 %v1351
  %vm1359 = vweird.f32 %v1353
  %vm1360 = vmor %vm1358, %vm1359
  %v1361 = vsel %vm1360, %v1353, %v1357
  %v1362 = vand.u32 2147483647, %v1351
  %vm1363 = vcmp.eq.f32.partialorder %v1362, 8.507059e+37
  %v1364 = vand.u32 %v1351, 2147483648
  %v1365 = vor.u32 1.1754944e-38, %v1364
  %v1366 = vsel %vm1363, %v1365, %v1361
  %v1367 = vmul.f32 1.0, %v1366
  %v1368 = vrcp.pop %v1352
  %v1369 = vmul.f32 %v1352, %v1368
  %v1370 = vsub.f32 1.0, %v1369
  %v1371 = vmul.f32 %v1368, %v1370
  %v1372 = vadd.f32 %v1368, %v1371
  %vm1373 = vweird.f32 %v1352
  %vm1374 = vweird.f32 %v1368
  %vm1375 = vmor %vm1373, %vm1374
  %v1376 = vsel %vm1375, %v1368, %v1372
  %v1377 = vand.u32 2147483647, %v1352
  %vm1378 = vcmp.eq.f32.partialorder %v1377, 8.507059e+37
  %v1379 = vand.u32 %v1352, 2147483648
  %v1380 = vor.u32 1.1754944e-38, %v1379
  %v1381 = vsel %vm1378, %v1380, %v1376
  %v1382 = vmul.f32 1.0, %v1381
  %v1383 = vadd.f32 %v1248, %v563
  %v1384 = vmul.f32 %v1367, %v1383
  %v1385 = vadd.f32 %v1340, %v1384
  %v1386 = vtanh.pop %v1385
  %v1387 = vsub.f32 1.0, %v1382
  %v1388 = vmul.f32 %v1387, %v1386
  %v1389 = vmul.f32 %v1382, %v1170
  %v1390 = vadd.f32 %v1388, %v1389
  %s1391 = scalar_lea.vmem [#allocation3], 8
  %1392 = vst [vmem:[%s1391] sm:$0xff] %v1390
  %1393 = vmatpush.bf16.msra.mxu0 %v670
  %1394 = vmatpush.bf16.msra.mxu0 %v667
  %1395 = vmatpush.bf16.msra.mxu0 %v664
  %1396 = vmatpush.bf16.msra.mxu0 %v661
  %1397 = vmatpush.bf16.msra.mxu0 %v658
  %1398 = vmatpush.bf16.msra.mxu0 %v655
  %1399 = vmatpush.bf16.msra.mxu0 %v652
  %1400 = vmatpush.bf16.msra.mxu0 %v649
  %1401 = vmatmul.bf16.gmra.mxu0 %v1303
  %v1402 = vpop.f32.mrf.mxu0
  %v1403 = vadd.f32 0.0, %v1402
  %v1404 = vpop.f32.mrf.mxu0
  %1405 = vdwg.mxu0
  %1406 = vmatpush.bf16.msra.mxu0 %v671
  %1407 = vmatpush.bf16.msra.mxu0 %v668
  %1408 = vmatpush.bf16.msra.mxu0 %v665
  %1409 = vmatpush.bf16.msra.mxu0 %v662
  %1410 = vmatpush.bf16.msra.mxu0 %v659
  %1411 = vmatpush.bf16.msra.mxu0 %v656
  %1412 = vmatpush.bf16.msra.mxu0 %v653
  %1413 = vmatpush.bf16.msra.mxu0 %v650
  %1414 = vmatmul.bf16.gmra.mxu0 %v1303
  %v1415 = vpop.f32.mrf.mxu0
  %v1416 = vadd.f32 0.0, %v1415
  %v1417 = vpop.f32.mrf.mxu0
  %1418 = vdwg.mxu0
  %1419 = vmatpush.bf16.msra.mxu0 %v672
  %1420 = vmatpush.bf16.msra.mxu0 %v669
  %1421 = vmatpush.bf16.msra.mxu0 %v666
  %1422 = vmatpush.bf16.msra.mxu0 %v663
  %1423 = vmatpush.bf16.msra.mxu0 %v660
  %1424 = vmatpush.bf16.msra.mxu0 %v657
  %1425 = vmatpush.bf16.msra.mxu0 %v654
  %1426 = vmatpush.bf16.msra.mxu0 %v651
  %1427 = vmatmul.bf16.gmra.mxu0 %v1303
  %v1428 = vpop.f32.mrf.mxu0
  %v1429 = vadd.f32 0.0, %v1428
  %v1430 = vpop.f32.mrf.mxu0
  %1431 = vdwg.mxu0
  %v1432 = vpack.c.bf16 %v1390, %v1390
  %1433 = vmatpush.bf16.msra.mxu0 %v838
  %1434 = vmatpush.bf16.msra.mxu0 %v835
  %1435 = vmatpush.bf16.msra.mxu0 %v832
  %1436 = vmatpush.bf16.msra.mxu0 %v829
  %1437 = vmatpush.bf16.msra.mxu0 %v826
  %1438 = vmatpush.bf16.msra.mxu0 %v823
  %1439 = vmatpush.bf16.msra.mxu0 %v820
  %1440 = vmatpush.bf16.msra.mxu0 %v817
  %1441 = vmatmul.bf16.gmra.mxu0 %v1432
  %v1442 = vpop.f32.mrf.mxu0
  %v1443 = vadd.f32 0.0, %v1442
  %v1444 = vpop.f32.mrf.mxu0
  %1445 = vdwg.mxu0
  %1446 = vmatpush.bf16.msra.mxu0 %v839
  %1447 = vmatpush.bf16.msra.mxu0 %v836
  %1448 = vmatpush.bf16.msra.mxu0 %v833
  %1449 = vmatpush.bf16.msra.mxu0 %v830
  %1450 = vmatpush.bf16.msra.mxu0 %v827
  %1451 = vmatpush.bf16.msra.mxu0 %v824
  %1452 = vmatpush.bf16.msra.mxu0 %v821
  %1453 = vmatpush.bf16.msra.mxu0 %v818
  %1454 = vmatmul.bf16.gmra.mxu0 %v1432
  %v1455 = vpop.f32.mrf.mxu0
  %v1456 = vadd.f32 0.0, %v1455
  %v1457 = vpop.f32.mrf.mxu0
  %1458 = vdwg.mxu0
  %1459 = vmatpush.bf16.msra.mxu0 %v840
  %1460 = vmatpush.bf16.msra.mxu0 %v837
  %1461 = vmatpush.bf16.msra.mxu0 %v834
  %1462 = vmatpush.bf16.msra.mxu0 %v831
  %1463 = vmatpush.bf16.msra.mxu0 %v828
  %1464 = vmatpush.bf16.msra.mxu0 %v825
  %1465 = vmatpush.bf16.msra.mxu0 %v822
  %1466 = vmatpush.bf16.msra.mxu0 %v819
  %1467 = vmatmul.bf16.gmra.mxu0 %v1432
  %v1468 = vpop.f32.mrf.mxu0
  %v1469 = vadd.f32 0.0, %v1468
  %v1470 = vpop.f32.mrf.mxu0
  %1471 = vdwg.mxu0
  %s1472 = scalar_lea.vmem [#allocation2], 48
  %v1473 = vld [vmem:[%s1472] sm:$0xff]
  %v1474 = vld [vmem:[%s1472 + $0x8] sm:$0xff]
  %v1475 = vld [vmem:[%s1472 + $0x10] sm:$0xff]
  %v1476 = vadd.f32 %v1473, %v1403
  %v1477 = vadd.f32 %v1474, %v1416
  %v1478 = vxor.u32 %v1476, 2147483648
  %v1479 = vxor.u32 %v1477, 2147483648
  %v1480 = vmul.f32 %v1478, 1.442695
  %v1481 = vpow.pop %v1480
  %v1482 = vmul.f32 %v1479, 1.442695
  %v1483 = vpow.pop %v1482
  %v1484 = vadd.f32 %v1481, 1.0
  %v1485 = vadd.f32 %v1483, 1.0
  %v1486 = vrcp.pop %v1484
  %v1487 = vmul.f32 %v1484, %v1486
  %v1488 = vsub.f32 1.0, %v1487
  %v1489 = vmul.f32 %v1486, %v1488
  %v1490 = vadd.f32 %v1486, %v1489
  %vm1491 = vweird.f32 %v1484
  %vm1492 = vweird.f32 %v1486
  %vm1493 = vmor %vm1491, %vm1492
  %v1494 = vsel %vm1493, %v1486, %v1490
  %v1495 = vand.u32 2147483647, %v1484
  %vm1496 = vcmp.eq.f32.partialorder %v1495, 8.507059e+37
  %v1497 = vand.u32 %v1484, 2147483648
  %v1498 = vor.u32 1.1754944e-38, %v1497
  %v1499 = vsel %vm1496, %v1498, %v1494
  %v1500 = vmul.f32 1.0, %v1499
  %v1501 = vrcp.pop %v1485
  %v1502 = vmul.f32 %v1485, %v1501
  %v1503 = vsub.f32 1.0, %v1502
  %v1504 = vmul.f32 %v1501, %v1503
  %v1505 = vadd.f32 %v1501, %v1504
  %vm1506 = vweird.f32 %v1485
  %vm1507 = vweird.f32 %v1501
  %vm1508 = vmor %vm1506, %vm1507
  %v1509 = vsel %vm1508, %v1501, %v1505
  %v1510 = vand.u32 2147483647, %v1485
  %vm1511 = vcmp.eq.f32.partialorder %v1510, 8.507059e+37
  %v1512 = vand.u32 %v1485, 2147483648
  %v1513 = vor.u32 1.1754944e-38, %v1512
  %v1514 = vsel %vm1511, %v1513, %v1509
  %v1515 = vmul.f32 1.0, %v1514
  %v1516 = vadd.f32 %v1429, %v551
  %v1517 = vmul.f32 %v1500, %v1516
  %v1518 = vadd.f32 %v1475, %v1517
  %v1519 = vtanh.pop %v1518
  %v1520 = vsub.f32 1.0, %v1515
  %v1521 = vmul.f32 %v1520, %v1519
  %v1522 = vmul.f32 %v1515, %v1302
  %v1523 = vadd.f32 %v1521, %v1522
  %v1524 = vpack.c.bf16 %v1523, %v1523
  %1525 = vmatpush.bf16.msra.mxu0 %v1057
  %1526 = vmatpush.bf16.msra.mxu0 %v1054
  %1527 = vmatpush.bf16.msra.mxu0 %v1051
  %1528 = vmatpush.bf16.msra.mxu0 %v1048
  %1529 = vmatpush.bf16.msra.mxu0 %v1045
  %1530 = vmatpush.bf16.msra.mxu0 %v1042
  %1531 = vmatpush.bf16.msra.mxu0 %v1039
  %1532 = vmatpush.bf16.msra.mxu0 %v1036
  %1533 = vmatmul.bf16.gmra.mxu0 %v1524
  %v1534 = vpop.f32.mrf.mxu0
  %v1535 = vadd.f32 %v555, %v1534
  %v1536 = vpop.f32.mrf.mxu0
  %1537 = vdwg.mxu0
  %1538 = vmatpush.bf16.msra.mxu0 %v1058
  %1539 = vmatpush.bf16.msra.mxu0 %v1055
  %1540 = vmatpush.bf16.msra.mxu0 %v1052
  %1541 = vmatpush.bf16.msra.mxu0 %v1049
  %1542 = vmatpush.bf16.msra.mxu0 %v1046
  %1543 = vmatpush.bf16.msra.mxu0 %v1043
  %1544 = vmatpush.bf16.msra.mxu0 %v1040
  %1545 = vmatpush.bf16.msra.mxu0 %v1037
  %1546 = vmatmul.bf16.gmra.mxu0 %v1524
  %v1547 = vpop.f32.mrf.mxu0
  %v1548 = vadd.f32 %v556, %v1547
  %v1549 = vpop.f32.mrf.mxu0
  %1550 = vdwg.mxu0
  %1551 = vmatpush.bf16.msra.mxu0 %v1059
  %1552 = vmatpush.bf16.msra.mxu0 %v1056
  %1553 = vmatpush.bf16.msra.mxu0 %v1053
  %1554 = vmatpush.bf16.msra.mxu0 %v1050
  %1555 = vmatpush.bf16.msra.mxu0 %v1047
  %1556 = vmatpush.bf16.msra.mxu0 %v1044
  %1557 = vmatpush.bf16.msra.mxu0 %v1041
  %1558 = vmatpush.bf16.msra.mxu0 %v1038
  %1559 = vmatmul.bf16.gmra.mxu0 %v1524
  %v1560 = vpop.f32.mrf.mxu0
  %v1561 = vadd.f32 %v557, %v1560
  %v1562 = vpop.f32.mrf.mxu0
  %1563 = vdwg.mxu0
  %v1564 = vadd.f32 %v1535, %v1443
  %v1565 = vadd.f32 %v1548, %v1456
  %v1566 = vxor.u32 %v1564, 2147483648
  %v1567 = vxor.u32 %v1565, 2147483648
  %v1568 = vmul.f32 %v1566, 1.442695
  %v1569 = vpow.pop %v1568
  %v1570 = vmul.f32 %v1567, 1.442695
  %v1571 = vpow.pop %v1570
  %v1572 = vadd.f32 %v1569, 1.0
  %v1573 = vadd.f32 %v1571, 1.0
  %v1574 = vrcp.pop %v1572
  %v1575 = vmul.f32 %v1572, %v1574
  %v1576 = vsub.f32 1.0, %v1575
  %v1577 = vmul.f32 %v1574, %v1576
  %v1578 = vadd.f32 %v1574, %v1577
  %vm1579 = vweird.f32 %v1572
  %vm1580 = vweird.f32 %v1574
  %vm1581 = vmor %vm1579, %vm1580
  %v1582 = vsel %vm1581, %v1574, %v1578
  %v1583 = vand.u32 2147483647, %v1572
  %vm1584 = vcmp.eq.f32.partialorder %v1583, 8.507059e+37
  %v1585 = vand.u32 %v1572, 2147483648
  %v1586 = vor.u32 1.1754944e-38, %v1585
  %v1587 = vsel %vm1584, %v1586, %v1582
  %v1588 = vmul.f32 1.0, %v1587
  %v1589 = vrcp.pop %v1573
  %v1590 = vmul.f32 %v1573, %v1589
  %v1591 = vsub.f32 1.0, %v1590
  %v1592 = vmul.f32 %v1589, %v1591
  %v1593 = vadd.f32 %v1589, %v1592
  %vm1594 = vweird.f32 %v1573
  %vm1595 = vweird.f32 %v1589
  %vm1596 = vmor %vm1594, %vm1595
  %v1597 = vsel %vm1596, %v1589, %v1593
  %v1598 = vand.u32 2147483647, %v1573
  %vm1599 = vcmp.eq.f32.partialorder %v1598, 8.507059e+37
  %v1600 = vand.u32 %v1573, 2147483648
  %v1601 = vor.u32 1.1754944e-38, %v1600
  %v1602 = vsel %vm1599, %v1601, %v1597
  %v1603 = vmul.f32 1.0, %v1602
  %v1604 = vadd.f32 %v1469, %v563
  %v1605 = vmul.f32 %v1588, %v1604
  %v1606 = vadd.f32 %v1561, %v1605
  %v1607 = vtanh.pop %v1606
  %v1608 = vsub.f32 1.0, %v1603
  %v1609 = vmul.f32 %v1608, %v1607
  %v1610 = vmul.f32 %v1603, %v1390
  %v1611 = vadd.f32 %v1609, %v1610
  %s1612 = scalar_lea.vmem [#allocation3], 16
  %1613 = vst [vmem:[%s1612] sm:$0xff] %v1611
  %1614 = vmatpush.bf16.msra.mxu0 %v670
  %1615 = vmatpush.bf16.msra.mxu0 %v667
  %1616 = vmatpush.bf16.msra.mxu0 %v664
  %1617 = vmatpush.bf16.msra.mxu0 %v661
  %1618 = vmatpush.bf16.msra.mxu0 %v658
  %1619 = vmatpush.bf16.msra.mxu0 %v655
  %1620 = vmatpush.bf16.msra.mxu0 %v652
  %1621 = vmatpush.bf16.msra.mxu0 %v649
  %1622 = vmatmul.bf16.gmra.mxu0 %v1524
  %v1623 = vpop.f32.mrf.mxu0
  %v1624 = vadd.f32 0.0, %v1623
  %v1625 = vpop.f32.mrf.mxu0
  %1626 = vdwg.mxu0
  %1627 = vmatpush.bf16.msra.mxu0 %v671
  %1628 = vmatpush.bf16.msra.mxu0 %v668
  %1629 = vmatpush.bf16.msra.mxu0 %v665
  %1630 = vmatpush.bf16.msra.mxu0 %v662
  %1631 = vmatpush.bf16.msra.mxu0 %v659
  %1632 = vmatpush.bf16.msra.mxu0 %v656
  %1633 = vmatpush.bf16.msra.mxu0 %v653
  %1634 = vmatpush.bf16.msra.mxu0 %v650
  %1635 = vmatmul.bf16.gmra.mxu0 %v1524
  %v1636 = vpop.f32.mrf.mxu0
  %v1637 = vadd.f32 0.0, %v1636
  %v1638 = vpop.f32.mrf.mxu0
  %1639 = vdwg.mxu0
  %1640 = vmatpush.bf16.msra.mxu0 %v672
  %1641 = vmatpush.bf16.msra.mxu0 %v669
  %1642 = vmatpush.bf16.msra.mxu0 %v666
  %1643 = vmatpush.bf16.msra.mxu0 %v663
  %1644 = vmatpush.bf16.msra.mxu0 %v660
  %1645 = vmatpush.bf16.msra.mxu0 %v657
  %1646 = vmatpush.bf16.msra.mxu0 %v654
  %1647 = vmatpush.bf16.msra.mxu0 %v651
  %1648 = vmatmul.bf16.gmra.mxu0 %v1524
  %v1649 = vpop.f32.mrf.mxu0
  %v1650 = vadd.f32 0.0, %v1649
  %v1651 = vpop.f32.mrf.mxu0
  %1652 = vdwg.mxu0
  %v1653 = vpack.c.bf16 %v1611, %v1611
  %1654 = vmatpush.bf16.msra.mxu0 %v838
  %1655 = vmatpush.bf16.msra.mxu0 %v835
  %1656 = vmatpush.bf16.msra.mxu0 %v832
  %1657 = vmatpush.bf16.msra.mxu0 %v829
  %1658 = vmatpush.bf16.msra.mxu0 %v826
  %1659 = vmatpush.bf16.msra.mxu0 %v823
  %1660 = vmatpush.bf16.msra.mxu0 %v820
  %1661 = vmatpush.bf16.msra.mxu0 %v817
  %1662 = vmatmul.bf16.gmra.mxu0 %v1653
  %v1663 = vpop.f32.mrf.mxu0
  %v1664 = vadd.f32 0.0, %v1663
  %v1665 = vpop.f32.mrf.mxu0
  %1666 = vdwg.mxu0
  %1667 = vmatpush.bf16.msra.mxu0 %v839
  %1668 = vmatpush.bf16.msra.mxu0 %v836
  %1669 = vmatpush.bf16.msra.mxu0 %v833
  %1670 = vmatpush.bf16.msra.mxu0 %v830
  %1671 = vmatpush.bf16.msra.mxu0 %v827
  %1672 = vmatpush.bf16.msra.mxu0 %v824
  %1673 = vmatpush.bf16.msra.mxu0 %v821
  %1674 = vmatpush.bf16.msra.mxu0 %v818
  %1675 = vmatmul.bf16.gmra.mxu0 %v1653
  %v1676 = vpop.f32.mrf.mxu0
  %v1677 = vadd.f32 0.0, %v1676
  %v1678 = vpop.f32.mrf.mxu0
  %1679 = vdwg.mxu0
  %1680 = vmatpush.bf16.msra.mxu0 %v840
  %1681 = vmatpush.bf16.msra.mxu0 %v837
  %1682 = vmatpush.bf16.msra.mxu0 %v834
  %1683 = vmatpush.bf16.msra.mxu0 %v831
  %1684 = vmatpush.bf16.msra.mxu0 %v828
  %1685 = vmatpush.bf16.msra.mxu0 %v825
  %1686 = vmatpush.bf16.msra.mxu0 %v822
  %1687 = vmatpush.bf16.msra.mxu0 %v819
  %1688 = vmatmul.bf16.gmra.mxu0 %v1653
  %v1689 = vpop.f32.mrf.mxu0
  %v1690 = vadd.f32 0.0, %v1689
  %v1691 = vpop.f32.mrf.mxu0
  %1692 = vdwg.mxu0
  %s1693 = scalar_lea.vmem [#allocation2], 72
  %v1694 = vld [vmem:[%s1693] sm:$0xff]
  %v1695 = vld [vmem:[%s1693 + $0x8] sm:$0xff]
  %v1696 = vld [vmem:[%s1693 + $0x10] sm:$0xff]
  %v1697 = vadd.f32 %v1694, %v1624
  %v1698 = vadd.f32 %v1695, %v1637
  %v1699 = vxor.u32 %v1697, 2147483648
  %v1700 = vxor.u32 %v1698, 2147483648
  %v1701 = vmul.f32 %v1699, 1.442695
  %v1702 = vpow.pop %v1701
  %v1703 = vmul.f32 %v1700, 1.442695
  %v1704 = vpow.pop %v1703
  %v1705 = vadd.f32 %v1702, 1.0
  %v1706 = vadd.f32 %v1704, 1.0
  %v1707 = vrcp.pop %v1705
  %v1708 = vmul.f32 %v1705, %v1707
  %v1709 = vsub.f32 1.0, %v1708
  %v1710 = vmul.f32 %v1707, %v1709
  %v1711 = vadd.f32 %v1707, %v1710
  %vm1712 = vweird.f32 %v1705
  %vm1713 = vweird.f32 %v1707
  %vm1714 = vmor %vm1712, %vm1713
  %v1715 = vsel %vm1714, %v1707, %v1711
  %v1716 = vand.u32 2147483647, %v1705
  %vm1717 = vcmp.eq.f32.partialorder %v1716, 8.507059e+37
  %v1718 = vand.u32 %v1705, 2147483648
  %v1719 = vor.u32 1.1754944e-38, %v1718
  %v1720 = vsel %vm1717, %v1719, %v1715
  %v1721 = vmul.f32 1.0, %v1720
  %v1722 = vrcp.pop %v1706
  %v1723 = vmul.f32 %v1706, %v1722
  %v1724 = vsub.f32 1.0, %v1723
  %v1725 = vmul.f32 %v1722, %v1724
  %v1726 = vadd.f32 %v1722, %v1725
  %vm1727 = vweird.f32 %v1706
  %vm1728 = vweird.f32 %v1722
  %vm1729 = vmor %vm1727, %vm1728
  %v1730 = vsel %vm1729, %v1722, %v1726
  %v1731 = vand.u32 2147483647, %v1706
  %vm1732 = vcmp.eq.f32.partialorder %v1731, 8.507059e+37
  %v1733 = vand.u32 %v1706, 2147483648
  %v1734 = vor.u32 1.1754944e-38, %v1733
  %v1735 = vsel %vm1732, %v1734, %v1730
  %v1736 = vmul.f32 1.0, %v1735
  %v1737 = vadd.f32 %v1650, %v551
  %v1738 = vmul.f32 %v1721, %v1737
  %v1739 = vadd.f32 %v1696, %v1738
  %v1740 = vtanh.pop %v1739
  %v1741 = vsub.f32 1.0, %v1736
  %v1742 = vmul.f32 %v1741, %v1740
  %v1743 = vmul.f32 %v1736, %v1523
  %v1744 = vadd.f32 %v1742, %v1743
  %v1745 = vpack.c.bf16 %v1744, %v1744
  %1746 = vmatpush.bf16.msra.mxu0 %v1057
  %1747 = vmatpush.bf16.msra.mxu0 %v1054
  %1748 = vmatpush.bf16.msra.mxu0 %v1051
  %1749 = vmatpush.bf16.msra.mxu0 %v1048
  %1750 = vmatpush.bf16.msra.mxu0 %v1045
  %1751 = vmatpush.bf16.msra.mxu0 %v1042
  %1752 = vmatpush.bf16.msra.mxu0 %v1039
  %1753 = vmatpush.bf16.msra.mxu0 %v1036
  %1754 = vmatmul.bf16.gmra.mxu0 %v1745
  %v1755 = vpop.f32.mrf.mxu0
  %v1756 = vadd.f32 %v555, %v1755
  %v1757 = vpop.f32.mrf.mxu0
  %1758 = vdwg.mxu0
  %1759 = vmatpush.bf16.msra.mxu0 %v1058
  %1760 = vmatpush.bf16.msra.mxu0 %v1055
  %1761 = vmatpush.bf16.msra.mxu0 %v1052
  %1762 = vmatpush.bf16.msra.mxu0 %v1049
  %1763 = vmatpush.bf16.msra.mxu0 %v1046
  %1764 = vmatpush.bf16.msra.mxu0 %v1043
  %1765 = vmatpush.bf16.msra.mxu0 %v1040
  %1766 = vmatpush.bf16.msra.mxu0 %v1037
  %1767 = vmatmul.bf16.gmra.mxu0 %v1745
  %v1768 = vpop.f32.mrf.mxu0
  %v1769 = vadd.f32 %v556, %v1768
  %v1770 = vpop.f32.mrf.mxu0
  %1771 = vdwg.mxu0
  %1772 = vmatpush.bf16.msra.mxu0 %v1059
  %1773 = vmatpush.bf16.msra.mxu0 %v1056
  %1774 = vmatpush.bf16.msra.mxu0 %v1053
  %1775 = vmatpush.bf16.msra.mxu0 %v1050
  %1776 = vmatpush.bf16.msra.mxu0 %v1047
  %1777 = vmatpush.bf16.msra.mxu0 %v1044
  %1778 = vmatpush.bf16.msra.mxu0 %v1041
  %1779 = vmatpush.bf16.msra.mxu0 %v1038
  %1780 = vmatmul.bf16.gmra.mxu0 %v1745
  %v1781 = vpop.f32.mrf.mxu0
  %v1782 = vadd.f32 %v557, %v1781
  %v1783 = vpop.f32.mrf.mxu0
  %1784 = vdwg.mxu0
  %v1785 = vadd.f32 %v1756, %v1664
  %v1786 = vadd.f32 %v1769, %v1677
  %v1787 = vxor.u32 %v1785, 2147483648
  %v1788 = vxor.u32 %v1786, 2147483648
  %v1789 = vmul.f32 %v1787, 1.442695
  %v1790 = vpow.pop %v1789
  %v1791 = vmul.f32 %v1788, 1.442695
  %v1792 = vpow.pop %v1791
  %v1793 = vadd.f32 %v1790, 1.0
  %v1794 = vadd.f32 %v1792, 1.0
  %v1795 = vrcp.pop %v1793
  %v1796 = vmul.f32 %v1793, %v1795
  %v1797 = vsub.f32 1.0, %v1796
  %v1798 = vmul.f32 %v1795, %v1797
  %v1799 = vadd.f32 %v1795, %v1798
  %vm1800 = vweird.f32 %v1793
  %vm1801 = vweird.f32 %v1795
  %vm1802 = vmor %vm1800, %vm1801
  %v1803 = vsel %vm1802, %v1795, %v1799
  %v1804 = vand.u32 2147483647, %v1793
  %vm1805 = vcmp.eq.f32.partialorder %v1804, 8.507059e+37
  %v1806 = vand.u32 %v1793, 2147483648
  %v1807 = vor.u32 1.1754944e-38, %v1806
  %v1808 = vsel %vm1805, %v1807, %v1803
  %v1809 = vmul.f32 1.0, %v1808
  %v1810 = vrcp.pop %v1794
  %v1811 = vmul.f32 %v1794, %v1810
  %v1812 = vsub.f32 1.0, %v1811
  %v1813 = vmul.f32 %v1810, %v1812
  %v1814 = vadd.f32 %v1810, %v1813
  %vm1815 = vweird.f32 %v1794
  %vm1816 = vweird.f32 %v1810
  %vm1817 = vmor %vm1815, %vm1816
  %v1818 = vsel %vm1817, %v1810, %v1814
  %v1819 = vand.u32 2147483647, %v1794
  %vm1820 = vcmp.eq.f32.partialorder %v1819, 8.507059e+37
  %v1821 = vand.u32 %v1794, 2147483648
  %v1822 = vor.u32 1.1754944e-38, %v1821
  %v1823 = vsel %vm1820, %v1822, %v1818
  %v1824 = vmul.f32 1.0, %v1823
  %v1825 = vadd.f32 %v1690, %v563
  %v1826 = vmul.f32 %v1809, %v1825
  %v1827 = vadd.f32 %v1782, %v1826
  %v1828 = vtanh.pop %v1827
  %v1829 = vsub.f32 1.0, %v1824
  %v1830 = vmul.f32 %v1829, %v1828
  %v1831 = vmul.f32 %v1824, %v1611
  %v1832 = vadd.f32 %v1830, %v1831
  %s1833 = scalar_lea.vmem [#allocation3], 24
  %1834 = vst [vmem:[%s1833] sm:$0xff] %v1832
  %1835 = vmatpush.bf16.msra.mxu0 %v670
  %1836 = vmatpush.bf16.msra.mxu0 %v667
  %1837 = vmatpush.bf16.msra.mxu0 %v664
  %1838 = vmatpush.bf16.msra.mxu0 %v661
  %1839 = vmatpush.bf16.msra.mxu0 %v658
  %1840 = vmatpush.bf16.msra.mxu0 %v655
  %1841 = vmatpush.bf16.msra.mxu0 %v652
  %1842 = vmatpush.bf16.msra.mxu0 %v649
  %1843 = vmatmul.bf16.gmra.mxu0 %v1745
  %v1844 = vpop.f32.mrf.mxu0
  %v1845 = vadd.f32 0.0, %v1844
  %v1846 = vpop.f32.mrf.mxu0
  %1847 = vdwg.mxu0
  %1848 = vmatpush.bf16.msra.mxu0 %v671
  %1849 = vmatpush.bf16.msra.mxu0 %v668
  %1850 = vmatpush.bf16.msra.mxu0 %v665
  %1851 = vmatpush.bf16.msra.mxu0 %v662
  %1852 = vmatpush.bf16.msra.mxu0 %v659
  %1853 = vmatpush.bf16.msra.mxu0 %v656
  %1854 = vmatpush.bf16.msra.mxu0 %v653
  %1855 = vmatpush.bf16.msra.mxu0 %v650
  %1856 = vmatmul.bf16.gmra.mxu0 %v1745
  %v1857 = vpop.f32.mrf.mxu0
  %v1858 = vadd.f32 0.0, %v1857
  %v1859 = vpop.f32.mrf.mxu0
  %1860 = vdwg.mxu0
  %1861 = vmatpush.bf16.msra.mxu0 %v672
  %1862 = vmatpush.bf16.msra.mxu0 %v669
  %1863 = vmatpush.bf16.msra.mxu0 %v666
  %1864 = vmatpush.bf16.msra.mxu0 %v663
  %1865 = vmatpush.bf16.msra.mxu0 %v660
  %1866 = vmatpush.bf16.msra.mxu0 %v657
  %1867 = vmatpush.bf16.msra.mxu0 %v654
  %1868 = vmatpush.bf16.msra.mxu0 %v651
  %1869 = vmatmul.bf16.gmra.mxu0 %v1745
  %v1870 = vpop.f32.mrf.mxu0
  %v1871 = vadd.f32 0.0, %v1870
  %v1872 = vpop.f32.mrf.mxu0
  %1873 = vdwg.mxu0
  %v1874 = vpack.c.bf16 %v1832, %v1832
  %1875 = vmatpush.bf16.msra.mxu0 %v838
  %1876 = vmatpush.bf16.msra.mxu0 %v835
  %1877 = vmatpush.bf16.msra.mxu0 %v832
  %1878 = vmatpush.bf16.msra.mxu0 %v829
  %1879 = vmatpush.bf16.msra.mxu0 %v826
  %1880 = vmatpush.bf16.msra.mxu0 %v823
  %1881 = vmatpush.bf16.msra.mxu0 %v820
  %1882 = vmatpush.bf16.msra.mxu0 %v817
  %1883 = vmatmul.bf16.gmra.mxu0 %v1874
  %v1884 = vpop.f32.mrf.mxu0
  %v1885 = vadd.f32 0.0, %v1884
  %v1886 = vpop.f32.mrf.mxu0
  %1887 = vdwg.mxu0
  %1888 = vmatpush.bf16.msra.mxu0 %v839
  %1889 = vmatpush.bf16.msra.mxu0 %v836
  %1890 = vmatpush.bf16.msra.mxu0 %v833
  %1891 = vmatpush.bf16.msra.mxu0 %v830
  %1892 = vmatpush.bf16.msra.mxu0 %v827
  %1893 = vmatpush.bf16.msra.mxu0 %v824
  %1894 = vmatpush.bf16.msra.mxu0 %v821
  %1895 = vmatpush.bf16.msra.mxu0 %v818
  %1896 = vmatmul.bf16.gmra.mxu0 %v1874
  %v1897 = vpop.f32.mrf.mxu0
  %v1898 = vadd.f32 0.0, %v1897
  %v1899 = vpop.f32.mrf.mxu0
  %1900 = vdwg.mxu0
  %1901 = vmatpush.bf16.msra.mxu0 %v840
  %1902 = vmatpush.bf16.msra.mxu0 %v837
  %1903 = vmatpush.bf16.msra.mxu0 %v834
  %1904 = vmatpush.bf16.msra.mxu0 %v831
  %1905 = vmatpush.bf16.msra.mxu0 %v828
  %1906 = vmatpush.bf16.msra.mxu0 %v825
  %1907 = vmatpush.bf16.msra.mxu0 %v822
  %1908 = vmatpush.bf16.msra.mxu0 %v819
  %1909 = vmatmul.bf16.gmra.mxu0 %v1874
  %v1910 = vpop.f32.mrf.mxu0
  %v1911 = vadd.f32 0.0, %v1910
  %v1912 = vpop.f32.mrf.mxu0
  %1913 = vdwg.mxu0
  %s1914 = scalar_lea.vmem [#allocation2], 96
  %v1915 = vld [vmem:[%s1914] sm:$0xff]
  %v1916 = vld [vmem:[%s1914 + $0x8] sm:$0xff]
  %v1917 = vld [vmem:[%s1914 + $0x10] sm:$0xff]
  %v1918 = vadd.f32 %v1915, %v1845
  %v1919 = vadd.f32 %v1916, %v1858
  %v1920 = vxor.u32 %v1918, 2147483648
  %v1921 = vxor.u32 %v1919, 2147483648
  %v1922 = vmul.f32 %v1920, 1.442695
  %v1923 = vpow.pop %v1922
  %v1924 = vmul.f32 %v1921, 1.442695
  %v1925 = vpow.pop %v1924
  %v1926 = vadd.f32 %v1923, 1.0
  %v1927 = vadd.f32 %v1925, 1.0
  %v1928 = vrcp.pop %v1926
  %v1929 = vmul.f32 %v1926, %v1928
  %v1930 = vsub.f32 1.0, %v1929
  %v1931 = vmul.f32 %v1928, %v1930
  %v1932 = vadd.f32 %v1928, %v1931
  %vm1933 = vweird.f32 %v1926
  %vm1934 = vweird.f32 %v1928
  %vm1935 = vmor %vm1933, %vm1934
  %v1936 = vsel %vm1935, %v1928, %v1932
  %v1937 = vand.u32 2147483647, %v1926
  %vm1938 = vcmp.eq.f32.partialorder %v1937, 8.507059e+37
  %v1939 = vand.u32 %v1926, 2147483648
  %v1940 = vor.u32 1.1754944e-38, %v1939
  %v1941 = vsel %vm1938, %v1940, %v1936
  %v1942 = vmul.f32 1.0, %v1941
  %v1943 = vrcp.pop %v1927
  %v1944 = vmul.f32 %v1927, %v1943
  %v1945 = vsub.f32 1.0, %v1944
  %v1946 = vmul.f32 %v1943, %v1945
  %v1947 = vadd.f32 %v1943, %v1946
  %vm1948 = vweird.f32 %v1927
  %vm1949 = vweird.f32 %v1943
  %vm1950 = vmor %vm1948, %vm1949
  %v1951 = vsel %vm1950, %v1943, %v1947
  %v1952 = vand.u32 2147483647, %v1927
  %vm1953 = vcmp.eq.f32.partialorder %v1952, 8.507059e+37
  %v1954 = vand.u32 %v1927, 2147483648
  %v1955 = vor.u32 1.1754944e-38, %v1954
  %v1956 = vsel %vm1953, %v1955, %v1951
  %v1957 = vmul.f32 1.0, %v1956
  %v1958 = vadd.f32 %v1871, %v551
  %v1959 = vmul.f32 %v1942, %v1958
  %v1960 = vadd.f32 %v1917, %v1959
  %v1961 = vtanh.pop %v1960
  %v1962 = vsub.f32 1.0, %v1957
  %v1963 = vmul.f32 %v1962, %v1961
  %v1964 = vmul.f32 %v1957, %v1744
  %v1965 = vadd.f32 %v1963, %v1964
  %v1966 = vpack.c.bf16 %v1965, %v1965
  %1967 = vmatpush.bf16.msra.mxu0 %v1057
  %1968 = vmatpush.bf16.msra.mxu0 %v1054
  %1969 = vmatpush.bf16.msra.mxu0 %v1051
  %1970 = vmatpush.bf16.msra.mxu0 %v1048
  %1971 = vmatpush.bf16.msra.mxu0 %v1045
  %1972 = vmatpush.bf16.msra.mxu0 %v1042
  %1973 = vmatpush.bf16.msra.mxu0 %v1039
  %1974 = vmatpush.bf16.msra.mxu0 %v1036
  %1975 = vmatmul.bf16.gmra.mxu0 %v1966
  %v1976 = vpop.f32.mrf.mxu0
  %v1977 = vadd.f32 %v555, %v1976
  %v1978 = vpop.f32.mrf.mxu0
  %1979 = vdwg.mxu0
  %1980 = vmatpush.bf16.msra.mxu0 %v1058
  %1981 = vmatpush.bf16.msra.mxu0 %v1055
  %1982 = vmatpush.bf16.msra.mxu0 %v1052
  %1983 = vmatpush.bf16.msra.mxu0 %v1049
  %1984 = vmatpush.bf16.msra.mxu0 %v1046
  %1985 = vmatpush.bf16.msra.mxu0 %v1043
  %1986 = vmatpush.bf16.msra.mxu0 %v1040
  %1987 = vmatpush.bf16.msra.mxu0 %v1037
  %1988 = vmatmul.bf16.gmra.mxu0 %v1966
  %v1989 = vpop.f32.mrf.mxu0
  %v1990 = vadd.f32 %v556, %v1989
  %v1991 = vpop.f32.mrf.mxu0
  %1992 = vdwg.mxu0
  %1993 = vmatpush.bf16.msra.mxu0 %v1059
  %1994 = vmatpush.bf16.msra.mxu0 %v1056
  %1995 = vmatpush.bf16.msra.mxu0 %v1053
  %1996 = vmatpush.bf16.msra.mxu0 %v1050
  %1997 = vmatpush.bf16.msra.mxu0 %v1047
  %1998 = vmatpush.bf16.msra.mxu0 %v1044
  %1999 = vmatpush.bf16.msra.mxu0 %v1041
  %2000 = vmatpush.bf16.msra.mxu0 %v1038
  %2001 = vmatmul.bf16.gmra.mxu0 %v1966
  %v2002 = vpop.f32.mrf.mxu0
  %v2003 = vadd.f32 %v557, %v2002
  %v2004 = vpop.f32.mrf.mxu0
  %2005 = vdwg.mxu0
  %v2006 = vadd.f32 %v1977, %v1885
  %v2007 = vadd.f32 %v1990, %v1898
  %v2008 = vxor.u32 %v2006, 2147483648
  %v2009 = vxor.u32 %v2007, 2147483648
  %v2010 = vmul.f32 %v2008, 1.442695
  %v2011 = vpow.pop %v2010
  %v2012 = vmul.f32 %v2009, 1.442695
  %v2013 = vpow.pop %v2012
  %v2014 = vadd.f32 %v2011, 1.0
  %v2015 = vadd.f32 %v2013, 1.0
  %v2016 = vrcp.pop %v2014
  %v2017 = vmul.f32 %v2014, %v2016
  %v2018 = vsub.f32 1.0, %v2017
  %v2019 = vmul.f32 %v2016, %v2018
  %v2020 = vadd.f32 %v2016, %v2019
  %vm2021 = vweird.f32 %v2014
  %vm2022 = vweird.f32 %v2016
  %vm2023 = vmor %vm2021, %vm2022
  %v2024 = vsel %vm2023, %v2016, %v2020
  %v2025 = vand.u32 2147483647, %v2014
  %vm2026 = vcmp.eq.f32.partialorder %v2025, 8.507059e+37
  %v2027 = vand.u32 %v2014, 2147483648
  %v2028 = vor.u32 1.1754944e-38, %v2027
  %v2029 = vsel %vm2026, %v2028, %v2024
  %v2030 = vmul.f32 1.0, %v2029
  %v2031 = vrcp.pop %v2015
  %v2032 = vmul.f32 %v2015, %v2031
  %v2033 = vsub.f32 1.0, %v2032
  %v2034 = vmul.f32 %v2031, %v2033
  %v2035 = vadd.f32 %v2031, %v2034
  %vm2036 = vweird.f32 %v2015
  %vm2037 = vweird.f32 %v2031
  %vm2038 = vmor %vm2036, %vm2037
  %v2039 = vsel %vm2038, %v2031, %v2035
  %v2040 = vand.u32 2147483647, %v2015
  %vm2041 = vcmp.eq.f32.partialorder %v2040, 8.507059e+37
  %v2042 = vand.u32 %v2015, 2147483648
  %v2043 = vor.u32 1.1754944e-38, %v2042
  %v2044 = vsel %vm2041, %v2043, %v2039
  %v2045 = vmul.f32 1.0, %v2044
  %v2046 = vadd.f32 %v1911, %v563
  %v2047 = vmul.f32 %v2030, %v2046
  %v2048 = vadd.f32 %v2003, %v2047
  %v2049 = vtanh.pop %v2048
  %v2050 = vsub.f32 1.0, %v2045
  %v2051 = vmul.f32 %v2050, %v2049
  %v2052 = vmul.f32 %v2045, %v1832
  %v2053 = vadd.f32 %v2051, %v2052
  %s2054 = scalar_lea.vmem [#allocation3], 32
  %2055 = vst [vmem:[%s2054] sm:$0xff] %v2053
  %2056 = vmatpush.bf16.msra.mxu0 %v670
  %2057 = vmatpush.bf16.msra.mxu0 %v667
  %2058 = vmatpush.bf16.msra.mxu0 %v664
  %2059 = vmatpush.bf16.msra.mxu0 %v661
  %2060 = vmatpush.bf16.msra.mxu0 %v658
  %2061 = vmatpush.bf16.msra.mxu0 %v655
  %2062 = vmatpush.bf16.msra.mxu0 %v652
  %2063 = vmatpush.bf16.msra.mxu0 %v649
  %2064 = vmatmul.bf16.gmra.mxu0 %v1966
  %v2065 = vpop.f32.mrf.mxu0
  %v2066 = vadd.f32 0.0, %v2065
  %v2067 = vpop.f32.mrf.mxu0
  %2068 = vdwg.mxu0
  %2069 = vmatpush.bf16.msra.mxu0 %v671
  %2070 = vmatpush.bf16.msra.mxu0 %v668
  %2071 = vmatpush.bf16.msra.mxu0 %v665
  %2072 = vmatpush.bf16.msra.mxu0 %v662
  %2073 = vmatpush.bf16.msra.mxu0 %v659
  %2074 = vmatpush.bf16.msra.mxu0 %v656
  %2075 = vmatpush.bf16.msra.mxu0 %v653
  %2076 = vmatpush.bf16.msra.mxu0 %v650
  %2077 = vmatmul.bf16.gmra.mxu0 %v1966
  %v2078 = vpop.f32.mrf.mxu0
  %v2079 = vadd.f32 0.0, %v2078
  %v2080 = vpop.f32.mrf.mxu0
  %2081 = vdwg.mxu0
  %2082 = vmatpush.bf16.msra.mxu0 %v672
  %2083 = vmatpush.bf16.msra.mxu0 %v669
  %2084 = vmatpush.bf16.msra.mxu0 %v666
  %2085 = vmatpush.bf16.msra.mxu0 %v663
  %2086 = vmatpush.bf16.msra.mxu0 %v660
  %2087 = vmatpush.bf16.msra.mxu0 %v657
  %2088 = vmatpush.bf16.msra.mxu0 %v654
  %2089 = vmatpush.bf16.msra.mxu0 %v651
  %2090 = vmatmul.bf16.gmra.mxu0 %v1966
  %v2091 = vpop.f32.mrf.mxu0
  %v2092 = vadd.f32 0.0, %v2091
  %v2093 = vpop.f32.mrf.mxu0
  %2094 = vdwg.mxu0
  %v2095 = vpack.c.bf16 %v2053, %v2053
  %2096 = vmatpush.bf16.msra.mxu0 %v838
  %2097 = vmatpush.bf16.msra.mxu0 %v835
  %2098 = vmatpush.bf16.msra.mxu0 %v832
  %2099 = vmatpush.bf16.msra.mxu0 %v829
  %2100 = vmatpush.bf16.msra.mxu0 %v826
  %2101 = vmatpush.bf16.msra.mxu0 %v823
  %2102 = vmatpush.bf16.msra.mxu0 %v820
  %2103 = vmatpush.bf16.msra.mxu0 %v817
  %2104 = vmatmul.bf16.gmra.mxu0 %v2095
  %v2105 = vpop.f32.mrf.mxu0
  %v2106 = vadd.f32 0.0, %v2105
  %v2107 = vpop.f32.mrf.mxu0
  %2108 = vdwg.mxu0
  %2109 = vmatpush.bf16.msra.mxu0 %v839
  %2110 = vmatpush.bf16.msra.mxu0 %v836
  %2111 = vmatpush.bf16.msra.mxu0 %v833
  %2112 = vmatpush.bf16.msra.mxu0 %v830
  %2113 = vmatpush.bf16.msra.mxu0 %v827
  %2114 = vmatpush.bf16.msra.mxu0 %v824
  %2115 = vmatpush.bf16.msra.mxu0 %v821
  %2116 = vmatpush.bf16.msra.mxu0 %v818
  %2117 = vmatmul.bf16.gmra.mxu0 %v2095
  %v2118 = vpop.f32.mrf.mxu0
  %v2119 = vadd.f32 0.0, %v2118
  %v2120 = vpop.f32.mrf.mxu0
  %2121 = vdwg.mxu0
  %2122 = vmatpush.bf16.msra.mxu0 %v840
  %2123 = vmatpush.bf16.msra.mxu0 %v837
  %2124 = vmatpush.bf16.msra.mxu0 %v834
  %2125 = vmatpush.bf16.msra.mxu0 %v831
  %2126 = vmatpush.bf16.msra.mxu0 %v828
  %2127 = vmatpush.bf16.msra.mxu0 %v825
  %2128 = vmatpush.bf16.msra.mxu0 %v822
  %2129 = vmatpush.bf16.msra.mxu0 %v819
  %2130 = vmatmul.bf16.gmra.mxu0 %v2095
  %v2131 = vpop.f32.mrf.mxu0
  %v2132 = vadd.f32 0.0, %v2131
  %v2133 = vpop.f32.mrf.mxu0
  %2134 = vdwg.mxu0
  %s2135 = scalar_lea.vmem [#allocation2], 120
  %v2136 = vld [vmem:[%s2135] sm:$0xff]
  %v2137 = vld [vmem:[%s2135 + $0x8] sm:$0xff]
  %v2138 = vld [vmem:[%s2135 + $0x10] sm:$0xff]
  %v2139 = vadd.f32 %v2136, %v2066
  %v2140 = vadd.f32 %v2137, %v2079
  %v2141 = vxor.u32 %v2139, 2147483648
  %v2142 = vxor.u32 %v2140, 2147483648
  %v2143 = vmul.f32 %v2141, 1.442695
  %v2144 = vpow.pop %v2143
  %v2145 = vmul.f32 %v2142, 1.442695
  %v2146 = vpow.pop %v2145
  %v2147 = vadd.f32 %v2144, 1.0
  %v2148 = vadd.f32 %v2146, 1.0
  %v2149 = vrcp.pop %v2147
  %v2150 = vmul.f32 %v2147, %v2149
  %v2151 = vsub.f32 1.0, %v2150
  %v2152 = vmul.f32 %v2149, %v2151
  %v2153 = vadd.f32 %v2149, %v2152
  %vm2154 = vweird.f32 %v2147
  %vm2155 = vweird.f32 %v2149
  %vm2156 = vmor %vm2154, %vm2155
  %v2157 = vsel %vm2156, %v2149, %v2153
  %v2158 = vand.u32 2147483647, %v2147
  %vm2159 = vcmp.eq.f32.partialorder %v2158, 8.507059e+37
  %v2160 = vand.u32 %v2147, 2147483648
  %v2161 = vor.u32 1.1754944e-38, %v2160
  %v2162 = vsel %vm2159, %v2161, %v2157
  %v2163 = vmul.f32 1.0, %v2162
  %v2164 = vrcp.pop %v2148
  %v2165 = vmul.f32 %v2148, %v2164
  %v2166 = vsub.f32 1.0, %v2165
  %v2167 = vmul.f32 %v2164, %v2166
  %v2168 = vadd.f32 %v2164, %v2167
  %vm2169 = vweird.f32 %v2148
  %vm2170 = vweird.f32 %v2164
  %vm2171 = vmor %vm2169, %vm2170
  %v2172 = vsel %vm2171, %v2164, %v2168
  %v2173 = vand.u32 2147483647, %v2148
  %vm2174 = vcmp.eq.f32.partialorder %v2173, 8.507059e+37
  %v2175 = vand.u32 %v2148, 2147483648
  %v2176 = vor.u32 1.1754944e-38, %v2175
  %v2177 = vsel %vm2174, %v2176, %v2172
  %v2178 = vmul.f32 1.0, %v2177
  %v2179 = vadd.f32 %v2092, %v551
  %v2180 = vmul.f32 %v2163, %v2179
  %v2181 = vadd.f32 %v2138, %v2180
  %v2182 = vtanh.pop %v2181
  %v2183 = vsub.f32 1.0, %v2178
  %v2184 = vmul.f32 %v2183, %v2182
  %v2185 = vmul.f32 %v2178, %v1965
  %v2186 = vadd.f32 %v2184, %v2185
  %v2187 = vpack.c.bf16 %v2186, %v2186
  %2188 = vmatpush.bf16.msra.mxu0 %v1057
  %2189 = vmatpush.bf16.msra.mxu0 %v1054
  %2190 = vmatpush.bf16.msra.mxu0 %v1051
  %2191 = vmatpush.bf16.msra.mxu0 %v1048
  %2192 = vmatpush.bf16.msra.mxu0 %v1045
  %2193 = vmatpush.bf16.msra.mxu0 %v1042
  %2194 = vmatpush.bf16.msra.mxu0 %v1039
  %2195 = vmatpush.bf16.msra.mxu0 %v1036
  %2196 = vmatmul.bf16.gmra.mxu0 %v2187
  %v2197 = vpop.f32.mrf.mxu0
  %v2198 = vadd.f32 %v555, %v2197
  %v2199 = vpop.f32.mrf.mxu0
  %2200 = vdwg.mxu0
  %2201 = vmatpush.bf16.msra.mxu0 %v1058
  %2202 = vmatpush.bf16.msra.mxu0 %v1055
  %2203 = vmatpush.bf16.msra.mxu0 %v1052
  %2204 = vmatpush.bf16.msra.mxu0 %v1049
  %2205 = vmatpush.bf16.msra.mxu0 %v1046
  %2206 = vmatpush.bf16.msra.mxu0 %v1043
  %2207 = vmatpush.bf16.msra.mxu0 %v1040
  %2208 = vmatpush.bf16.msra.mxu0 %v1037
  %2209 = vmatmul.bf16.gmra.mxu0 %v2187
  %v2210 = vpop.f32.mrf.mxu0
  %v2211 = vadd.f32 %v556, %v2210
  %v2212 = vpop.f32.mrf.mxu0
  %2213 = vdwg.mxu0
  %2214 = vmatpush.bf16.msra.mxu0 %v1059
  %2215 = vmatpush.bf16.msra.mxu0 %v1056
  %2216 = vmatpush.bf16.msra.mxu0 %v1053
  %2217 = vmatpush.bf16.msra.mxu0 %v1050
  %2218 = vmatpush.bf16.msra.mxu0 %v1047
  %2219 = vmatpush.bf16.msra.mxu0 %v1044
  %2220 = vmatpush.bf16.msra.mxu0 %v1041
  %2221 = vmatpush.bf16.msra.mxu0 %v1038
  %2222 = vmatmul.bf16.gmra.mxu0 %v2187
  %v2223 = vpop.f32.mrf.mxu0
  %v2224 = vadd.f32 %v557, %v2223
  %v2225 = vpop.f32.mrf.mxu0
  %2226 = vdwg.mxu0
  %v2227 = vadd.f32 %v2198, %v2106
  %v2228 = vadd.f32 %v2211, %v2119
  %v2229 = vxor.u32 %v2227, 2147483648
  %v2230 = vxor.u32 %v2228, 2147483648
  %v2231 = vmul.f32 %v2229, 1.442695
  %v2232 = vpow.pop %v2231
  %v2233 = vmul.f32 %v2230, 1.442695
  %v2234 = vpow.pop %v2233
  %v2235 = vadd.f32 %v2232, 1.0
  %v2236 = vadd.f32 %v2234, 1.0
  %v2237 = vrcp.pop %v2235
  %v2238 = vmul.f32 %v2235, %v2237
  %v2239 = vsub.f32 1.0, %v2238
  %v2240 = vmul.f32 %v2237, %v2239
  %v2241 = vadd.f32 %v2237, %v2240
  %vm2242 = vweird.f32 %v2235
  %vm2243 = vweird.f32 %v2237
  %vm2244 = vmor %vm2242, %vm2243
  %v2245 = vsel %vm2244, %v2237, %v2241
  %v2246 = vand.u32 2147483647, %v2235
  %vm2247 = vcmp.eq.f32.partialorder %v2246, 8.507059e+37
  %v2248 = vand.u32 %v2235, 2147483648
  %v2249 = vor.u32 1.1754944e-38, %v2248
  %v2250 = vsel %vm2247, %v2249, %v2245
  %v2251 = vmul.f32 1.0, %v2250
  %v2252 = vrcp.pop %v2236
  %v2253 = vmul.f32 %v2236, %v2252
  %v2254 = vsub.f32 1.0, %v2253
  %v2255 = vmul.f32 %v2252, %v2254
  %v2256 = vadd.f32 %v2252, %v2255
  %vm2257 = vweird.f32 %v2236
  %vm2258 = vweird.f32 %v2252
  %vm2259 = vmor %vm2257, %vm2258
  %v2260 = vsel %vm2259, %v2252, %v2256
  %v2261 = vand.u32 2147483647, %v2236
  %vm2262 = vcmp.eq.f32.partialorder %v2261, 8.507059e+37
  %v2263 = vand.u32 %v2236, 2147483648
  %v2264 = vor.u32 1.1754944e-38, %v2263
  %v2265 = vsel %vm2262, %v2264, %v2260
  %v2266 = vmul.f32 1.0, %v2265
  %v2267 = vadd.f32 %v2132, %v563
  %v2268 = vmul.f32 %v2251, %v2267
  %v2269 = vadd.f32 %v2224, %v2268
  %v2270 = vtanh.pop %v2269
  %v2271 = vsub.f32 1.0, %v2266
  %v2272 = vmul.f32 %v2271, %v2270
  %v2273 = vmul.f32 %v2266, %v2053
  %v2274 = vadd.f32 %v2272, %v2273
  %s2275 = scalar_lea.vmem [#allocation3], 40
  %2276 = vst [vmem:[%s2275] sm:$0xff] %v2274
  %2277 = vmatpush.bf16.msra.mxu0 %v670
  %2278 = vmatpush.bf16.msra.mxu0 %v667
  %2279 = vmatpush.bf16.msra.mxu0 %v664
  %2280 = vmatpush.bf16.msra.mxu0 %v661
  %2281 = vmatpush.bf16.msra.mxu0 %v658
  %2282 = vmatpush.bf16.msra.mxu0 %v655
  %2283 = vmatpush.bf16.msra.mxu0 %v652
  %2284 = vmatpush.bf16.msra.mxu0 %v649
  %2285 = vmatmul.bf16.gmra.mxu0 %v2187
  %v2286 = vpop.f32.mrf.mxu0
  %v2287 = vadd.f32 0.0, %v2286
  %v2288 = vpop.f32.mrf.mxu0
  %2289 = vdwg.mxu0
  %2290 = vmatpush.bf16.msra.mxu0 %v671
  %2291 = vmatpush.bf16.msra.mxu0 %v668
  %2292 = vmatpush.bf16.msra.mxu0 %v665
  %2293 = vmatpush.bf16.msra.mxu0 %v662
  %2294 = vmatpush.bf16.msra.mxu0 %v659
  %2295 = vmatpush.bf16.msra.mxu0 %v656
  %2296 = vmatpush.bf16.msra.mxu0 %v653
  %2297 = vmatpush.bf16.msra.mxu0 %v650
  %2298 = vmatmul.bf16.gmra.mxu0 %v2187
  %v2299 = vpop.f32.mrf.mxu0
  %v2300 = vadd.f32 0.0, %v2299
  %v2301 = vpop.f32.mrf.mxu0
  %2302 = vdwg.mxu0
  %2303 = vmatpush.bf16.msra.mxu0 %v672
  %2304 = vmatpush.bf16.msra.mxu0 %v669
  %2305 = vmatpush.bf16.msra.mxu0 %v666
  %2306 = vmatpush.bf16.msra.mxu0 %v663
  %2307 = vmatpush.bf16.msra.mxu0 %v660
  %2308 = vmatpush.bf16.msra.mxu0 %v657
  %2309 = vmatpush.bf16.msra.mxu0 %v654
  %2310 = vmatpush.bf16.msra.mxu0 %v651
  %2311 = vmatmul.bf16.gmra.mxu0 %v2187
  %v2312 = vpop.f32.mrf.mxu0
  %v2313 = vadd.f32 0.0, %v2312
  %v2314 = vpop.f32.mrf.mxu0
  %2315 = vdwg.mxu0
  %v2316 = vpack.c.bf16 %v2274, %v2274
  %2317 = vmatpush.bf16.msra.mxu0 %v838
  %2318 = vmatpush.bf16.msra.mxu0 %v835
  %2319 = vmatpush.bf16.msra.mxu0 %v832
  %2320 = vmatpush.bf16.msra.mxu0 %v829
  %2321 = vmatpush.bf16.msra.mxu0 %v826
  %2322 = vmatpush.bf16.msra.mxu0 %v823
  %2323 = vmatpush.bf16.msra.mxu0 %v820
  %2324 = vmatpush.bf16.msra.mxu0 %v817
  %2325 = vmatmul.bf16.gmra.mxu0 %v2316
  %v2326 = vpop.f32.mrf.mxu0
  %v2327 = vadd.f32 0.0, %v2326
  %v2328 = vpop.f32.mrf.mxu0
  %2329 = vdwg.mxu0
  %2330 = vmatpush.bf16.msra.mxu0 %v839
  %2331 = vmatpush.bf16.msra.mxu0 %v836
  %2332 = vmatpush.bf16.msra.mxu0 %v833
  %2333 = vmatpush.bf16.msra.mxu0 %v830
  %2334 = vmatpush.bf16.msra.mxu0 %v827
  %2335 = vmatpush.bf16.msra.mxu0 %v824
  %2336 = vmatpush.bf16.msra.mxu0 %v821
  %2337 = vmatpush.bf16.msra.mxu0 %v818
  %2338 = vmatmul.bf16.gmra.mxu0 %v2316
  %v2339 = vpop.f32.mrf.mxu0
  %v2340 = vadd.f32 0.0, %v2339
  %v2341 = vpop.f32.mrf.mxu0
  %2342 = vdwg.mxu0
  %2343 = vmatpush.bf16.msra.mxu0 %v840
  %2344 = vmatpush.bf16.msra.mxu0 %v837
  %2345 = vmatpush.bf16.msra.mxu0 %v834
  %2346 = vmatpush.bf16.msra.mxu0 %v831
  %2347 = vmatpush.bf16.msra.mxu0 %v828
  %2348 = vmatpush.bf16.msra.mxu0 %v825
  %2349 = vmatpush.bf16.msra.mxu0 %v822
  %2350 = vmatpush.bf16.msra.mxu0 %v819
  %2351 = vmatmul.bf16.gmra.mxu0 %v2316
  %v2352 = vpop.f32.mrf.mxu0
  %v2353 = vadd.f32 0.0, %v2352
  %v2354 = vpop.f32.mrf.mxu0
  %2355 = vdwg.mxu0
  %s2356 = scalar_lea.vmem [#allocation2], 144
  %v2357 = vld [vmem:[%s2356] sm:$0xff]
  %v2358 = vld [vmem:[%s2356 + $0x8] sm:$0xff]
  %v2359 = vld [vmem:[%s2356 + $0x10] sm:$0xff]
  %v2360 = vadd.f32 %v2357, %v2287
  %v2361 = vadd.f32 %v2358, %v2300
  %v2362 = vxor.u32 %v2360, 2147483648
  %v2363 = vxor.u32 %v2361, 2147483648
  %v2364 = vmul.f32 %v2362, 1.442695
  %v2365 = vpow.pop %v2364
  %v2366 = vmul.f32 %v2363, 1.442695
  %v2367 = vpow.pop %v2366
  %v2368 = vadd.f32 %v2365, 1.0
  %v2369 = vadd.f32 %v2367, 1.0
  %v2370 = vrcp.pop %v2368
  %v2371 = vmul.f32 %v2368, %v2370
  %v2372 = vsub.f32 1.0, %v2371
  %v2373 = vmul.f32 %v2370, %v2372
  %v2374 = vadd.f32 %v2370, %v2373
  %vm2375 = vweird.f32 %v2368
  %vm2376 = vweird.f32 %v2370
  %vm2377 = vmor %vm2375, %vm2376
  %v2378 = vsel %vm2377, %v2370, %v2374
  %v2379 = vand.u32 2147483647, %v2368
  %vm2380 = vcmp.eq.f32.partialorder %v2379, 8.507059e+37
  %v2381 = vand.u32 %v2368, 2147483648
  %v2382 = vor.u32 1.1754944e-38, %v2381
  %v2383 = vsel %vm2380, %v2382, %v2378
  %v2384 = vmul.f32 1.0, %v2383
  %v2385 = vrcp.pop %v2369
  %v2386 = vmul.f32 %v2369, %v2385
  %v2387 = vsub.f32 1.0, %v2386
  %v2388 = vmul.f32 %v2385, %v2387
  %v2389 = vadd.f32 %v2385, %v2388
  %vm2390 = vweird.f32 %v2369
  %vm2391 = vweird.f32 %v2385
  %vm2392 = vmor %vm2390, %vm2391
  %v2393 = vsel %vm2392, %v2385, %v2389
  %v2394 = vand.u32 2147483647, %v2369
  %vm2395 = vcmp.eq.f32.partialorder %v2394, 8.507059e+37
  %v2396 = vand.u32 %v2369, 2147483648
  %v2397 = vor.u32 1.1754944e-38, %v2396
  %v2398 = vsel %vm2395, %v2397, %v2393
  %v2399 = vmul.f32 1.0, %v2398
  %v2400 = vadd.f32 %v2313, %v551
  %v2401 = vmul.f32 %v2384, %v2400
  %v2402 = vadd.f32 %v2359, %v2401
  %v2403 = vtanh.pop %v2402
  %v2404 = vsub.f32 1.0, %v2399
  %v2405 = vmul.f32 %v2404, %v2403
  %v2406 = vmul.f32 %v2399, %v2186
  %v2407 = vadd.f32 %v2405, %v2406
  %v2408 = vpack.c.bf16 %v2407, %v2407
  %2409 = vmatpush.bf16.msra.mxu0 %v1057
  %2410 = vmatpush.bf16.msra.mxu0 %v1054
  %2411 = vmatpush.bf16.msra.mxu0 %v1051
  %2412 = vmatpush.bf16.msra.mxu0 %v1048
  %2413 = vmatpush.bf16.msra.mxu0 %v1045
  %2414 = vmatpush.bf16.msra.mxu0 %v1042
  %2415 = vmatpush.bf16.msra.mxu0 %v1039
  %2416 = vmatpush.bf16.msra.mxu0 %v1036
  %2417 = vmatmul.bf16.gmra.mxu0 %v2408
  %v2418 = vpop.f32.mrf.mxu0
  %v2419 = vadd.f32 %v555, %v2418
  %v2420 = vpop.f32.mrf.mxu0
  %2421 = vdwg.mxu0
  %2422 = vmatpush.bf16.msra.mxu0 %v1058
  %2423 = vmatpush.bf16.msra.mxu0 %v1055
  %2424 = vmatpush.bf16.msra.mxu0 %v1052
  %2425 = vmatpush.bf16.msra.mxu0 %v1049
  %2426 = vmatpush.bf16.msra.mxu0 %v1046
  %2427 = vmatpush.bf16.msra.mxu0 %v1043
  %2428 = vmatpush.bf16.msra.mxu0 %v1040
  %2429 = vmatpush.bf16.msra.mxu0 %v1037
  %2430 = vmatmul.bf16.gmra.mxu0 %v2408
  %v2431 = vpop.f32.mrf.mxu0
  %v2432 = vadd.f32 %v556, %v2431
  %v2433 = vpop.f32.mrf.mxu0
  %2434 = vdwg.mxu0
  %2435 = vmatpush.bf16.msra.mxu0 %v1059
  %2436 = vmatpush.bf16.msra.mxu0 %v1056
  %2437 = vmatpush.bf16.msra.mxu0 %v1053
  %2438 = vmatpush.bf16.msra.mxu0 %v1050
  %2439 = vmatpush.bf16.msra.mxu0 %v1047
  %2440 = vmatpush.bf16.msra.mxu0 %v1044
  %2441 = vmatpush.bf16.msra.mxu0 %v1041
  %2442 = vmatpush.bf16.msra.mxu0 %v1038
  %2443 = vmatmul.bf16.gmra.mxu0 %v2408
  %v2444 = vpop.f32.mrf.mxu0
  %v2445 = vadd.f32 %v557, %v2444
  %v2446 = vpop.f32.mrf.mxu0
  %2447 = vdwg.mxu0
  %v2448 = vadd.f32 %v2419, %v2327
  %v2449 = vadd.f32 %v2432, %v2340
  %v2450 = vxor.u32 %v2448, 2147483648
  %v2451 = vxor.u32 %v2449, 2147483648
  %v2452 = vmul.f32 %v2450, 1.442695
  %v2453 = vpow.pop %v2452
  %v2454 = vmul.f32 %v2451, 1.442695
  %v2455 = vpow.pop %v2454
  %v2456 = vadd.f32 %v2453, 1.0
  %v2457 = vadd.f32 %v2455, 1.0
  %v2458 = vrcp.pop %v2456
  %v2459 = vmul.f32 %v2456, %v2458
  %v2460 = vsub.f32 1.0, %v2459
  %v2461 = vmul.f32 %v2458, %v2460
  %v2462 = vadd.f32 %v2458, %v2461
  %vm2463 = vweird.f32 %v2456
  %vm2464 = vweird.f32 %v2458
  %vm2465 = vmor %vm2463, %vm2464
  %v2466 = vsel %vm2465, %v2458, %v2462
  %v2467 = vand.u32 2147483647, %v2456
  %vm2468 = vcmp.eq.f32.partialorder %v2467, 8.507059e+37
  %v2469 = vand.u32 %v2456, 2147483648
  %v2470 = vor.u32 1.1754944e-38, %v2469
  %v2471 = vsel %vm2468, %v2470, %v2466
  %v2472 = vmul.f32 1.0, %v2471
  %v2473 = vrcp.pop %v2457
  %v2474 = vmul.f32 %v2457, %v2473
  %v2475 = vsub.f32 1.0, %v2474
  %v2476 = vmul.f32 %v2473, %v2475
  %v2477 = vadd.f32 %v2473, %v2476
  %vm2478 = vweird.f32 %v2457
  %vm2479 = vweird.f32 %v2473
  %vm2480 = vmor %vm2478, %vm2479
  %v2481 = vsel %vm2480, %v2473, %v2477
  %v2482 = vand.u32 2147483647, %v2457
  %vm2483 = vcmp.eq.f32.partialorder %v2482, 8.507059e+37
  %v2484 = vand.u32 %v2457, 2147483648
  %v2485 = vor.u32 1.1754944e-38, %v2484
  %v2486 = vsel %vm2483, %v2485, %v2481
  %v2487 = vmul.f32 1.0, %v2486
  %v2488 = vadd.f32 %v2353, %v563
  %v2489 = vmul.f32 %v2472, %v2488
  %v2490 = vadd.f32 %v2445, %v2489
  %v2491 = vtanh.pop %v2490
  %v2492 = vsub.f32 1.0, %v2487
  %v2493 = vmul.f32 %v2492, %v2491
  %v2494 = vmul.f32 %v2487, %v2274
  %v2495 = vadd.f32 %v2493, %v2494
  %s2496 = scalar_lea.vmem [#allocation3], 48
  %2497 = vst [vmem:[%s2496] sm:$0xff] %v2495
  %2498 = vmatpush.bf16.msra.mxu0 %v670
  %2499 = vmatpush.bf16.msra.mxu0 %v667
  %2500 = vmatpush.bf16.msra.mxu0 %v664
  %2501 = vmatpush.bf16.msra.mxu0 %v661
  %2502 = vmatpush.bf16.msra.mxu0 %v658
  %2503 = vmatpush.bf16.msra.mxu0 %v655
  %2504 = vmatpush.bf16.msra.mxu0 %v652
  %2505 = vmatpush.bf16.msra.mxu0 %v649
  %2506 = vmatmul.bf16.gmra.mxu0 %v2408
  %v2507 = vpop.f32.mrf.mxu0
  %v2508 = vadd.f32 0.0, %v2507
  %v2509 = vpop.f32.mrf.mxu0
  %2510 = vdwg.mxu0
  %2511 = vmatpush.bf16.msra.mxu0 %v671
  %2512 = vmatpush.bf16.msra.mxu0 %v668
  %2513 = vmatpush.bf16.msra.mxu0 %v665
  %2514 = vmatpush.bf16.msra.mxu0 %v662
  %2515 = vmatpush.bf16.msra.mxu0 %v659
  %2516 = vmatpush.bf16.msra.mxu0 %v656
  %2517 = vmatpush.bf16.msra.mxu0 %v653
  %2518 = vmatpush.bf16.msra.mxu0 %v650
  %2519 = vmatmul.bf16.gmra.mxu0 %v2408
  %v2520 = vpop.f32.mrf.mxu0
  %v2521 = vadd.f32 0.0, %v2520
  %v2522 = vpop.f32.mrf.mxu0
  %2523 = vdwg.mxu0
  %2524 = vmatpush.bf16.msra.mxu0 %v672
  %2525 = vmatpush.bf16.msra.mxu0 %v669
  %2526 = vmatpush.bf16.msra.mxu0 %v666
  %2527 = vmatpush.bf16.msra.mxu0 %v663
  %2528 = vmatpush.bf16.msra.mxu0 %v660
  %2529 = vmatpush.bf16.msra.mxu0 %v657
  %2530 = vmatpush.bf16.msra.mxu0 %v654
  %2531 = vmatpush.bf16.msra.mxu0 %v651
  %2532 = vmatmul.bf16.gmra.mxu0 %v2408
  %v2533 = vpop.f32.mrf.mxu0
  %v2534 = vadd.f32 0.0, %v2533
  %v2535 = vpop.f32.mrf.mxu0
  %2536 = vdwg.mxu0
  %v2537 = vpack.c.bf16 %v2495, %v2495
  %2538 = vmatpush.bf16.msra.mxu0 %v838
  %2539 = vmatpush.bf16.msra.mxu0 %v835
  %2540 = vmatpush.bf16.msra.mxu0 %v832
  %2541 = vmatpush.bf16.msra.mxu0 %v829
  %2542 = vmatpush.bf16.msra.mxu0 %v826
  %2543 = vmatpush.bf16.msra.mxu0 %v823
  %2544 = vmatpush.bf16.msra.mxu0 %v820
  %2545 = vmatpush.bf16.msra.mxu0 %v817
  %2546 = vmatmul.bf16.gmra.mxu0 %v2537
  %v2547 = vpop.f32.mrf.mxu0
  %v2548 = vadd.f32 0.0, %v2547
  %v2549 = vpop.f32.mrf.mxu0
  %2550 = vdwg.mxu0
  %2551 = vmatpush.bf16.msra.mxu0 %v839
  %2552 = vmatpush.bf16.msra.mxu0 %v836
  %2553 = vmatpush.bf16.msra.mxu0 %v833
  %2554 = vmatpush.bf16.msra.mxu0 %v830
  %2555 = vmatpush.bf16.msra.mxu0 %v827
  %2556 = vmatpush.bf16.msra.mxu0 %v824
  %2557 = vmatpush.bf16.msra.mxu0 %v821
  %2558 = vmatpush.bf16.msra.mxu0 %v818
  %2559 = vmatmul.bf16.gmra.mxu0 %v2537
  %v2560 = vpop.f32.mrf.mxu0
  %v2561 = vadd.f32 0.0, %v2560
  %v2562 = vpop.f32.mrf.mxu0
  %2563 = vdwg.mxu0
  %2564 = vmatpush.bf16.msra.mxu0 %v840
  %2565 = vmatpush.bf16.msra.mxu0 %v837
  %2566 = vmatpush.bf16.msra.mxu0 %v834
  %2567 = vmatpush.bf16.msra.mxu0 %v831
  %2568 = vmatpush.bf16.msra.mxu0 %v828
  %2569 = vmatpush.bf16.msra.mxu0 %v825
  %2570 = vmatpush.bf16.msra.mxu0 %v822
  %2571 = vmatpush.bf16.msra.mxu0 %v819
  %2572 = vmatmul.bf16.gmra.mxu0 %v2537
  %v2573 = vpop.f32.mrf.mxu0
  %v2574 = vadd.f32 0.0, %v2573
  %v2575 = vpop.f32.mrf.mxu0
  %2576 = vdwg.mxu0
  %s2577 = scalar_lea.vmem [#allocation2], 168
  %v2578 = vld [vmem:[%s2577] sm:$0xff]
  %v2579 = vld [vmem:[%s2577 + $0x8] sm:$0xff]
  %v2580 = vld [vmem:[%s2577 + $0x10] sm:$0xff]
  %v2581 = vadd.f32 %v2578, %v2508
  %v2582 = vadd.f32 %v2579, %v2521
  %v2583 = vxor.u32 %v2581, 2147483648
  %v2584 = vxor.u32 %v2582, 2147483648
  %v2585 = vmul.f32 %v2583, 1.442695
  %v2586 = vpow.pop %v2585
  %v2587 = vmul.f32 %v2584, 1.442695
  %v2588 = vpow.pop %v2587
  %v2589 = vadd.f32 %v2586, 1.0
  %v2590 = vadd.f32 %v2588, 1.0
  %v2591 = vrcp.pop %v2589
  %v2592 = vmul.f32 %v2589, %v2591
  %v2593 = vsub.f32 1.0, %v2592
  %v2594 = vmul.f32 %v2591, %v2593
  %v2595 = vadd.f32 %v2591, %v2594
  %vm2596 = vweird.f32 %v2589
  %vm2597 = vweird.f32 %v2591
  %vm2598 = vmor %vm2596, %vm2597
  %v2599 = vsel %vm2598, %v2591, %v2595
  %v2600 = vand.u32 2147483647, %v2589
  %vm2601 = vcmp.eq.f32.partialorder %v2600, 8.507059e+37
  %v2602 = vand.u32 %v2589, 2147483648
  %v2603 = vor.u32 1.1754944e-38, %v2602
  %v2604 = vsel %vm2601, %v2603, %v2599
  %v2605 = vmul.f32 1.0, %v2604
  %v2606 = vrcp.pop %v2590
  %v2607 = vmul.f32 %v2590, %v2606
  %v2608 = vsub.f32 1.0, %v2607
  %v2609 = vmul.f32 %v2606, %v2608
  %v2610 = vadd.f32 %v2606, %v2609
  %vm2611 = vweird.f32 %v2590
  %vm2612 = vweird.f32 %v2606
  %vm2613 = vmor %vm2611, %vm2612
  %v2614 = vsel %vm2613, %v2606, %v2610
  %v2615 = vand.u32 2147483647, %v2590
  %vm2616 = vcmp.eq.f32.partialorder %v2615, 8.507059e+37
  %v2617 = vand.u32 %v2590, 2147483648
  %v2618 = vor.u32 1.1754944e-38, %v2617
  %v2619 = vsel %vm2616, %v2618, %v2614
  %v2620 = vmul.f32 1.0, %v2619
  %v2621 = vadd.f32 %v2534, %v551
  %v2622 = vmul.f32 %v2605, %v2621
  %v2623 = vadd.f32 %v2580, %v2622
  %v2624 = vtanh.pop %v2623
  %v2625 = vsub.f32 1.0, %v2620
  %v2626 = vmul.f32 %v2625, %v2624
  %v2627 = vmul.f32 %v2620, %v2407
  %v2628 = vadd.f32 %v2626, %v2627
  %v2629 = vpack.c.bf16 %v2628, %v2628
  %2630 = vmatpush.bf16.msra.mxu0 %v1057
  %2631 = vmatpush.bf16.msra.mxu0 %v1054
  %2632 = vmatpush.bf16.msra.mxu0 %v1051
  %2633 = vmatpush.bf16.msra.mxu0 %v1048
  %2634 = vmatpush.bf16.msra.mxu0 %v1045
  %2635 = vmatpush.bf16.msra.mxu0 %v1042
  %2636 = vmatpush.bf16.msra.mxu0 %v1039
  %2637 = vmatpush.bf16.msra.mxu0 %v1036
  %2638 = vmatmul.bf16.gmra.mxu0 %v2629
  %v2639 = vpop.f32.mrf.mxu0
  %v2640 = vadd.f32 %v555, %v2639
  %v2641 = vpop.f32.mrf.mxu0
  %2642 = vdwg.mxu0
  %2643 = vmatpush.bf16.msra.mxu0 %v1058
  %2644 = vmatpush.bf16.msra.mxu0 %v1055
  %2645 = vmatpush.bf16.msra.mxu0 %v1052
  %2646 = vmatpush.bf16.msra.mxu0 %v1049
  %2647 = vmatpush.bf16.msra.mxu0 %v1046
  %2648 = vmatpush.bf16.msra.mxu0 %v1043
  %2649 = vmatpush.bf16.msra.mxu0 %v1040
  %2650 = vmatpush.bf16.msra.mxu0 %v1037
  %2651 = vmatmul.bf16.gmra.mxu0 %v2629
  %v2652 = vpop.f32.mrf.mxu0
  %v2653 = vadd.f32 %v556, %v2652
  %v2654 = vpop.f32.mrf.mxu0
  %2655 = vdwg.mxu0
  %2656 = vmatpush.bf16.msra.mxu0 %v1059
  %2657 = vmatpush.bf16.msra.mxu0 %v1056
  %2658 = vmatpush.bf16.msra.mxu0 %v1053
  %2659 = vmatpush.bf16.msra.mxu0 %v1050
  %2660 = vmatpush.bf16.msra.mxu0 %v1047
  %2661 = vmatpush.bf16.msra.mxu0 %v1044
  %2662 = vmatpush.bf16.msra.mxu0 %v1041
  %2663 = vmatpush.bf16.msra.mxu0 %v1038
  %2664 = vmatmul.bf16.gmra.mxu0 %v2629
  %v2665 = vpop.f32.mrf.mxu0
  %v2666 = vadd.f32 %v557, %v2665
  %v2667 = vpop.f32.mrf.mxu0
  %2668 = vdwg.mxu0
  %v2669 = vadd.f32 %v2640, %v2548
  %v2670 = vadd.f32 %v2653, %v2561
  %v2671 = vxor.u32 %v2669, 2147483648
  %v2672 = vxor.u32 %v2670, 2147483648
  %v2673 = vmul.f32 %v2671, 1.442695
  %v2674 = vpow.pop %v2673
  %v2675 = vmul.f32 %v2672, 1.442695
  %v2676 = vpow.pop %v2675
  %v2677 = vadd.f32 %v2674, 1.0
  %v2678 = vadd.f32 %v2676, 1.0
  %v2679 = vrcp.pop %v2677
  %v2680 = vmul.f32 %v2677, %v2679
  %v2681 = vsub.f32 1.0, %v2680
  %v2682 = vmul.f32 %v2679, %v2681
  %v2683 = vadd.f32 %v2679, %v2682
  %vm2684 = vweird.f32 %v2677
  %vm2685 = vweird.f32 %v2679
  %vm2686 = vmor %vm2684, %vm2685
  %v2687 = vsel %vm2686, %v2679, %v2683
  %v2688 = vand.u32 2147483647, %v2677
  %vm2689 = vcmp.eq.f32.partialorder %v2688, 8.507059e+37
  %v2690 = vand.u32 %v2677, 2147483648
  %v2691 = vor.u32 1.1754944e-38, %v2690
  %v2692 = vsel %vm2689, %v2691, %v2687
  %v2693 = vmul.f32 1.0, %v2692
  %v2694 = vrcp.pop %v2678
  %v2695 = vmul.f32 %v2678, %v2694
  %v2696 = vsub.f32 1.0, %v2695
  %v2697 = vmul.f32 %v2694, %v2696
  %v2698 = vadd.f32 %v2694, %v2697
  %vm2699 = vweird.f32 %v2678
  %vm2700 = vweird.f32 %v2694
  %vm2701 = vmor %vm2699, %vm2700
  %v2702 = vsel %vm2701, %v2694, %v2698
  %v2703 = vand.u32 2147483647, %v2678
  %vm2704 = vcmp.eq.f32.partialorder %v2703, 8.507059e+37
  %v2705 = vand.u32 %v2678, 2147483648
  %v2706 = vor.u32 1.1754944e-38, %v2705
  %v2707 = vsel %vm2704, %v2706, %v2702
  %v2708 = vmul.f32 1.0, %v2707
  %v2709 = vadd.f32 %v2574, %v563
  %v2710 = vmul.f32 %v2693, %v2709
  %v2711 = vadd.f32 %v2666, %v2710
  %v2712 = vtanh.pop %v2711
  %v2713 = vsub.f32 1.0, %v2708
  %v2714 = vmul.f32 %v2713, %v2712
  %v2715 = vmul.f32 %v2708, %v2495
  %v2716 = vadd.f32 %v2714, %v2715
  %s2717 = scalar_lea.vmem [#allocation3], 56
  %2718 = vst [vmem:[%s2717] sm:$0xff] %v2716
  %2719 = vst [vmem:[%s13] sm:$0xff] %v2628
  %s2720 = scalar_lea.vmem %s13, 8
  %2721 = vst [vmem:[%s2720] sm:$0xff] %v2716
  %v2722 = vld [vmem:[%s10] sm:$0x1]
  %v2723 = vld [vmem:[#allocation3] sm:$0xff]
  %v2724 = vld [vmem:[#allocation3 + $0x8] sm:$0xff]
  %v2725 = vld [vmem:[#allocation3 + $0x10] sm:$0xff]
  %v2726 = vld [vmem:[#allocation3 + $0x18] sm:$0xff]
  %v2727 = vld [vmem:[#allocation3 + $0x20] sm:$0xff]
  %v2728 = vld [vmem:[#allocation3 + $0x28] sm:$0xff]
  %v2729 = vld [vmem:[#allocation3 + $0x30] sm:$0xff]
  %v2730 = vld [vmem:[#allocation3 + $0x38] sm:$0xff]
  %v2732 = vperm.slane %v2722, 0
  %v2734 = vmul.f32 %v2723, %v2732
  %v2735 = vmul.f32 %v2724, %v2732
  %v2736 = vmul.f32 %v2725, %v2732
  %v2737 = vmul.f32 %v2726, %v2732
  %v2738 = vmul.f32 %v2727, %v2732
  %v2739 = vmul.f32 %v2728, %v2732
  %v2740 = vmul.f32 %v2729, %v2732
  %v2741 = vmul.f32 %v2730, %v2732
  %2742 = vadd.xlane.f32.xlu0 %v2734
  %v2743 = vpop.xlane.xlu0 %2742
  %2744 = vadd.xlane.f32.xlu0 %v2735
  %v2745 = vpop.xlane.xlu0 %2744
  %2746 = vadd.xlane.f32.xlu0 %v2736
  %v2747 = vpop.xlane.xlu0 %2746
  %2748 = vadd.xlane.f32.xlu0 %v2737
  %v2749 = vpop.xlane.xlu0 %2748
  %2750 = vadd.xlane.f32.xlu0 %v2738
  %v2751 = vpop.xlane.xlu0 %2750
  %2752 = vadd.xlane.f32.xlu0 %v2739
  %v2753 = vpop.xlane.xlu0 %2752
  %2754 = vadd.xlane.f32.xlu0 %v2740
  %v2755 = vpop.xlane.xlu0 %2754
  %2756 = vadd.xlane.f32.xlu0 %v2741
  %v2757 = vpop.xlane.xlu0 %2756
  %v2758 = vld [vmem:[#allocation4] sm:$0x1]
  %v2760 = vperm.slane %v2758, 0
  %2761 = vset.pattern.permute.xlu0 0
  %2762 = vperm.xlu0 %2761, %v2760
  %v2763 = vpop.permute.xlu0 %2762
  %v2765 = vadd.f32 %v2743, %v2763
  %v2766 = vadd.f32 %v2745, %v2763
  %v2767 = vadd.f32 %v2747, %v2763
  %v2768 = vadd.f32 %v2749, %v2763
  %v2769 = vadd.f32 %v2751, %v2763
  %v2770 = vadd.f32 %v2753, %v2763
  %v2771 = vadd.f32 %v2755, %v2763
  %v2772 = vadd.f32 %v2757, %v2763
  %v2781 = vlaneseq
  %v2782 = vand.u32 %v2781, 127
  %v2783 = vperm.slane %v2765, %v2782
  %v2784 = vperm.slane %v2766, %v2782
  %v2785 = vperm.slane %v2767, %v2782
  %v2786 = vperm.slane %v2768, %v2782
  %v2787 = vperm.slane %v2769, %v2782
  %v2788 = vperm.slane %v2770, %v2782
  %v2789 = vperm.slane %v2771, %v2782
  %v2790 = vperm.slane %v2772, %v2782
  %vm2791 = vcmask 1041409
  %v2792 = vsel %vm2791, %v2784, %v2783
  %vm2793 = vcmask 1042434
  %v2794 = vsel %vm2793, %v2785, %v2792
  %vm2795 = vcmask 1043459
  %v2796 = vsel %vm2795, %v2786, %v2794
  %vm2797 = vcmask 1044484
  %v2798 = vsel %vm2797, %v2787, %v2796
  %vm2799 = vcmask 1045509
  %v2800 = vsel %vm2799, %v2788, %v2798
  %vm2801 = vcmask 1046534
  %v2802 = vsel %vm2801, %v2789, %v2800
  %vm2803 = vcmask 1047559
  %v2804 = vsel %vm2803, %v2790, %v2802
  %2806 = vxpose.xlu0.b32.start [1/16] %v2804, 128
  %2807 = vxpose.xlu0.b32.cont [2/16] 0.0, 128
  %2808 = vxpose.xlu0.b32.cont [3/16] 0.0, 128
  %2809 = vxpose.xlu0.b32.cont [4/16] 0.0, 128
  %2810 = vxpose.xlu0.b32.cont [5/16] 0.0, 128
  %2811 = vxpose.xlu0.b32.cont [6/16] 0.0, 128
  %2812 = vxpose.xlu0.b32.cont [7/16] 0.0, 128
  %2813 = vxpose.xlu0.b32.cont [8/16] 0.0, 128
  %2814 = vxpose.xlu0.b32.cont [9/16] 0.0, 128
  %2815 = vxpose.xlu0.b32.cont [10/16] 0.0, 128
  %2816 = vxpose.xlu0.b32.cont [11/16] 0.0, 128
  %2817 = vxpose.xlu0.b32.cont [12/16] 0.0, 128
  %2818 = vxpose.xlu0.b32.cont [13/16] 0.0, 128
  %2819 = vxpose.xlu0.b32.cont [14/16] 0.0, 128
  %2820 = vxpose.xlu0.b32.cont [15/16] 0.0, 128
  %2821 = vxpose.xlu0.b32.end [16/16] 0.0, 128
  %v2822 = vpop.trf.xlu0
  %v2823 = vpop.trf.xlu0
  %v2824 = vpop.trf.xlu0
  %v2825 = vpop.trf.xlu0
  %v2826 = vpop.trf.xlu0
  %v2827 = vpop.trf.xlu0
  %v2828 = vpop.trf.xlu0
  %v2829 = vpop.trf.xlu0
  %v2830 = vpop.trf.xlu0
  %v2831 = vpop.trf.xlu0
  %v2832 = vpop.trf.xlu0
  %v2833 = vpop.trf.xlu0
  %v2834 = vpop.trf.xlu0
  %v2835 = vpop.trf.xlu0
  %v2836 = vpop.trf.xlu0
  %v2837 = vpop.trf.xlu0
  %vm2838 = vcmask 64512
  %2839 = vst.msk [vmem:[%s12] sm:$0xff] %vm2838, %v2822
  // Predicated region
  $region50: #{rnn_forward.1} parent=0 // pred_check
    _
  $region51: #{rnn_forward.1} parent=0 // pred_check_branch
    %2841 = sbr.rel (0) target = $region53
  $region52: #{rnn_forward.1} parent=0 // pred_region
    _
  $region53: #{rnn_forward.1} parent=0 // pred_fallthru
    _
  // Predicated region
  $region54: #{rnn_forward.1} parent=0 // pred_check
    _
  $region55: #{rnn_forward.1} parent=0 // pred_check_branch
    %2843 = sbr.rel (0) target = $region57
  $region56: #{rnn_forward.1} parent=0 // pred_region
    _
  $region57: #{rnn_forward.1} parent=0 // pred_fallthru
    _
  // Predicated region
  $region58: #{rnn_forward.1} parent=0 // pred_check
    _
  $region59: #{rnn_forward.1} parent=0 // pred_check_branch
    %2845 = sbr.rel (0) target = $region61
  $region60: #{rnn_forward.1} parent=0 // pred_region
    _
  $region61: #{rnn_forward.1} parent=0 // pred_fallthru
    _
  // Predicated region
  $region62: #{rnn_forward.1} parent=0 // pred_check
    _
  $region63: #{rnn_forward.1} parent=0 // pred_check_branch
    %2847 = sbr.rel (0) target = $region65
  $region64: #{rnn_forward.1} parent=0 // pred_region
    _
  $region65: #{rnn_forward.1} parent=0 // pred_fallthru
    _

</llo_original>
